<compile_context>
chip_gen: v5e
topology: v5e:2x2
jax: 0.10.0
libtpu: 0.0.40
codegen_flags: <defaults>
</compile_context>

<pallas_src>
import functools
from typing import NamedTuple

import numpy as np
import jax
import jax.numpy as jnp
from jax.experimental import pallas as pl
from jax.experimental.pallas import tpu as pltpu

N_HEAD = 4
D_HEAD = 64
DH_PAD = ((D_HEAD + 127) // 128) * 128      # per-head width padded to a full 128-lane tile
NEG_INF = -1e9


class Config(NamedTuple):
    n_dec_vocab: int = 32
    n_enc_vocab: int = 32
    n_dec_seq: int = 8
    n_enc_seq: int = 8
    d_hidn: int = 64
    d_ff: int = 128
    n_layer: int = 2
    i_pad: int = 0
    layer_norm_epsilon: float = 1e-12


# ----------------------------- Pallas kernel: one DecoderLayer -----------------------------
def decoder_layer_kernel(
    dec_ref, enc_ref, dpad_ref, epad_ref, w_ref, vec_ref,   # inputs
    out_ref, sp_ref, ep_ref,                                # outputs
    *, n_head, dh_pad, d_ff, eps, bb, s_dec, s_enc,
):
    HP = n_head * dh_pad            # head-padded projection width (n_head * 128)
    D = dec_ref.shape[1]
    F = d_ff
    S, Se = s_dec, s_enc
    base_b = pl.program_id(0) * bb  # first global batch row handled by this grid step

    # column offsets into the packed weight slab (see pack_layer_params) — all 128-aligned
    c_qkv1 = 0                      # (D, 3*HP) fused self-attn QKV (Q pre-scaled, head-padded)
    c_q2 = 3 * HP                   # (D, HP)   cross-attn Q (pre-scaled, head-padded)
    c_kv2 = 4 * HP                  # (D, 2*HP) fused cross-attn KV (head-padded)
    c_f1 = 6 * HP                   # (D, F)    FFN up
    c_o1 = 6 * HP + F               # (D, HP)   self-attn out-proj (transposed, head-padded)
    c_o2 = 7 * HP + F               # (D, HP)   cross-attn out-proj (transposed, head-padded)
    c_f2 = 8 * HP + F               # (D, F)    FFN down (transposed)

    def vec(i, n):                  # row i of the packed vector slab -> (1, n) f32
        return vec_ref[i:i + 1, 0:n]

    def layernorm(v, gi, bi):       # f32 statistics
        mu = jnp.mean(v, axis=-1, keepdims=True)
        cen = v - mu
        var = jnp.mean(cen * cen, axis=-1, keepdims=True)
        return cen * jax.lax.rsqrt(var + eps) * vec(gi, D) + vec(bi, D)

    def gelu(v):                    # tanh form -> transcendental on the EUP slot
        return 0.5 * v * (1.0 + jnp.tanh(0.7978845608028654 * (v + 0.044715 * v * v * v)))

    def attention(q_all, kv_all, q_c0, k_c0, v_c0, pad_ref, prob_ref, s_kv, causal):
        # q_all : (bb*S, *) bf16, head h of Q at cols q_c0 + h*dh_pad (128-aligned)
        # kv_all: (bb*s_kv, *) bf16, K / V heads likewise at k_c0 / v_c0
        # Returns the merged per-head context as ONE register slab (bb*S, HP):
        # no VMEM scratch round-trip and every slice / concat is 128-lane aligned.
        if causal:                  # built once, reused for every batch row (no re-materialize)
            ri = jax.lax.broadcasted_iota(jnp.int32, (S, s_kv), 0)
            ci = jax.lax.broadcasted_iota(jnp.int32, (S, s_kv), 1)
            causal_mask = ci > ri
        ctx_rows = []
        for b in range(bb):
            # masks built in-kernel from the int32 pad vectors (no f32 mask DMA)
            pad_k = pad_ref[pl.ds(base_b + b, 1), :] != 0            # (1, s_kv)
            mask = jnp.broadcast_to(pad_k, (S, s_kv))
            if causal:
                mask = mask | causal_mask
            head_ctx, head_prob = [], []
            for h in range(n_head):
                q = q_all[b * S:(b + 1) * S, q_c0 + h * dh_pad: q_c0 + (h + 1) * dh_pad]
                k = kv_all[b * s_kv:(b + 1) * s_kv, k_c0 + h * dh_pad: k_c0 + (h + 1) * dh_pad]
                v = kv_all[b * s_kv:(b + 1) * s_kv, v_c0 + h * dh_pad: v_c0 + (h + 1) * dh_pad]
                # scores: (S, 128) x (s_kv, 128) contracted on the padded head dim -> (S, s_kv)
                sc = jax.lax.dot_general(q, k, (((1,), (1,)), ((), ())),
                                         preferred_element_type=jnp.float32)
                sc = jnp.where(mask, NEG_INF, sc)
                m = jnp.max(sc, axis=-1, keepdims=True)
                e = jnp.exp(sc - m)
                p = e * pl.reciprocal(jnp.sum(e, axis=-1, keepdims=True), approx=True)
                head_prob.append(p)
                head_ctx.append(jnp.dot(p.astype(jnp.bfloat16), v,
                                        preferred_element_type=jnp.float32))   # (S, 128)
            prob_ref[b] = jnp.stack(head_prob, axis=0)           # one (H, S, s_kv) store / batch
            ctx_rows.append(jnp.concatenate(head_ctx, axis=-1))  # (S, HP), 128-aligned lane concat
        return ctx_rows[0] if bb == 1 else jnp.concatenate(ctx_rows, axis=0)

    def out_proj(ctx, c_w, bias_row):
        # ctx (bb*S, HP) @ W_o, W_o stored transposed head-padded as (D, HP): contract dim1 x dim1
        return jax.lax.dot_general(
            ctx.astype(jnp.bfloat16), w_ref[:, c_w:c_w + HP],
            (((1,), (1,)), ((), ())), preferred_element_type=jnp.float32) + vec(bias_row, D)

    x = dec_ref[...]                                  # (bb*S,  D) f32
    enc = enc_ref[...]                                # (bb*Se, D) f32

    # ---- self attention (one fused, head-padded QKV matmul) + residual + LN1 ----
    qkv = jnp.dot(x.astype(jnp.bfloat16), w_ref[:, c_qkv1:c_qkv1 + 3 * HP],
                  preferred_element_type=jnp.float32) + vec(0, 3 * HP)
    qkv_b = qkv.astype(jnp.bfloat16)
    ctx1 = attention(qkv_b, qkv_b, 0, HP, 2 * HP, dpad_ref, sp_ref, S, causal=True)
    x1 = layernorm(x + out_proj(ctx1, c_o1, 3), 4, 5)

    # ---- decoder-encoder attention (fused, head-padded KV matmul) + residual + LN2 ----
    q2 = jnp.dot(x1.astype(jnp.bfloat16), w_ref[:, c_q2:c_q2 + HP],
                 preferred_element_type=jnp.float32) + vec(1, HP)
    kv2 = jnp.dot(enc.astype(jnp.bfloat16), w_ref[:, c_kv2:c_kv2 + 2 * HP],
                  preferred_element_type=jnp.float32) + vec(2, 2 * HP)
    ctx2 = attention(q2.astype(jnp.bfloat16), kv2.astype(jnp.bfloat16),
                     0, 0, HP, epad_ref, ep_ref, Se, causal=False)
    x2 = layernorm(x1 + out_proj(ctx2, c_o2, 6), 7, 8)

    # ---- position-wise FFN (Conv1d k=1 == matmul) + residual + LN3 ----
    hid = jnp.dot(x2.astype(jnp.bfloat16), w_ref[:, c_f1:c_f1 + F],
                  preferred_element_type=jnp.float32) + vec(9, F)
    hid = gelu(hid)
    ffn = jax.lax.dot_general(
        hid.astype(jnp.bfloat16), w_ref[:, c_f2:c_f2 + F],
        (((1,), (1,)), ((), ())), preferred_element_type=jnp.float32) + vec(10, D)
    out_ref[...] = layernorm(x2 + ffn, 11, 12)


# ----------------------------- wrapper-side weight packing (runs ONCE at init) -----------------------------
def pack_layer_params(p, n_head, d_head, dh_pad, d_hidn, d_ff):
    """Pack 18 per-layer tensors into one bf16 weight slab + one f32 vector slab.

    Every head is padded from d_head to dh_pad (=128) lanes so all in-kernel
    per-head slices and the out-projection contraction are 128-lane aligned;
    padded columns are zero, so scores/context are mathematically unchanged.
    The 1/sqrt(d_head) attention scale is folded into the Q columns / biases.
    Weight slab (d_hidn rows): [Wq1|Wk1|Wv1 | Wq2 | Wk2|Wv2 | Wf1 | Wo1^T | Wo2^T | Wf2^T].
    """
    HD = n_head * d_head
    HP = n_head * dh_pad
    scale = 1.0 / float(np.sqrt(d_head))

    def pad_heads(w):              # (..., n_head*d_head) -> (..., n_head*dh_pad), zero-padded
        lead = w.shape[:-1]
        w3 = jnp.reshape(w, lead + (n_head, d_head))
        w3 = jnp.pad(w3, [(0, 0)] * len(lead) + [(0, 0), (0, dh_pad - d_head)])
        return jnp.reshape(w3, lead + (HP,))

    wq1, wk1, wv1 = p["wqkv1"][:, :HD] * scale, p["wqkv1"][:, HD:2 * HD], p["wqkv1"][:, 2 * HD:]
    wq2, wk2, wv2 = p["wqkv2"][:, :HD] * scale, p["wqkv2"][:, HD:2 * HD], p["wqkv2"][:, 2 * HD:]
    w_all = jnp.concatenate([
        pad_heads(wq1), pad_heads(wk1), pad_heads(wv1),     # fused self-attn QKV
        pad_heads(wq2),                                     # cross-attn Q
        pad_heads(wk2), pad_heads(wv2),                     # fused cross-attn KV
        p["wf1"],                                           # FFN up
        pad_heads(p["wo1"].T), pad_heads(p["wo2"].T),       # transposed out-projections
        p["wf2"].T,                                         # transposed FFN down
    ], axis=1).astype(jnp.bfloat16)

    vw = max(3 * HP, d_ff, d_hidn)                          # row width of the vector slab

    def row(v):
        v = jnp.reshape(v, (1, -1)).astype(jnp.float32)
        return jnp.pad(v, ((0, 0), (0, vw - v.shape[1])))

    bq1, bk1, bv1 = p["bqkv1"][:, :HD] * scale, p["bqkv1"][:, HD:2 * HD], p["bqkv1"][:, 2 * HD:]
    bq2, bk2, bv2 = p["bqkv2"][:, :HD] * scale, p["bqkv2"][:, HD:2 * HD], p["bqkv2"][:, 2 * HD:]
    vecs = jnp.concatenate([
        row(jnp.concatenate([pad_heads(bq1), pad_heads(bk1), pad_heads(bv1)], axis=1)),  # 0
        row(pad_heads(bq2)),                                                             # 1
        row(jnp.concatenate([pad_heads(bk2), pad_heads(bv2)], axis=1)),                  # 2
        row(p["bo1"]), row(p["g1"]), row(p["be1"]),                                      # 3,4,5
        row(p["bo2"]), row(p["g2"]), row(p["be2"]),                                      # 6,7,8
        row(p["bf1"]), row(p["bf2"]), row(p["g3"]), row(p["be3"]),                       # 9..12
    ], axis=0)
    return w_all, vecs


def prepare_params(params, cfg):
    """Hoisted packing: embeddings pass through, layer weights packed once."""
    return {
        "dec_emb": params["dec_emb"],
        "pos_emb": params["pos_emb"],
        "layers": [pack_layer_params(lp, N_HEAD, D_HEAD, DH_PAD, cfg.d_hidn, cfg.d_ff)
                   for lp in params["layers"]],
    }


# ----------------------------- pallas_call wrapper -----------------------------
def decoder_layer(dec, enc, dec_pad, enc_pad, packed, *, n_head, dh_pad, d_ff, eps):
    B, S, D = dec.shape
    Se = enc.shape[1]
    w_all, vecs = packed

    # Two grid steps whenever B is even so both v7x TensorCores get work
    # (one extra ~0.35us step on single-TC chips); otherwise one whole-batch step.
    # At production shapes this would become a VMEM-budget-driven row tiling
    # (v7x: 64 MiB), with pl.Buffered(1) on the constant weight slabs; at this
    # size total VMEM use is ~1.5 MB so neither is needed.
    num_blocks = 2 if B % 2 == 0 else 1
    bb = B // num_blocks

    dec2 = dec.reshape(B * S, D)      # wrapper-side reshape: kernel works on 2-D slabs
    enc2 = enc.reshape(B * Se, D)

    kernel = functools.partial(
        decoder_layer_kernel, n_head=n_head, dh_pad=dh_pad, d_ff=d_ff,
        eps=eps, bb=bb, s_dec=S, s_enc=Se)

    out2, sp, ep = pl.pallas_call(
        kernel,
        out_shape=(
            jax.ShapeDtypeStruct((B * S, D), jnp.float32),
            jax.ShapeDtypeStruct((B, n_head, S, S), jnp.float32),
            jax.ShapeDtypeStruct((B, n_head, S, Se), jnp.float32),
        ),
        grid=(num_blocks,),
        in_specs=[
            pl.BlockSpec((bb * S, D), lambda i: (i, 0)),
            pl.BlockSpec((bb * Se, D), lambda i: (i, 0)),
            pl.BlockSpec(dec_pad.shape, lambda i: (0, 0)),    # tiny int32 pad vectors
            pl.BlockSpec(enc_pad.shape, lambda i: (0, 0)),
            pl.BlockSpec(w_all.shape, lambda i: (0, 0)),      # packed bf16 weight slab
            pl.BlockSpec(vecs.shape, lambda i: (0, 0)),       # packed f32 vector slab
        ],
        out_specs=(
            pl.BlockSpec((bb * S, D), lambda i: (i, 0)),
            pl.BlockSpec((bb, n_head, S, S), lambda i: (i, 0, 0, 0)),
            pl.BlockSpec((bb, n_head, S, Se), lambda i: (i, 0, 0, 0)),
        ),
        compiler_params=pltpu.CompilerParams(dimension_semantics=("parallel",)),
    )(dec2, enc2, dec_pad, enc_pad, w_all, vecs)
    return out2.reshape(B, S, D), sp, ep


# ----------------------------- plain-JAX glue (embeddings) + jitted forward -----------------------------
def get_sinusoid_encoding_table(n_seq, d_hidn):
    pos = np.arange(n_seq)[:, None].astype(np.float64)
    i = np.arange(d_hidn)[None, :]
    angle = pos / np.power(10000.0, 2.0 * (i // 2) / d_hidn)
    table = np.zeros((n_seq, d_hidn), dtype=np.float64)
    table[:, 0::2] = np.sin(angle[:, 0::2])
    table[:, 1::2] = np.cos(angle[:, 1::2])
    return jnp.asarray(table, dtype=jnp.float32)


def embed(dec_inputs, dec_emb, pos_emb, i_pad):
    B, S = dec_inputs.shape
    positions = jnp.broadcast_to(jnp.arange(S, dtype=jnp.int32)[None, :] + 1, (B, S))
    positions = jnp.where(dec_inputs == i_pad, 0, positions)
    return dec_emb[dec_inputs] + pos_emb[positions]


@functools.partial(jax.jit, static_argnames=("cfg",))
def decoder_forward_pallas(dec_inputs, enc_inputs, enc_outputs, packed_params, cfg):
    dec_out = embed(dec_inputs, packed_params["dec_emb"], packed_params["pos_emb"], cfg.i_pad)
    dec_pad = (dec_inputs == cfg.i_pad).astype(jnp.int32)   # (B, S)
    enc_pad = (enc_inputs == cfg.i_pad).astype(jnp.int32)   # (B, Se)
    self_probs, enc_probs = [], []
    for packed in packed_params["layers"]:
        dec_out, sp, ep = decoder_layer(
            dec_out, enc_outputs, dec_pad, enc_pad, packed,
            n_head=N_HEAD, dh_pad=DH_PAD, d_ff=cfg.d_ff, eps=cfg.layer_norm_epsilon)
        self_probs.append(sp)
        enc_probs.append(ep)
    return dec_out, self_probs, enc_probs


# ----------------------------- pure-JAX reference (for verification) -----------------------------
def build_masks(dec_inputs, enc_inputs, i_pad):
    B, S = dec_inputs.shape
    Se = enc_inputs.shape[1]
    pad_self = jnp.broadcast_to((dec_inputs == i_pad)[:, None, :], (B, S, S))
    tri = jnp.triu(jnp.ones((S, S), dtype=jnp.bool_), k=1)[None, :, :]
    self_mask = (pad_self | tri).astype(jnp.float32)
    enc_mask = jnp.broadcast_to((enc_inputs == i_pad)[:, None, :], (B, S, Se)).astype(jnp.float32)
    return self_mask, enc_mask


def ref_gelu(x):
    return 0.5 * x * (1.0 + jax.lax.erf(x * 0.7071067811865476))


def ref_decoder_layer(dec, enc, smask, emask, p, *, n_head, d_head, eps):
    HD = n_head * d_head

    def mha(q_in, kv_in, mask, w, bias, wo, bo):
        q = q_in @ w[:, :HD] + bias[:, :HD]
        k = kv_in @ w[:, HD:2 * HD] + bias[:, HD:2 * HD]
        v = kv_in @ w[:, 2 * HD:] + bias[:, 2 * HD:]
        Bb, Sq, _ = q.shape
        Sk = k.shape[1]
        qh = q.reshape(Bb, Sq, n_head, d_head).transpose(0, 2, 1, 3)
        kh = k.reshape(Bb, Sk, n_head, d_head).transpose(0, 2, 1, 3)
        vh = v.reshape(Bb, Sk, n_head, d_head).transpose(0, 2, 1, 3)
        sc = jnp.einsum("bhqd,bhkd->bhqk", qh, kh) * (1.0 / d_head ** 0.5)
        sc = jnp.where(mask[:, None, :, :] > 0, NEG_INF, sc)
        m = jnp.max(sc, axis=-1, keepdims=True)
        e = jnp.exp(sc - m)
        prob = e / jnp.sum(e, axis=-1, keepdims=True)
        ctx = jnp.einsum("bhqk,bhkd->bhqd", prob, vh).transpose(0, 2, 1, 3).reshape(Bb, Sq, HD)
        return ctx @ wo + bo, prob

    def ln(x, g, be):
        mu = jnp.mean(x, axis=-1, keepdims=True)
        var = jnp.mean((x - mu) ** 2, axis=-1, keepdims=True)
        return (x - mu) / jnp.sqrt(var + eps) * g + be

    a1, sp = mha(dec, dec, smask, p["wqkv1"], p["bqkv1"], p["wo1"], p["bo1"])
    x1 = ln(dec + a1, p["g1"], p["be1"])
    a2, ep = mha(x1, enc, emask, p["wqkv2"], p["bqkv2"], p["wo2"], p["bo2"])
    x2 = ln(x1 + a2, p["g2"], p["be2"])
    hid = ref_gelu(x2 @ p["wf1"] + p["bf1"])
    ffn = hid @ p["wf2"] + p["bf2"]
    return ln(x2 + ffn, p["g3"], p["be3"]), sp, ep


def decoder_forward_ref(dec_inputs, enc_inputs, enc_outputs, params, cfg):
    dec_out = embed(dec_inputs, params["dec_emb"], params["pos_emb"], cfg.i_pad)
    smask, emask = build_masks(dec_inputs, enc_inputs, cfg.i_pad)
    self_probs, enc_probs = [], []
    for lp in params["layers"]:
        dec_out, sp, ep = ref_decoder_layer(
            dec_out, enc_outputs, smask, emask, lp,
            n_head=N_HEAD, d_head=D_HEAD, eps=cfg.layer_norm_epsilon)
        self_probs.append(sp)
        enc_probs.append(ep)
    return dec_out, self_probs, enc_probs


# ----------------------------- parameter init -----------------------------
def init_layer_params(key, D, F):
    HD = N_HEAD * D_HEAD
    ks = jax.random.split(key, 12)

    def w(k, shape, s=0.05):
        return jax.random.normal(k, shape, jnp.float32) * s

    return {
        "wqkv1": w(ks[0], (D, 3 * HD)), "bqkv1": w(ks[1], (1, 3 * HD), 0.01),
        "wo1": w(ks[2], (HD, D)), "bo1": w(ks[3], (1, D), 0.01),
        "g1": jnp.ones((1, D), jnp.float32), "be1": jnp.zeros((1, D), jnp.float32),
        "wqkv2": w(ks[4], (D, 3 * HD)), "bqkv2": w(ks[5], (1, 3 * HD), 0.01),
        "wo2": w(ks[6], (HD, D)), "bo2": w(ks[7], (1, D), 0.01),
        "g2": jnp.ones((1, D), jnp.float32), "be2": jnp.zeros((1, D), jnp.float32),
        "wf1": w(ks[8], (D, F)), "bf1": w(ks[9], (1, F), 0.01),
        "wf2": w(ks[10], (F, D)), "bf2": w(ks[11], (1, D), 0.01),
        "g3": jnp.ones((1, D), jnp.float32), "be3": jnp.zeros((1, D), jnp.float32),
    }


def init_params(key, cfg):
    k_emb, *k_layers = jax.random.split(key, 1 + cfg.n_layer)
    return {
        "dec_emb": jax.random.normal(k_emb, (cfg.n_dec_vocab, cfg.d_hidn), jnp.float32) * 0.1,
        "pos_emb": get_sinusoid_encoding_table(cfg.n_dec_seq + 1, cfg.d_hidn),
        "layers": [init_layer_params(k, cfg.d_hidn, cfg.d_ff) for k in k_layers],
    }


# ----------------------------- main -----------------------------
if __name__ == "__main__":
    cfg = Config(
        n_dec_vocab=32, n_enc_vocab=32,
        n_dec_seq=8, n_enc_seq=8,
        d_hidn=64, d_ff=128, n_layer=2,
        i_pad=0, layer_norm_epsilon=1e-12,
    )
    B, S, Se = 2, cfg.n_dec_seq, cfg.n_enc_seq

    key = jax.random.PRNGKey(0)
    k1, k2, k3, k4 = jax.random.split(key, 4)
    dec_inputs = jax.random.randint(k1, (B, S), 1, cfg.n_dec_vocab, dtype=jnp.int32)
    dec_inputs = dec_inputs.at[0, -2:].set(cfg.i_pad)          # some decoder padding
    enc_inputs = jax.random.randint(k2, (B, Se), 1, cfg.n_enc_vocab, dtype=jnp.int32)
    enc_inputs = enc_inputs.at[1, -1:].set(cfg.i_pad)          # some encoder padding
    enc_outputs = jax.random.normal(k3, (B, Se, cfg.d_hidn), jnp.float32) * 0.5

    params = init_params(k4, cfg)
    packed_params = prepare_params(params, cfg)                # packed ONCE, reused every forward

    # Pallas path (jitted end-to-end)
    out, sps, eps_ = decoder_forward_pallas(dec_inputs, enc_inputs, enc_outputs,
                                            packed_params, cfg)
    out = jax.block_until_ready(out)

    # Pure-JAX (f32, exact-erf GELU) reference path
    ref_out, ref_sps, ref_eps = decoder_forward_ref(dec_inputs, enc_inputs, enc_outputs,
                                                    params, cfg)

    np.testing.assert_allclose(np.asarray(out), np.asarray(ref_out), rtol=2e-2, atol=2e-2)
    for a, b in zip(sps, ref_sps):
        np.testing.assert_allclose(np.asarray(a), np.asarray(b), rtol=2e-2, atol=2e-2)
    for a, b in zip(eps_, ref_eps):
        np.testing.assert_allclose(np.asarray(a), np.asarray(b), rtol=2e-2, atol=2e-2)
    assert bool(jnp.all(jnp.isfinite(out)))

    print("KERNEL_OK")
</pallas_src>

<mosaic_0001>
module attributes {stable_mosaic.version = 11 : i64} {
  func.func @decoder_layer_kernel(%arg0: i32, %arg1: memref<8x64xf32, #tpu.memory_space<vmem>>, %arg2: memref<8x64xf32, #tpu.memory_space<vmem>>, %arg3: memref<2x8xi32, #tpu.memory_space<vmem>>, %arg4: memref<2x8xi32, #tpu.memory_space<vmem>>, %arg5: memref<64x4352xbf16, #tpu.memory_space<vmem>>, %arg6: memref<13x1536xf32, #tpu.memory_space<vmem>>, %arg7: memref<8x64xf32, #tpu.memory_space<vmem>>, %arg8: memref<1x4x8x8xf32, #tpu.memory_space<vmem>>, %arg9: memref<1x4x8x8xf32, #tpu.memory_space<vmem>>) attributes {dimension_semantics = [#tpu.dimension_semantics<parallel>], iteration_bounds = array<i64: 2>, scalar_prefetch = 0 : i64, scratch_operands = 0 : i64, tpu.core_type = #tpu.core_type<tc>, window_params = [{transform_indices = @transform_0, window_bounds = array<i64: 8, 64>}, {transform_indices = @transform_1, window_bounds = array<i64: 8, 64>}, {pipeline_mode = #tpu.pipeline_mode<synchronous>, transform_indices = @transform_2, window_bounds = array<i64: 2, 8>}, {pipeline_mode = #tpu.pipeline_mode<synchronous>, transform_indices = @transform_3, window_bounds = array<i64: 2, 8>}, {pipeline_mode = #tpu.pipeline_mode<synchronous>, transform_indices = @transform_4, window_bounds = array<i64: 64, 4352>}, {pipeline_mode = #tpu.pipeline_mode<synchronous>, transform_indices = @transform_5, window_bounds = array<i64: 13, 1536>}, {transform_indices = @transform_6, window_bounds = array<i64: 8, 64>}, {transform_indices = @transform_7, window_bounds = array<i64: 1, 4, 8, 8>}, {transform_indices = @transform_8, window_bounds = array<i64: 1, 4, 8, 8>}]} {
    %c1_i32 = arith.constant 1 : i32
    %0 = arith.muli %arg0, %c1_i32 : i32
    %c0 = arith.constant 0 : index
    %c0_0 = arith.constant 0 : index
    %1 = vector.load %arg1[%c0, %c0_0] : memref<8x64xf32, #tpu.memory_space<vmem>>, vector<8x64xf32>
    %c0_1 = arith.constant 0 : index
    %c0_2 = arith.constant 0 : index
    %2 = vector.load %arg2[%c0_1, %c0_2] : memref<8x64xf32, #tpu.memory_space<vmem>>, vector<8x64xf32>
    %3 = arith.truncf %1 : vector<8x64xf32> to vector<8x64xbf16>
    %c0_3 = arith.constant 0 : index
    %c0_4 = arith.constant 0 : index
    %4 = vector.load %arg5[%c0_3, %c0_4] : memref<64x4352xbf16, #tpu.memory_space<vmem>>, vector<64x1536xbf16>
    %cst = arith.constant dense<0.000000e+00> : vector<8x1536xf32>
    %5 = tpu.matmul %3, %4, %cst {dimension_numbers = #tpu.dot_dimension_numbers<[1], [0], [0], [1], [0, 0, 1, 1], [], []>} : vector<8x64xbf16>, vector<64x1536xbf16>, vector<8x1536xf32> -> vector<8x1536xf32>
    %c0_5 = arith.constant 0 : index
    %c0_6 = arith.constant 0 : index
    %6 = vector.load %arg6[%c0_5, %c0_6] : memref<13x1536xf32, #tpu.memory_space<vmem>>, vector<1x1536xf32>
    %7 = vector.broadcast %6 : vector<1x1536xf32> to vector<8x1536xf32>
    %8 = arith.addf %5, %7 : vector<8x1536xf32>
    %9 = arith.truncf %8 : vector<8x1536xf32> to vector<8x1536xbf16>
    %10 = tpu.iota {dimensions = array<i32: 0>} : vector<8x8xi32>
    %11 = tpu.iota {dimensions = array<i32: 1>} : vector<8x8xi32>
    %12 = arith.cmpi sgt, %11, %10 : vector<8x8xi32>
    %c0_i32 = arith.constant 0 : i32
    %13 = arith.addi %0, %c0_i32 : i32
    %14 = arith.index_cast %13 : i32 to index
    %c0_7 = arith.constant 0 : index
    %15 = vector.load %arg3[%14, %c0_7] : memref<2x8xi32, #tpu.memory_space<vmem>>, vector<1x8xi32>
    %c0_i32_8 = arith.constant 0 : i32
    %16 = vector.broadcast %c0_i32_8 : i32 to vector<1x8xi32>
    %17 = arith.cmpi ne, %15, %16 : vector<1x8xi32>
    %18 = vector.shape_cast %17 : vector<1x8xi1> to vector<1x8xi1>
    %19 = vector.broadcast %18 : vector<1x8xi1> to vector<8x8xi1>
    %20 = arith.ori %19, %12 : vector<8x8xi1>
    %21 = vector.extract_strided_slice %9 {offsets = [0, 0], sizes = [8, 128], strides = [1, 1]} : vector<8x1536xbf16> to vector<8x128xbf16>
    %22 = vector.extract_strided_slice %9 {offsets = [0, 512], sizes = [8, 128], strides = [1, 1]} : vector<8x1536xbf16> to vector<8x128xbf16>
    %23 = vector.extract_strided_slice %9 {offsets = [0, 1024], sizes = [8, 128], strides = [1, 1]} : vector<8x1536xbf16> to vector<8x128xbf16>
    %cst_9 = arith.constant dense<0.000000e+00> : vector<8x8xf32>
    %24 = tpu.matmul %21, %22, %cst_9 {dimension_numbers = #tpu.dot_dimension_numbers<[1], [1], [0], [0], [0, 0, 1, 0], [], []>} : vector<8x128xbf16>, vector<8x128xbf16>, vector<8x8xf32> -> vector<8x8xf32>
    %cst_10 = arith.constant -1.000000e+09 : f32
    %25 = vector.broadcast %cst_10 : f32 to vector<8x8xf32>
    %26 = arith.select %20, %25, %24 : vector<8x8xi1>, vector<8x8xf32>
    %cst_11 = arith.constant dense<0xFF800000> : vector<8xf32>
    %27 = vector.multi_reduction <maximumf>, %26, %cst_11 [1] : vector<8x8xf32> to vector<8xf32>
    %28 = vector.shape_cast %27 : vector<8xf32> to vector<8x1xf32>
    %29 = vector.broadcast %28 : vector<8x1xf32> to vector<8x8xf32>
    %30 = arith.subf %26, %29 : vector<8x8xf32>
    %31 = math.exp %30 : vector<8x8xf32>
    %cst_12 = arith.constant dense<0.000000e+00> : vector<8xf32>
    %32 = vector.multi_reduction <add>, %31, %cst_12 [1] : vector<8x8xf32> to vector<8xf32>
    %33 = vector.shape_cast %32 : vector<8xf32> to vector<8x1xf32>
    %34 = tpu.reciprocal %33 {approx = true} : vector<8x1xf32> -> vector<8x1xf32>
    %35 = vector.broadcast %34 : vector<8x1xf32> to vector<8x8xf32>
    %36 = arith.mulf %31, %35 : vector<8x8xf32>
    %37 = arith.truncf %36 : vector<8x8xf32> to vector<8x8xbf16>
    %cst_13 = arith.constant dense<0.000000e+00> : vector<8x128xf32>
    %38 = tpu.matmul %37, %23, %cst_13 {dimension_numbers = #tpu.dot_dimension_numbers<[1], [0], [0], [1], [0, 0, 1, 1], [], []>} : vector<8x8xbf16>, vector<8x128xbf16>, vector<8x128xf32> -> vector<8x128xf32>
    %39 = vector.extract_strided_slice %9 {offsets = [0, 128], sizes = [8, 128], strides = [1, 1]} : vector<8x1536xbf16> to vector<8x128xbf16>
    %40 = vector.extract_strided_slice %9 {offsets = [0, 640], sizes = [8, 128], strides = [1, 1]} : vector<8x1536xbf16> to vector<8x128xbf16>
    %41 = vector.extract_strided_slice %9 {offsets = [0, 1152], sizes = [8, 128], strides = [1, 1]} : vector<8x1536xbf16> to vector<8x128xbf16>
    %cst_14 = arith.constant dense<0.000000e+00> : vector<8x8xf32>
    %42 = tpu.matmul %39, %40, %cst_14 {dimension_numbers = #tpu.dot_dimension_numbers<[1], [1], [0], [0], [0, 0, 1, 0], [], []>} : vector<8x128xbf16>, vector<8x128xbf16>, vector<8x8xf32> -> vector<8x8xf32>
    %cst_15 = arith.constant -1.000000e+09 : f32
    %43 = vector.broadcast %cst_15 : f32 to vector<8x8xf32>
    %44 = arith.select %20, %43, %42 : vector<8x8xi1>, vector<8x8xf32>
    %cst_16 = arith.constant dense<0xFF800000> : vector<8xf32>
    %45 = vector.multi_reduction <maximumf>, %44, %cst_16 [1] : vector<8x8xf32> to vector<8xf32>
    %46 = vector.shape_cast %45 : vector<8xf32> to vector<8x1xf32>
    %47 = vector.broadcast %46 : vector<8x1xf32> to vector<8x8xf32>
    %48 = arith.subf %44, %47 : vector<8x8xf32>
    %49 = math.exp %48 : vector<8x8xf32>
    %cst_17 = arith.constant dense<0.000000e+00> : vector<8xf32>
    %50 = vector.multi_reduction <add>, %49, %cst_17 [1] : vector<8x8xf32> to vector<8xf32>
    %51 = vector.shape_cast %50 : vector<8xf32> to vector<8x1xf32>
    %52 = tpu.reciprocal %51 {approx = true} : vector<8x1xf32> -> vector<8x1xf32>
    %53 = vector.broadcast %52 : vector<8x1xf32> to vector<8x8xf32>
    %54 = arith.mulf %49, %53 : vector<8x8xf32>
    %55 = arith.truncf %54 : vector<8x8xf32> to vector<8x8xbf16>
    %cst_18 = arith.constant dense<0.000000e+00> : vector<8x128xf32>
    %56 = tpu.matmul %55, %41, %cst_18 {dimension_numbers = #tpu.dot_dimension_numbers<[1], [0], [0], [1], [0, 0, 1, 1], [], []>} : vector<8x8xbf16>, vector<8x128xbf16>, vector<8x128xf32> -> vector<8x128xf32>
    %57 = vector.extract_strided_slice %9 {offsets = [0, 256], sizes = [8, 128], strides = [1, 1]} : vector<8x1536xbf16> to vector<8x128xbf16>
    %58 = vector.extract_strided_slice %9 {offsets = [0, 768], sizes = [8, 128], strides = [1, 1]} : vector<8x1536xbf16> to vector<8x128xbf16>
    %59 = vector.extract_strided_slice %9 {offsets = [0, 1280], sizes = [8, 128], strides = [1, 1]} : vector<8x1536xbf16> to vector<8x128xbf16>
    %cst_19 = arith.constant dense<0.000000e+00> : vector<8x8xf32>
    %60 = tpu.matmul %57, %58, %cst_19 {dimension_numbers = #tpu.dot_dimension_numbers<[1], [1], [0], [0], [0, 0, 1, 0], [], []>} : vector<8x128xbf16>, vector<8x128xbf16>, vector<8x8xf32> -> vector<8x8xf32>
    %cst_20 = arith.constant -1.000000e+09 : f32
    %61 = vector.broadcast %cst_20 : f32 to vector<8x8xf32>
    %62 = arith.select %20, %61, %60 : vector<8x8xi1>, vector<8x8xf32>
    %cst_21 = arith.constant dense<0xFF800000> : vector<8xf32>
    %63 = vector.multi_reduction <maximumf>, %62, %cst_21 [1] : vector<8x8xf32> to vector<8xf32>
    %64 = vector.shape_cast %63 : vector<8xf32> to vector<8x1xf32>
    %65 = vector.broadcast %64 : vector<8x1xf32> to vector<8x8xf32>
    %66 = arith.subf %62, %65 : vector<8x8xf32>
    %67 = math.exp %66 : vector<8x8xf32>
    %cst_22 = arith.constant dense<0.000000e+00> : vector<8xf32>
    %68 = vector.multi_reduction <add>, %67, %cst_22 [1] : vector<8x8xf32> to vector<8xf32>
    %69 = vector.shape_cast %68 : vector<8xf32> to vector<8x1xf32>
    %70 = tpu.reciprocal %69 {approx = true} : vector<8x1xf32> -> vector<8x1xf32>
    %71 = vector.broadcast %70 : vector<8x1xf32> to vector<8x8xf32>
    %72 = arith.mulf %67, %71 : vector<8x8xf32>
    %73 = arith.truncf %72 : vector<8x8xf32> to vector<8x8xbf16>
    %cst_23 = arith.constant dense<0.000000e+00> : vector<8x128xf32>
    %74 = tpu.matmul %73, %59, %cst_23 {dimension_numbers = #tpu.dot_dimension_numbers<[1], [0], [0], [1], [0, 0, 1, 1], [], []>} : vector<8x8xbf16>, vector<8x128xbf16>, vector<8x128xf32> -> vector<8x128xf32>
    %75 = vector.extract_strided_slice %9 {offsets = [0, 384], sizes = [8, 128], strides = [1, 1]} : vector<8x1536xbf16> to vector<8x128xbf16>
    %76 = vector.extract_strided_slice %9 {offsets = [0, 896], sizes = [8, 128], strides = [1, 1]} : vector<8x1536xbf16> to vector<8x128xbf16>
    %77 = vector.extract_strided_slice %9 {offsets = [0, 1408], sizes = [8, 128], strides = [1, 1]} : vector<8x1536xbf16> to vector<8x128xbf16>
    %cst_24 = arith.constant dense<0.000000e+00> : vector<8x8xf32>
    %78 = tpu.matmul %75, %76, %cst_24 {dimension_numbers = #tpu.dot_dimension_numbers<[1], [1], [0], [0], [0, 0, 1, 0], [], []>} : vector<8x128xbf16>, vector<8x128xbf16>, vector<8x8xf32> -> vector<8x8xf32>
    %cst_25 = arith.constant -1.000000e+09 : f32
    %79 = vector.broadcast %cst_25 : f32 to vector<8x8xf32>
    %80 = arith.select %20, %79, %78 : vector<8x8xi1>, vector<8x8xf32>
    %cst_26 = arith.constant dense<0xFF800000> : vector<8xf32>
    %81 = vector.multi_reduction <maximumf>, %80, %cst_26 [1] : vector<8x8xf32> to vector<8xf32>
    %82 = vector.shape_cast %81 : vector<8xf32> to vector<8x1xf32>
    %83 = vector.broadcast %82 : vector<8x1xf32> to vector<8x8xf32>
    %84 = arith.subf %80, %83 : vector<8x8xf32>
    %85 = math.exp %84 : vector<8x8xf32>
    %cst_27 = arith.constant dense<0.000000e+00> : vector<8xf32>
    %86 = vector.multi_reduction <add>, %85, %cst_27 [1] : vector<8x8xf32> to vector<8xf32>
    %87 = vector.shape_cast %86 : vector<8xf32> to vector<8x1xf32>
    %88 = tpu.reciprocal %87 {approx = true} : vector<8x1xf32> -> vector<8x1xf32>
    %89 = vector.broadcast %88 : vector<8x1xf32> to vector<8x8xf32>
    %90 = arith.mulf %85, %89 : vector<8x8xf32>
    %91 = arith.truncf %90 : vector<8x8xf32> to vector<8x8xbf16>
    %cst_28 = arith.constant dense<0.000000e+00> : vector<8x128xf32>
    %92 = tpu.matmul %91, %77, %cst_28 {dimension_numbers = #tpu.dot_dimension_numbers<[1], [0], [0], [1], [0, 0, 1, 1], [], []>} : vector<8x8xbf16>, vector<8x128xbf16>, vector<8x128xf32> -> vector<8x128xf32>
    %93 = vector.shape_cast %36 : vector<8x8xf32> to vector<1x8x8xf32>
    %94 = vector.shape_cast %54 : vector<8x8xf32> to vector<1x8x8xf32>
    %95 = vector.shape_cast %72 : vector<8x8xf32> to vector<1x8x8xf32>
    %96 = vector.shape_cast %90 : vector<8x8xf32> to vector<1x8x8xf32>
    %97 = tpu.concatenate %93, %94, %95, %96 in 0 : vector<1x8x8xf32>, vector<1x8x8xf32>, vector<1x8x8xf32>, vector<1x8x8xf32> -> vector<4x8x8xf32>
    %c0_29 = arith.constant 0 : index
    %c0_30 = arith.constant 0 : index
    %c0_31 = arith.constant 0 : index
    %c0_32 = arith.constant 0 : index
    %98 = vector.load %arg8[%c0_29, %c0_30, %c0_31, %c0_32] : memref<1x4x8x8xf32, #tpu.memory_space<vmem>>, vector<1x4x8x8xf32>
    %99 = vector.shape_cast %98 : vector<1x4x8x8xf32> to vector<4x8x8xf32>
    %100 = vector.shape_cast %97 : vector<4x8x8xf32> to vector<1x4x8x8xf32>
    tpu.vector_store %arg8[%c0_29, %c0_30, %c0_31, %c0_32], %100 {strides = array<i32>} : memref<1x4x8x8xf32, #tpu.memory_space<vmem>>, vector<1x4x8x8xf32>,
    %101 = tpu.concatenate %38, %56, %74, %92 in 1 : vector<8x128xf32>, vector<8x128xf32>, vector<8x128xf32>, vector<8x128xf32> -> vector<8x512xf32>
    %102 = arith.truncf %101 : vector<8x512xf32> to vector<8x512xbf16>
    %c0_33 = arith.constant 0 : index
    %c3200 = arith.constant 3200 : index
    %103 = vector.load %arg5[%c0_33, %c3200] : memref<64x4352xbf16, #tpu.memory_space<vmem>>, vector<64x512xbf16>
    %cst_34 = arith.constant dense<0.000000e+00> : vector<8x64xf32>
    %104 = tpu.matmul %102, %103, %cst_34 {dimension_numbers = #tpu.dot_dimension_numbers<[1], [1], [0], [0], [0, 0, 1, 0], [], []>} : vector<8x512xbf16>, vector<64x512xbf16>, vector<8x64xf32> -> vector<8x64xf32>
    %c3 = arith.constant 3 : index
    %c0_35 = arith.constant 0 : index
    %105 = vector.load %arg6[%c3, %c0_35] : memref<13x1536xf32, #tpu.memory_space<vmem>>, vector<1x64xf32>
    %106 = vector.broadcast %105 : vector<1x64xf32> to vector<8x64xf32>
    %107 = arith.addf %104, %106 : vector<8x64xf32>
    %108 = arith.addf %1, %107 : vector<8x64xf32>
    %cst_36 = arith.constant dense<0.000000e+00> : vector<8xf32>
    %109 = vector.multi_reduction <add>, %108, %cst_36 [1] : vector<8x64xf32> to vector<8xf32>
    %110 = vector.shape_cast %109 : vector<8xf32> to vector<8x1xf32>
    %cst_37 = arith.constant 6.400000e+01 : f32
    %111 = vector.broadcast %cst_37 : f32 to vector<8x1xf32>
    %112 = arith.divf %110, %111 : vector<8x1xf32>
    %113 = vector.broadcast %112 : vector<8x1xf32> to vector<8x64xf32>
    %114 = arith.subf %108, %113 : vector<8x64xf32>
    %115 = arith.mulf %114, %114 : vector<8x64xf32>
    %cst_38 = arith.constant dense<0.000000e+00> : vector<8xf32>
    %116 = vector.multi_reduction <add>, %115, %cst_38 [1] : vector<8x64xf32> to vector<8xf32>
    %117 = vector.shape_cast %116 : vector<8xf32> to vector<8x1xf32>
    %cst_39 = arith.constant 6.400000e+01 : f32
    %118 = vector.broadcast %cst_39 : f32 to vector<8x1xf32>
    %119 = arith.divf %117, %118 : vector<8x1xf32>
    %cst_40 = arith.constant 9.99999996E-13 : f32
    %120 = vector.broadcast %cst_40 : f32 to vector<8x1xf32>
    %121 = arith.addf %119, %120 : vector<8x1xf32>
    %122 = math.rsqrt %121 : vector<8x1xf32>
    %123 = vector.broadcast %122 : vector<8x1xf32> to vector<8x64xf32>
    %124 = arith.mulf %114, %123 : vector<8x64xf32>
    %c4 = arith.constant 4 : index
    %c0_41 = arith.constant 0 : index
    %125 = vector.load %arg6[%c4, %c0_41] : memref<13x1536xf32, #tpu.memory_space<vmem>>, vector<1x64xf32>
    %126 = vector.broadcast %125 : vector<1x64xf32> to vector<8x64xf32>
    %127 = arith.mulf %124, %126 : vector<8x64xf32>
    %c5 = arith.constant 5 : index
    %c0_42 = arith.constant 0 : index
    %128 = vector.load %arg6[%c5, %c0_42] : memref<13x1536xf32, #tpu.memory_space<vmem>>, vector<1x64xf32>
    %129 = vector.broadcast %128 : vector<1x64xf32> to vector<8x64xf32>
    %130 = arith.addf %127, %129 : vector<8x64xf32>
    %131 = arith.truncf %130 : vector<8x64xf32> to vector<8x64xbf16>
    %c0_43 = arith.constant 0 : index
    %c1536 = arith.constant 1536 : index
    %132 = vector.load %arg5[%c0_43, %c1536] : memref<64x4352xbf16, #tpu.memory_space<vmem>>, vector<64x512xbf16>
    %cst_44 = arith.constant dense<0.000000e+00> : vector<8x512xf32>
    %133 = tpu.matmul %131, %132, %cst_44 {dimension_numbers = #tpu.dot_dimension_numbers<[1], [0], [0], [1], [0, 0, 1, 1], [], []>} : vector<8x64xbf16>, vector<64x512xbf16>, vector<8x512xf32> -> vector<8x512xf32>
    %c1 = arith.constant 1 : index
    %c0_45 = arith.constant 0 : index
    %134 = vector.load %arg6[%c1, %c0_45] : memref<13x1536xf32, #tpu.memory_space<vmem>>, vector<1x512xf32>
    %135 = vector.broadcast %134 : vector<1x512xf32> to vector<8x512xf32>
    %136 = arith.addf %133, %135 : vector<8x512xf32>
    %137 = arith.truncf %2 : vector<8x64xf32> to vector<8x64xbf16>
    %c0_46 = arith.constant 0 : index
    %c2048 = arith.constant 2048 : index
    %138 = vector.load %arg5[%c0_46, %c2048] : memref<64x4352xbf16, #tpu.memory_space<vmem>>, vector<64x1024xbf16>
    %cst_47 = arith.constant dense<0.000000e+00> : vector<8x1024xf32>
    %139 = tpu.matmul %137, %138, %cst_47 {dimension_numbers = #tpu.dot_dimension_numbers<[1], [0], [0], [1], [0, 0, 1, 1], [], []>} : vector<8x64xbf16>, vector<64x1024xbf16>, vector<8x1024xf32> -> vector<8x1024xf32>
    %c2 = arith.constant 2 : index
    %c0_48 = arith.constant 0 : index
    %140 = vector.load %arg6[%c2, %c0_48] : memref<13x1536xf32, #tpu.memory_space<vmem>>, vector<1x1024xf32>
    %141 = vector.broadcast %140 : vector<1x1024xf32> to vector<8x1024xf32>
    %142 = arith.addf %139, %141 : vector<8x1024xf32>
    %143 = arith.truncf %136 : vector<8x512xf32> to vector<8x512xbf16>
    %144 = arith.truncf %142 : vector<8x1024xf32> to vector<8x1024xbf16>
    %c0_i32_49 = arith.constant 0 : i32
    %145 = arith.addi %0, %c0_i32_49 : i32
    %146 = arith.index_cast %145 : i32 to index
    %c0_50 = arith.constant 0 : index
    %147 = vector.load %arg4[%146, %c0_50] : memref<2x8xi32, #tpu.memory_space<vmem>>, vector<1x8xi32>
    %c0_i32_51 = arith.constant 0 : i32
    %148 = vector.broadcast %c0_i32_51 : i32 to vector<1x8xi32>
    %149 = arith.cmpi ne, %147, %148 : vector<1x8xi32>
    %150 = vector.shape_cast %149 : vector<1x8xi1> to vector<1x8xi1>
    %151 = vector.broadcast %150 : vector<1x8xi1> to vector<8x8xi1>
    %152 = vector.extract_strided_slice %143 {offsets = [0, 0], sizes = [8, 128], strides = [1, 1]} : vector<8x512xbf16> to vector<8x128xbf16>
    %153 = vector.extract_strided_slice %144 {offsets = [0, 0], sizes = [8, 128], strides = [1, 1]} : vector<8x1024xbf16> to vector<8x128xbf16>
    %154 = vector.extract_strided_slice %144 {offsets = [0, 512], sizes = [8, 128], strides = [1, 1]} : vector<8x1024xbf16> to vector<8x128xbf16>
    %cst_52 = arith.constant dense<0.000000e+00> : vector<8x8xf32>
    %155 = tpu.matmul %152, %153, %cst_52 {dimension_numbers = #tpu.dot_dimension_numbers<[1], [1], [0], [0], [0, 0, 1, 0], [], []>} : vector<8x128xbf16>, vector<8x128xbf16>, vector<8x8xf32> -> vector<8x8xf32>
    %cst_53 = arith.constant -1.000000e+09 : f32
    %156 = vector.broadcast %cst_53 : f32 to vector<8x8xf32>
    %157 = arith.select %151, %156, %155 : vector<8x8xi1>, vector<8x8xf32>
    %cst_54 = arith.constant dense<0xFF800000> : vector<8xf32>
    %158 = vector.multi_reduction <maximumf>, %157, %cst_54 [1] : vector<8x8xf32> to vector<8xf32>
    %159 = vector.shape_cast %158 : vector<8xf32> to vector<8x1xf32>
    %160 = vector.broadcast %159 : vector<8x1xf32> to vector<8x8xf32>
    %161 = arith.subf %157, %160 : vector<8x8xf32>
    %162 = math.exp %161 : vector<8x8xf32>
    %cst_55 = arith.constant dense<0.000000e+00> : vector<8xf32>
    %163 = vector.multi_reduction <add>, %162, %cst_55 [1] : vector<8x8xf32> to vector<8xf32>
    %164 = vector.shape_cast %163 : vector<8xf32> to vector<8x1xf32>
    %165 = tpu.reciprocal %164 {approx = true} : vector<8x1xf32> -> vector<8x1xf32>
    %166 = vector.broadcast %165 : vector<8x1xf32> to vector<8x8xf32>
    %167 = arith.mulf %162, %166 : vector<8x8xf32>
    %168 = arith.truncf %167 : vector<8x8xf32> to vector<8x8xbf16>
    %cst_56 = arith.constant dense<0.000000e+00> : vector<8x128xf32>
    %169 = tpu.matmul %168, %154, %cst_56 {dimension_numbers = #tpu.dot_dimension_numbers<[1], [0], [0], [1], [0, 0, 1, 1], [], []>} : vector<8x8xbf16>, vector<8x128xbf16>, vector<8x128xf32> -> vector<8x128xf32>
    %170 = vector.extract_strided_slice %143 {offsets = [0, 128], sizes = [8, 128], strides = [1, 1]} : vector<8x512xbf16> to vector<8x128xbf16>
    %171 = vector.extract_strided_slice %144 {offsets = [0, 128], sizes = [8, 128], strides = [1, 1]} : vector<8x1024xbf16> to vector<8x128xbf16>
    %172 = vector.extract_strided_slice %144 {offsets = [0, 640], sizes = [8, 128], strides = [1, 1]} : vector<8x1024xbf16> to vector<8x128xbf16>
    %cst_57 = arith.constant dense<0.000000e+00> : vector<8x8xf32>
    %173 = tpu.matmul %170, %171, %cst_57 {dimension_numbers = #tpu.dot_dimension_numbers<[1], [1], [0], [0], [0, 0, 1, 0], [], []>} : vector<8x128xbf16>, vector<8x128xbf16>, vector<8x8xf32> -> vector<8x8xf32>
    %cst_58 = arith.constant -1.000000e+09 : f32
    %174 = vector.broadcast %cst_58 : f32 to vector<8x8xf32>
    %175 = arith.select %151, %174, %173 : vector<8x8xi1>, vector<8x8xf32>
    %cst_59 = arith.constant dense<0xFF800000> : vector<8xf32>
    %176 = vector.multi_reduction <maximumf>, %175, %cst_59 [1] : vector<8x8xf32> to vector<8xf32>
    %177 = vector.shape_cast %176 : vector<8xf32> to vector<8x1xf32>
    %178 = vector.broadcast %177 : vector<8x1xf32> to vector<8x8xf32>
    %179 = arith.subf %175, %178 : vector<8x8xf32>
    %180 = math.exp %179 : vector<8x8xf32>
    %cst_60 = arith.constant dense<0.000000e+00> : vector<8xf32>
    %181 = vector.multi_reduction <add>, %180, %cst_60 [1] : vector<8x8xf32> to vector<8xf32>
    %182 = vector.shape_cast %181 : vector<8xf32> to vector<8x1xf32>
    %183 = tpu.reciprocal %182 {approx = true} : vector<8x1xf32> -> vector<8x1xf32>
    %184 = vector.broadcast %183 : vector<8x1xf32> to vector<8x8xf32>
    %185 = arith.mulf %180, %184 : vector<8x8xf32>
    %186 = arith.truncf %185 : vector<8x8xf32> to vector<8x8xbf16>
    %cst_61 = arith.constant dense<0.000000e+00> : vector<8x128xf32>
    %187 = tpu.matmul %186, %172, %cst_61 {dimension_numbers = #tpu.dot_dimension_numbers<[1], [0], [0], [1], [0, 0, 1, 1], [], []>} : vector<8x8xbf16>, vector<8x128xbf16>, vector<8x128xf32> -> vector<8x128xf32>
    %188 = vector.extract_strided_slice %143 {offsets = [0, 256], sizes = [8, 128], strides = [1, 1]} : vector<8x512xbf16> to vector<8x128xbf16>
    %189 = vector.extract_strided_slice %144 {offsets = [0, 256], sizes = [8, 128], strides = [1, 1]} : vector<8x1024xbf16> to vector<8x128xbf16>
    %190 = vector.extract_strided_slice %144 {offsets = [0, 768], sizes = [8, 128], strides = [1, 1]} : vector<8x1024xbf16> to vector<8x128xbf16>
    %cst_62 = arith.constant dense<0.000000e+00> : vector<8x8xf32>
    %191 = tpu.matmul %188, %189, %cst_62 {dimension_numbers = #tpu.dot_dimension_numbers<[1], [1], [0], [0], [0, 0, 1, 0], [], []>} : vector<8x128xbf16>, vector<8x128xbf16>, vector<8x8xf32> -> vector<8x8xf32>
    %cst_63 = arith.constant -1.000000e+09 : f32
    %192 = vector.broadcast %cst_63 : f32 to vector<8x8xf32>
    %193 = arith.select %151, %192, %191 : vector<8x8xi1>, vector<8x8xf32>
    %cst_64 = arith.constant dense<0xFF800000> : vector<8xf32>
    %194 = vector.multi_reduction <maximumf>, %193, %cst_64 [1] : vector<8x8xf32> to vector<8xf32>
    %195 = vector.shape_cast %194 : vector<8xf32> to vector<8x1xf32>
    %196 = vector.broadcast %195 : vector<8x1xf32> to vector<8x8xf32>
    %197 = arith.subf %193, %196 : vector<8x8xf32>
    %198 = math.exp %197 : vector<8x8xf32>
    %cst_65 = arith.constant dense<0.000000e+00> : vector<8xf32>
    %199 = vector.multi_reduction <add>, %198, %cst_65 [1] : vector<8x8xf32> to vector<8xf32>
    %200 = vector.shape_cast %199 : vector<8xf32> to vector<8x1xf32>
    %201 = tpu.reciprocal %200 {approx = true} : vector<8x1xf32> -> vector<8x1xf32>
    %202 = vector.broadcast %201 : vector<8x1xf32> to vector<8x8xf32>
    %203 = arith.mulf %198, %202 : vector<8x8xf32>
    %204 = arith.truncf %203 : vector<8x8xf32> to vector<8x8xbf16>
    %cst_66 = arith.constant dense<0.000000e+00> : vector<8x128xf32>
    %205 = tpu.matmul %204, %190, %cst_66 {dimension_numbers = #tpu.dot_dimension_numbers<[1], [0], [0], [1], [0, 0, 1, 1], [], []>} : vector<8x8xbf16>, vector<8x128xbf16>, vector<8x128xf32> -> vector<8x128xf32>
    %206 = vector.extract_strided_slice %143 {offsets = [0, 384], sizes = [8, 128], strides = [1, 1]} : vector<8x512xbf16> to vector<8x128xbf16>
    %207 = vector.extract_strided_slice %144 {offsets = [0, 384], sizes = [8, 128], strides = [1, 1]} : vector<8x1024xbf16> to vector<8x128xbf16>
    %208 = vector.extract_strided_slice %144 {offsets = [0, 896], sizes = [8, 128], strides = [1, 1]} : vector<8x1024xbf16> to vector<8x128xbf16>
    %cst_67 = arith.constant dense<0.000000e+00> : vector<8x8xf32>
    %209 = tpu.matmul %206, %207, %cst_67 {dimension_numbers = #tpu.dot_dimension_numbers<[1], [1], [0], [0], [0, 0, 1, 0], [], []>} : vector<8x128xbf16>, vector<8x128xbf16>, vector<8x8xf32> -> vector<8x8xf32>
    %cst_68 = arith.constant -1.000000e+09 : f32
    %210 = vector.broadcast %cst_68 : f32 to vector<8x8xf32>
    %211 = arith.select %151, %210, %209 : vector<8x8xi1>, vector<8x8xf32>
    %cst_69 = arith.constant dense<0xFF800000> : vector<8xf32>
    %212 = vector.multi_reduction <maximumf>, %211, %cst_69 [1] : vector<8x8xf32> to vector<8xf32>
    %213 = vector.shape_cast %212 : vector<8xf32> to vector<8x1xf32>
    %214 = vector.broadcast %213 : vector<8x1xf32> to vector<8x8xf32>
    %215 = arith.subf %211, %214 : vector<8x8xf32>
    %216 = math.exp %215 : vector<8x8xf32>
    %cst_70 = arith.constant dense<0.000000e+00> : vector<8xf32>
    %217 = vector.multi_reduction <add>, %216, %cst_70 [1] : vector<8x8xf32> to vector<8xf32>
    %218 = vector.shape_cast %217 : vector<8xf32> to vector<8x1xf32>
    %219 = tpu.reciprocal %218 {approx = true} : vector<8x1xf32> -> vector<8x1xf32>
    %220 = vector.broadcast %219 : vector<8x1xf32> to vector<8x8xf32>
    %221 = arith.mulf %216, %220 : vector<8x8xf32>
    %222 = arith.truncf %221 : vector<8x8xf32> to vector<8x8xbf16>
    %cst_71 = arith.constant dense<0.000000e+00> : vector<8x128xf32>
    %223 = tpu.matmul %222, %208, %cst_71 {dimension_numbers = #tpu.dot_dimension_numbers<[1], [0], [0], [1], [0, 0, 1, 1], [], []>} : vector<8x8xbf16>, vector<8x128xbf16>, vector<8x128xf32> -> vector<8x128xf32>
    %224 = vector.shape_cast %167 : vector<8x8xf32> to vector<1x8x8xf32>
    %225 = vector.shape_cast %185 : vector<8x8xf32> to vector<1x8x8xf32>
    %226 = vector.shape_cast %203 : vector<8x8xf32> to vector<1x8x8xf32>
    %227 = vector.shape_cast %221 : vector<8x8xf32> to vector<1x8x8xf32>
    %228 = tpu.concatenate %224, %225, %226, %227 in 0 : vector<1x8x8xf32>, vector<1x8x8xf32>, vector<1x8x8xf32>, vector<1x8x8xf32> -> vector<4x8x8xf32>
    %c0_72 = arith.constant 0 : index
    %c0_73 = arith.constant 0 : index
    %c0_74 = arith.constant 0 : index
    %c0_75 = arith.constant 0 : index
    %229 = vector.load %arg9[%c0_72, %c0_73, %c0_74, %c0_75] : memref<1x4x8x8xf32, #tpu.memory_space<vmem>>, vector<1x4x8x8xf32>
    %230 = vector.shape_cast %229 : vector<1x4x8x8xf32> to vector<4x8x8xf32>
    %231 = vector.shape_cast %228 : vector<4x8x8xf32> to vector<1x4x8x8xf32>
    tpu.vector_store %arg9[%c0_72, %c0_73, %c0_74, %c0_75], %231 {strides = array<i32>} : memref<1x4x8x8xf32, #tpu.memory_space<vmem>>, vector<1x4x8x8xf32>,
    %232 = tpu.concatenate %169, %187, %205, %223 in 1 : vector<8x128xf32>, vector<8x128xf32>, vector<8x128xf32>, vector<8x128xf32> -> vector<8x512xf32>
    %233 = arith.truncf %232 : vector<8x512xf32> to vector<8x512xbf16>
    %c0_76 = arith.constant 0 : index
    %c3712 = arith.constant 3712 : index
    %234 = vector.load %arg5[%c0_76, %c3712] : memref<64x4352xbf16, #tpu.memory_space<vmem>>, vector<64x512xbf16>
    %cst_77 = arith.constant dense<0.000000e+00> : vector<8x64xf32>
    %235 = tpu.matmul %233, %234, %cst_77 {dimension_numbers = #tpu.dot_dimension_numbers<[1], [1], [0], [0], [0, 0, 1, 0], [], []>} : vector<8x512xbf16>, vector<64x512xbf16>, vector<8x64xf32> -> vector<8x64xf32>
    %c6 = arith.constant 6 : index
    %c0_78 = arith.constant 0 : index
    %236 = vector.load %arg6[%c6, %c0_78] : memref<13x1536xf32, #tpu.memory_space<vmem>>, vector<1x64xf32>
    %237 = vector.broadcast %236 : vector<1x64xf32> to vector<8x64xf32>
    %238 = arith.addf %235, %237 : vector<8x64xf32>
    %239 = arith.addf %130, %238 : vector<8x64xf32>
    %cst_79 = arith.constant dense<0.000000e+00> : vector<8xf32>
    %240 = vector.multi_reduction <add>, %239, %cst_79 [1] : vector<8x64xf32> to vector<8xf32>
    %241 = vector.shape_cast %240 : vector<8xf32> to vector<8x1xf32>
    %cst_80 = arith.constant 6.400000e+01 : f32
    %242 = vector.broadcast %cst_80 : f32 to vector<8x1xf32>
    %243 = arith.divf %241, %242 : vector<8x1xf32>
    %244 = vector.broadcast %243 : vector<8x1xf32> to vector<8x64xf32>
    %245 = arith.subf %239, %244 : vector<8x64xf32>
    %246 = arith.mulf %245, %245 : vector<8x64xf32>
    %cst_81 = arith.constant dense<0.000000e+00> : vector<8xf32>
    %247 = vector.multi_reduction <add>, %246, %cst_81 [1] : vector<8x64xf32> to vector<8xf32>
    %248 = vector.shape_cast %247 : vector<8xf32> to vector<8x1xf32>
    %cst_82 = arith.constant 6.400000e+01 : f32
    %249 = vector.broadcast %cst_82 : f32 to vector<8x1xf32>
    %250 = arith.divf %248, %249 : vector<8x1xf32>
    %cst_83 = arith.constant 9.99999996E-13 : f32
    %251 = vector.broadcast %cst_83 : f32 to vector<8x1xf32>
    %252 = arith.addf %250, %251 : vector<8x1xf32>
    %253 = math.rsqrt %252 : vector<8x1xf32>
    %254 = vector.broadcast %253 : vector<8x1xf32> to vector<8x64xf32>
    %255 = arith.mulf %245, %254 : vector<8x64xf32>
    %c7 = arith.constant 7 : index
    %c0_84 = arith.constant 0 : index
    %256 = vector.load %arg6[%c7, %c0_84] : memref<13x1536xf32, #tpu.memory_space<vmem>>, vector<1x64xf32>
    %257 = vector.broadcast %256 : vector<1x64xf32> to vector<8x64xf32>
    %258 = arith.mulf %255, %257 : vector<8x64xf32>
    %c8 = arith.constant 8 : index
    %c0_85 = arith.constant 0 : index
    %259 = vector.load %arg6[%c8, %c0_85] : memref<13x1536xf32, #tpu.memory_space<vmem>>, vector<1x64xf32>
    %260 = vector.broadcast %259 : vector<1x64xf32> to vector<8x64xf32>
    %261 = arith.addf %258, %260 : vector<8x64xf32>
    %262 = arith.truncf %261 : vector<8x64xf32> to vector<8x64xbf16>
    %c0_86 = arith.constant 0 : index
    %c3072 = arith.constant 3072 : index
    %263 = vector.load %arg5[%c0_86, %c3072] : memref<64x4352xbf16, #tpu.memory_space<vmem>>, vector<64x128xbf16>
    %cst_87 = arith.constant dense<0.000000e+00> : vector<8x128xf32>
    %264 = tpu.matmul %262, %263, %cst_87 {dimension_numbers = #tpu.dot_dimension_numbers<[1], [0], [0], [1], [0, 0, 1, 1], [], []>} : vector<8x64xbf16>, vector<64x128xbf16>, vector<8x128xf32> -> vector<8x128xf32>
    %c9 = arith.constant 9 : index
    %c0_88 = arith.constant 0 : index
    %265 = vector.load %arg6[%c9, %c0_88] : memref<13x1536xf32, #tpu.memory_space<vmem>>, vector<1x128xf32>
    %266 = vector.broadcast %265 : vector<1x128xf32> to vector<8x128xf32>
    %267 = arith.addf %264, %266 : vector<8x128xf32>
    %cst_89 = arith.constant 5.000000e-01 : f32
    %268 = vector.broadcast %cst_89 : f32 to vector<8x128xf32>
    %269 = arith.mulf %268, %267 : vector<8x128xf32>
    %cst_90 = arith.constant 4.471500e-02 : f32
    %270 = vector.broadcast %cst_90 : f32 to vector<8x128xf32>
    %271 = arith.mulf %270, %267 : vector<8x128xf32>
    %272 = arith.mulf %271, %267 : vector<8x128xf32>
    %273 = arith.mulf %272, %267 : vector<8x128xf32>
    %274 = arith.addf %267, %273 : vector<8x128xf32>
    %cst_91 = arith.constant 0.797884583 : f32
    %275 = vector.broadcast %cst_91 : f32 to vector<8x128xf32>
    %276 = arith.mulf %275, %274 : vector<8x128xf32>
    %277 = math.tanh %276 : vector<8x128xf32>
    %cst_92 = arith.constant 1.000000e+00 : f32
    %278 = vector.broadcast %cst_92 : f32 to vector<8x128xf32>
    %279 = arith.addf %278, %277 : vector<8x128xf32>
    %280 = arith.mulf %269, %279 : vector<8x128xf32>
    %281 = arith.truncf %280 : vector<8x128xf32> to vector<8x128xbf16>
    %c0_93 = arith.constant 0 : index
    %c4224 = arith.constant 4224 : index
    %282 = vector.load %arg5[%c0_93, %c4224] : memref<64x4352xbf16, #tpu.memory_space<vmem>>, vector<64x128xbf16>
    %cst_94 = arith.constant dense<0.000000e+00> : vector<8x64xf32>
    %283 = tpu.matmul %281, %282, %cst_94 {dimension_numbers = #tpu.dot_dimension_numbers<[1], [1], [0], [0], [0, 0, 1, 0], [], []>} : vector<8x128xbf16>, vector<64x128xbf16>, vector<8x64xf32> -> vector<8x64xf32>
    %c10 = arith.constant 10 : index
    %c0_95 = arith.constant 0 : index
    %284 = vector.load %arg6[%c10, %c0_95] : memref<13x1536xf32, #tpu.memory_space<vmem>>, vector<1x64xf32>
    %285 = vector.broadcast %284 : vector<1x64xf32> to vector<8x64xf32>
    %286 = arith.addf %283, %285 : vector<8x64xf32>
    %287 = arith.addf %261, %286 : vector<8x64xf32>
    %cst_96 = arith.constant dense<0.000000e+00> : vector<8xf32>
    %288 = vector.multi_reduction <add>, %287, %cst_96 [1] : vector<8x64xf32> to vector<8xf32>
    %289 = vector.shape_cast %288 : vector<8xf32> to vector<8x1xf32>
    %cst_97 = arith.constant 6.400000e+01 : f32
    %290 = vector.broadcast %cst_97 : f32 to vector<8x1xf32>
    %291 = arith.divf %289, %290 : vector<8x1xf32>
    %292 = vector.broadcast %291 : vector<8x1xf32> to vector<8x64xf32>
    %293 = arith.subf %287, %292 : vector<8x64xf32>
    %294 = arith.mulf %293, %293 : vector<8x64xf32>
    %cst_98 = arith.constant dense<0.000000e+00> : vector<8xf32>
    %295 = vector.multi_reduction <add>, %294, %cst_98 [1] : vector<8x64xf32> to vector<8xf32>
    %296 = vector.shape_cast %295 : vector<8xf32> to vector<8x1xf32>
    %cst_99 = arith.constant 6.400000e+01 : f32
    %297 = vector.broadcast %cst_99 : f32 to vector<8x1xf32>
    %298 = arith.divf %296, %297 : vector<8x1xf32>
    %cst_100 = arith.constant 9.99999996E-13 : f32
    %299 = vector.broadcast %cst_100 : f32 to vector<8x1xf32>
    %300 = arith.addf %298, %299 : vector<8x1xf32>
    %301 = math.rsqrt %300 : vector<8x1xf32>
    %302 = vector.broadcast %301 : vector<8x1xf32> to vector<8x64xf32>
    %303 = arith.mulf %293, %302 : vector<8x64xf32>
    %c11 = arith.constant 11 : index
    %c0_101 = arith.constant 0 : index
    %304 = vector.load %arg6[%c11, %c0_101] : memref<13x1536xf32, #tpu.memory_space<vmem>>, vector<1x64xf32>
    %305 = vector.broadcast %304 : vector<1x64xf32> to vector<8x64xf32>
    %306 = arith.mulf %303, %305 : vector<8x64xf32>
    %c12 = arith.constant 12 : index
    %c0_102 = arith.constant 0 : index
    %307 = vector.load %arg6[%c12, %c0_102] : memref<13x1536xf32, #tpu.memory_space<vmem>>, vector<1x64xf32>
    %308 = vector.broadcast %307 : vector<1x64xf32> to vector<8x64xf32>
    %309 = arith.addf %306, %308 : vector<8x64xf32>
    %c0_103 = arith.constant 0 : index
    %c0_104 = arith.constant 0 : index
    %310 = vector.load %arg7[%c0_103, %c0_104] : memref<8x64xf32, #tpu.memory_space<vmem>>, vector<8x64xf32>
    tpu.vector_store %arg7[%c0_103, %c0_104], %309 {strides = array<i32>} : memref<8x64xf32, #tpu.memory_space<vmem>>, vector<8x64xf32>,
    return
  }
  func.func @transform_0(%arg0: i32) -> (i32, i32) {
    %c0_i32 = arith.constant 0 : i32
    %c0_i32_0 = arith.constant 0 : i32
    return %arg0, %c0_i32 : i32, i32
  }
  func.func @transform_1(%arg0: i32) -> (i32, i32) {
    %c0_i32 = arith.constant 0 : i32
    %c0_i32_0 = arith.constant 0 : i32
    return %arg0, %c0_i32 : i32, i32
  }
  func.func @transform_2(%arg0: i32) -> (i32, i32) {
    %c0_i32 = arith.constant 0 : i32
    %c0_i32_0 = arith.constant 0 : i32
    %c0_i32_1 = arith.constant 0 : i32
    return %c0_i32, %c0_i32_0 : i32, i32
  }
  func.func @transform_3(%arg0: i32) -> (i32, i32) {
    %c0_i32 = arith.constant 0 : i32
    %c0_i32_0 = arith.constant 0 : i32
    %c0_i32_1 = arith.constant 0 : i32
    return %c0_i32, %c0_i32_0 : i32, i32
  }
  func.func @transform_4(%arg0: i32) -> (i32, i32) {
    %c0_i32 = arith.constant 0 : i32
    %c0_i32_0 = arith.constant 0 : i32
    %c0_i32_1 = arith.constant 0 : i32
    return %c0_i32, %c0_i32_0 : i32, i32
  }
  func.func @transform_5(%arg0: i32) -> (i32, i32) {
    %c0_i32 = arith.constant 0 : i32
    %c0_i32_0 = arith.constant 0 : i32
    %c0_i32_1 = arith.constant 0 : i32
    return %c0_i32, %c0_i32_0 : i32, i32
  }
  func.func @transform_6(%arg0: i32) -> (i32, i32) {
    %c0_i32 = arith.constant 0 : i32
    %c0_i32_0 = arith.constant 0 : i32
    return %arg0, %c0_i32 : i32, i32
  }
  func.func @transform_7(%arg0: i32) -> (i32, i32, i32, i32) {
    %c0_i32 = arith.constant 0 : i32
    %c0_i32_0 = arith.constant 0 : i32
    %c0_i32_1 = arith.constant 0 : i32
    %c0_i32_2 = arith.constant 0 : i32
    return %arg0, %c0_i32, %c0_i32_0, %c0_i32_1 : i32, i32, i32, i32
  }
  func.func @transform_8(%arg0: i32) -> (i32, i32, i32, i32) {
    %c0_i32 = arith.constant 0 : i32
    %c0_i32_0 = arith.constant 0 : i32
    %c0_i32_1 = arith.constant 0 : i32
    %c0_i32_2 = arith.constant 0 : i32
    return %arg0, %c0_i32, %c0_i32_0, %c0_i32_1 : i32, i32, i32, i32
  }
}

module attributes {stable_mosaic.version = 11 : i64} {
  func.func @decoder_layer_kernel(%arg0: i32, %arg1: memref<8x64xf32, #tpu.memory_space<vmem>>, %arg2: memref<8x64xf32, #tpu.memory_space<vmem>>, %arg3: memref<2x8xi32, #tpu.memory_space<vmem>>, %arg4: memref<2x8xi32, #tpu.memory_space<vmem>>, %arg5: memref<64x4352xbf16, #tpu.memory_space<vmem>>, %arg6: memref<13x1536xf32, #tpu.memory_space<vmem>>, %arg7: memref<8x64xf32, #tpu.memory_space<vmem>>, %arg8: memref<1x4x8x8xf32, #tpu.memory_space<vmem>>, %arg9: memref<1x4x8x8xf32, #tpu.memory_space<vmem>>) attributes {dimension_semantics = [#tpu.dimension_semantics<parallel>], iteration_bounds = array<i64: 2>, scalar_prefetch = 0 : i64, scratch_operands = 0 : i64, tpu.core_type = #tpu.core_type<tc>, window_params = [{transform_indices = @transform_0, window_bounds = array<i64: 8, 64>}, {transform_indices = @transform_1, window_bounds = array<i64: 8, 64>}, {pipeline_mode = #tpu.pipeline_mode<synchronous>, transform_indices = @transform_2, window_bounds = array<i64: 2, 8>}, {pipeline_mode = #tpu.pipeline_mode<synchronous>, transform_indices = @transform_3, window_bounds = array<i64: 2, 8>}, {pipeline_mode = #tpu.pipeline_mode<synchronous>, transform_indices = @transform_4, window_bounds = array<i64: 64, 4352>}, {pipeline_mode = #tpu.pipeline_mode<synchronous>, transform_indices = @transform_5, window_bounds = array<i64: 13, 1536>}, {transform_indices = @transform_6, window_bounds = array<i64: 8, 64>}, {transform_indices = @transform_7, window_bounds = array<i64: 1, 4, 8, 8>}, {transform_indices = @transform_8, window_bounds = array<i64: 1, 4, 8, 8>}]} {
    %c1_i32 = arith.constant 1 : i32
    %0 = arith.muli %arg0, %c1_i32 : i32
    %c0 = arith.constant 0 : index
    %c0_0 = arith.constant 0 : index
    %1 = vector.load %arg1[%c0, %c0_0] : memref<8x64xf32, #tpu.memory_space<vmem>>, vector<8x64xf32>
    %c0_1 = arith.constant 0 : index
    %c0_2 = arith.constant 0 : index
    %2 = vector.load %arg2[%c0_1, %c0_2] : memref<8x64xf32, #tpu.memory_space<vmem>>, vector<8x64xf32>
    %3 = arith.truncf %1 : vector<8x64xf32> to vector<8x64xbf16>
    %c0_3 = arith.constant 0 : index
    %c0_4 = arith.constant 0 : index
    %4 = vector.load %arg5[%c0_3, %c0_4] : memref<64x4352xbf16, #tpu.memory_space<vmem>>, vector<64x1536xbf16>
    %cst = arith.constant dense<0.000000e+00> : vector<8x1536xf32>
    %5 = tpu.matmul %3, %4, %cst {dimension_numbers = #tpu.dot_dimension_numbers<[1], [0], [0], [1], [0, 0, 1, 1], [], []>} : vector<8x64xbf16>, vector<64x1536xbf16>, vector<8x1536xf32> -> vector<8x1536xf32>
    %c0_5 = arith.constant 0 : index
    %c0_6 = arith.constant 0 : index
    %6 = vector.load %arg6[%c0_5, %c0_6] : memref<13x1536xf32, #tpu.memory_space<vmem>>, vector<1x1536xf32>
    %7 = vector.broadcast %6 : vector<1x1536xf32> to vector<8x1536xf32>
    %8 = arith.addf %5, %7 : vector<8x1536xf32>
    %9 = arith.truncf %8 : vector<8x1536xf32> to vector<8x1536xbf16>
    %10 = tpu.iota {dimensions = array<i32: 0>} : vector<8x8xi32>
    %11 = tpu.iota {dimensions = array<i32: 1>} : vector<8x8xi32>
    %12 = arith.cmpi sgt, %11, %10 : vector<8x8xi32>
    %c0_i32 = arith.constant 0 : i32
    %13 = arith.addi %0, %c0_i32 : i32
    %14 = arith.index_cast %13 : i32 to index
    %c0_7 = arith.constant 0 : index
    %15 = vector.load %arg3[%14, %c0_7] : memref<2x8xi32, #tpu.memory_space<vmem>>, vector<1x8xi32>
    %c0_i32_8 = arith.constant 0 : i32
    %16 = vector.broadcast %c0_i32_8 : i32 to vector<1x8xi32>
    %17 = arith.cmpi ne, %15, %16 : vector<1x8xi32>
    %18 = vector.shape_cast %17 : vector<1x8xi1> to vector<1x8xi1>
    %19 = vector.broadcast %18 : vector<1x8xi1> to vector<8x8xi1>
    %20 = arith.ori %19, %12 : vector<8x8xi1>
    %21 = vector.extract_strided_slice %9 {offsets = [0, 0], sizes = [8, 128], strides = [1, 1]} : vector<8x1536xbf16> to vector<8x128xbf16>
    %22 = vector.extract_strided_slice %9 {offsets = [0, 512], sizes = [8, 128], strides = [1, 1]} : vector<8x1536xbf16> to vector<8x128xbf16>
    %23 = vector.extract_strided_slice %9 {offsets = [0, 1024], sizes = [8, 128], strides = [1, 1]} : vector<8x1536xbf16> to vector<8x128xbf16>
    %cst_9 = arith.constant dense<0.000000e+00> : vector<8x8xf32>
    %24 = tpu.matmul %21, %22, %cst_9 {dimension_numbers = #tpu.dot_dimension_numbers<[1], [1], [0], [0], [0, 0, 1, 0], [], []>} : vector<8x128xbf16>, vector<8x128xbf16>, vector<8x8xf32> -> vector<8x8xf32>
    %cst_10 = arith.constant -1.000000e+09 : f32
    %25 = vector.broadcast %cst_10 : f32 to vector<8x8xf32>
    %26 = arith.select %20, %25, %24 : vector<8x8xi1>, vector<8x8xf32>
    %cst_11 = arith.constant dense<0xFF800000> : vector<8xf32>
    %27 = vector.multi_reduction <maximumf>, %26, %cst_11 [1] : vector<8x8xf32> to vector<8xf32>
    %28 = vector.shape_cast %27 : vector<8xf32> to vector<8x1xf32>
    %29 = vector.broadcast %28 : vector<8x1xf32> to vector<8x8xf32>
    %30 = arith.subf %26, %29 : vector<8x8xf32>
    %31 = math.exp %30 : vector<8x8xf32>
    %cst_12 = arith.constant dense<0.000000e+00> : vector<8xf32>
    %32 = vector.multi_reduction <add>, %31, %cst_12 [1] : vector<8x8xf32> to vector<8xf32>
    %33 = vector.shape_cast %32 : vector<8xf32> to vector<8x1xf32>
    %34 = tpu.reciprocal %33 {approx = true} : vector<8x1xf32> -> vector<8x1xf32>
    %35 = vector.broadcast %34 : vector<8x1xf32> to vector<8x8xf32>
    %36 = arith.mulf %31, %35 : vector<8x8xf32>
    %37 = arith.truncf %36 : vector<8x8xf32> to vector<8x8xbf16>
    %cst_13 = arith.constant dense<0.000000e+00> : vector<8x128xf32>
    %38 = tpu.matmul %37, %23, %cst_13 {dimension_numbers = #tpu.dot_dimension_numbers<[1], [0], [0], [1], [0, 0, 1, 1], [], []>} : vector<8x8xbf16>, vector<8x128xbf16>, vector<8x128xf32> -> vector<8x128xf32>
    %39 = vector.extract_strided_slice %9 {offsets = [0, 128], sizes = [8, 128], strides = [1, 1]} : vector<8x1536xbf16> to vector<8x128xbf16>
    %40 = vector.extract_strided_slice %9 {offsets = [0, 640], sizes = [8, 128], strides = [1, 1]} : vector<8x1536xbf16> to vector<8x128xbf16>
    %41 = vector.extract_strided_slice %9 {offsets = [0, 1152], sizes = [8, 128], strides = [1, 1]} : vector<8x1536xbf16> to vector<8x128xbf16>
    %cst_14 = arith.constant dense<0.000000e+00> : vector<8x8xf32>
    %42 = tpu.matmul %39, %40, %cst_14 {dimension_numbers = #tpu.dot_dimension_numbers<[1], [1], [0], [0], [0, 0, 1, 0], [], []>} : vector<8x128xbf16>, vector<8x128xbf16>, vector<8x8xf32> -> vector<8x8xf32>
    %cst_15 = arith.constant -1.000000e+09 : f32
    %43 = vector.broadcast %cst_15 : f32 to vector<8x8xf32>
    %44 = arith.select %20, %43, %42 : vector<8x8xi1>, vector<8x8xf32>
    %cst_16 = arith.constant dense<0xFF800000> : vector<8xf32>
    %45 = vector.multi_reduction <maximumf>, %44, %cst_16 [1] : vector<8x8xf32> to vector<8xf32>
    %46 = vector.shape_cast %45 : vector<8xf32> to vector<8x1xf32>
    %47 = vector.broadcast %46 : vector<8x1xf32> to vector<8x8xf32>
    %48 = arith.subf %44, %47 : vector<8x8xf32>
    %49 = math.exp %48 : vector<8x8xf32>
    %cst_17 = arith.constant dense<0.000000e+00> : vector<8xf32>
    %50 = vector.multi_reduction <add>, %49, %cst_17 [1] : vector<8x8xf32> to vector<8xf32>
    %51 = vector.shape_cast %50 : vector<8xf32> to vector<8x1xf32>
    %52 = tpu.reciprocal %51 {approx = true} : vector<8x1xf32> -> vector<8x1xf32>
    %53 = vector.broadcast %52 : vector<8x1xf32> to vector<8x8xf32>
    %54 = arith.mulf %49, %53 : vector<8x8xf32>
    %55 = arith.truncf %54 : vector<8x8xf32> to vector<8x8xbf16>
    %cst_18 = arith.constant dense<0.000000e+00> : vector<8x128xf32>
    %56 = tpu.matmul %55, %41, %cst_18 {dimension_numbers = #tpu.dot_dimension_numbers<[1], [0], [0], [1], [0, 0, 1, 1], [], []>} : vector<8x8xbf16>, vector<8x128xbf16>, vector<8x128xf32> -> vector<8x128xf32>
    %57 = vector.extract_strided_slice %9 {offsets = [0, 256], sizes = [8, 128], strides = [1, 1]} : vector<8x1536xbf16> to vector<8x128xbf16>
    %58 = vector.extract_strided_slice %9 {offsets = [0, 768], sizes = [8, 128], strides = [1, 1]} : vector<8x1536xbf16> to vector<8x128xbf16>
    %59 = vector.extract_strided_slice %9 {offsets = [0, 1280], sizes = [8, 128], strides = [1, 1]} : vector<8x1536xbf16> to vector<8x128xbf16>
    %cst_19 = arith.constant dense<0.000000e+00> : vector<8x8xf32>
    %60 = tpu.matmul %57, %58, %cst_19 {dimension_numbers = #tpu.dot_dimension_numbers<[1], [1], [0], [0], [0, 0, 1, 0], [], []>} : vector<8x128xbf16>, vector<8x128xbf16>, vector<8x8xf32> -> vector<8x8xf32>
    %cst_20 = arith.constant -1.000000e+09 : f32
    %61 = vector.broadcast %cst_20 : f32 to vector<8x8xf32>
    %62 = arith.select %20, %61, %60 : vector<8x8xi1>, vector<8x8xf32>
    %cst_21 = arith.constant dense<0xFF800000> : vector<8xf32>
    %63 = vector.multi_reduction <maximumf>, %62, %cst_21 [1] : vector<8x8xf32> to vector<8xf32>
    %64 = vector.shape_cast %63 : vector<8xf32> to vector<8x1xf32>
    %65 = vector.broadcast %64 : vector<8x1xf32> to vector<8x8xf32>
    %66 = arith.subf %62, %65 : vector<8x8xf32>
    %67 = math.exp %66 : vector<8x8xf32>
    %cst_22 = arith.constant dense<0.000000e+00> : vector<8xf32>
    %68 = vector.multi_reduction <add>, %67, %cst_22 [1] : vector<8x8xf32> to vector<8xf32>
    %69 = vector.shape_cast %68 : vector<8xf32> to vector<8x1xf32>
    %70 = tpu.reciprocal %69 {approx = true} : vector<8x1xf32> -> vector<8x1xf32>
    %71 = vector.broadcast %70 : vector<8x1xf32> to vector<8x8xf32>
    %72 = arith.mulf %67, %71 : vector<8x8xf32>
    %73 = arith.truncf %72 : vector<8x8xf32> to vector<8x8xbf16>
    %cst_23 = arith.constant dense<0.000000e+00> : vector<8x128xf32>
    %74 = tpu.matmul %73, %59, %cst_23 {dimension_numbers = #tpu.dot_dimension_numbers<[1], [0], [0], [1], [0, 0, 1, 1], [], []>} : vector<8x8xbf16>, vector<8x128xbf16>, vector<8x128xf32> -> vector<8x128xf32>
    %75 = vector.extract_strided_slice %9 {offsets = [0, 384], sizes = [8, 128], strides = [1, 1]} : vector<8x1536xbf16> to vector<8x128xbf16>
    %76 = vector.extract_strided_slice %9 {offsets = [0, 896], sizes = [8, 128], strides = [1, 1]} : vector<8x1536xbf16> to vector<8x128xbf16>
    %77 = vector.extract_strided_slice %9 {offsets = [0, 1408], sizes = [8, 128], strides = [1, 1]} : vector<8x1536xbf16> to vector<8x128xbf16>
    %cst_24 = arith.constant dense<0.000000e+00> : vector<8x8xf32>
    %78 = tpu.matmul %75, %76, %cst_24 {dimension_numbers = #tpu.dot_dimension_numbers<[1], [1], [0], [0], [0, 0, 1, 0], [], []>} : vector<8x128xbf16>, vector<8x128xbf16>, vector<8x8xf32> -> vector<8x8xf32>
    %cst_25 = arith.constant -1.000000e+09 : f32
    %79 = vector.broadcast %cst_25 : f32 to vector<8x8xf32>
    %80 = arith.select %20, %79, %78 : vector<8x8xi1>, vector<8x8xf32>
    %cst_26 = arith.constant dense<0xFF800000> : vector<8xf32>
    %81 = vector.multi_reduction <maximumf>, %80, %cst_26 [1] : vector<8x8xf32> to vector<8xf32>
    %82 = vector.shape_cast %81 : vector<8xf32> to vector<8x1xf32>
    %83 = vector.broadcast %82 : vector<8x1xf32> to vector<8x8xf32>
    %84 = arith.subf %80, %83 : vector<8x8xf32>
    %85 = math.exp %84 : vector<8x8xf32>
    %cst_27 = arith.constant dense<0.000000e+00> : vector<8xf32>
    %86 = vector.multi_reduction <add>, %85, %cst_27 [1] : vector<8x8xf32> to vector<8xf32>
    %87 = vector.shape_cast %86 : vector<8xf32> to vector<8x1xf32>
    %88 = tpu.reciprocal %87 {approx = true} : vector<8x1xf32> -> vector<8x1xf32>
    %89 = vector.broadcast %88 : vector<8x1xf32> to vector<8x8xf32>
    %90 = arith.mulf %85, %89 : vector<8x8xf32>
    %91 = arith.truncf %90 : vector<8x8xf32> to vector<8x8xbf16>
    %cst_28 = arith.constant dense<0.000000e+00> : vector<8x128xf32>
    %92 = tpu.matmul %91, %77, %cst_28 {dimension_numbers = #tpu.dot_dimension_numbers<[1], [0], [0], [1], [0, 0, 1, 1], [], []>} : vector<8x8xbf16>, vector<8x128xbf16>, vector<8x128xf32> -> vector<8x128xf32>
    %93 = vector.shape_cast %36 : vector<8x8xf32> to vector<1x8x8xf32>
    %94 = vector.shape_cast %54 : vector<8x8xf32> to vector<1x8x8xf32>
    %95 = vector.shape_cast %72 : vector<8x8xf32> to vector<1x8x8xf32>
    %96 = vector.shape_cast %90 : vector<8x8xf32> to vector<1x8x8xf32>
    %97 = tpu.concatenate %93, %94, %95, %96 in 0 : vector<1x8x8xf32>, vector<1x8x8xf32>, vector<1x8x8xf32>, vector<1x8x8xf32> -> vector<4x8x8xf32>
    %c0_29 = arith.constant 0 : index
    %c0_30 = arith.constant 0 : index
    %c0_31 = arith.constant 0 : index
    %c0_32 = arith.constant 0 : index
    %98 = vector.load %arg8[%c0_29, %c0_30, %c0_31, %c0_32] : memref<1x4x8x8xf32, #tpu.memory_space<vmem>>, vector<1x4x8x8xf32>
    %99 = vector.shape_cast %98 : vector<1x4x8x8xf32> to vector<4x8x8xf32>
    %100 = vector.shape_cast %97 : vector<4x8x8xf32> to vector<1x4x8x8xf32>
    tpu.vector_store %arg8[%c0_29, %c0_30, %c0_31, %c0_32], %100 {strides = array<i32>} : memref<1x4x8x8xf32, #tpu.memory_space<vmem>>, vector<1x4x8x8xf32>,
    %101 = tpu.concatenate %38, %56, %74, %92 in 1 : vector<8x128xf32>, vector<8x128xf32>, vector<8x128xf32>, vector<8x128xf32> -> vector<8x512xf32>
    %102 = arith.truncf %101 : vector<8x512xf32> to vector<8x512xbf16>
    %c0_33 = arith.constant 0 : index
    %c3200 = arith.constant 3200 : index
    %103 = vector.load %arg5[%c0_33, %c3200] : memref<64x4352xbf16, #tpu.memory_space<vmem>>, vector<64x512xbf16>
    %cst_34 = arith.constant dense<0.000000e+00> : vector<8x64xf32>
    %104 = tpu.matmul %102, %103, %cst_34 {dimension_numbers = #tpu.dot_dimension_numbers<[1], [1], [0], [0], [0, 0, 1, 0], [], []>} : vector<8x512xbf16>, vector<64x512xbf16>, vector<8x64xf32> -> vector<8x64xf32>
    %c3 = arith.constant 3 : index
    %c0_35 = arith.constant 0 : index
    %105 = vector.load %arg6[%c3, %c0_35] : memref<13x1536xf32, #tpu.memory_space<vmem>>, vector<1x64xf32>
    %106 = vector.broadcast %105 : vector<1x64xf32> to vector<8x64xf32>
    %107 = arith.addf %104, %106 : vector<8x64xf32>
    %108 = arith.addf %1, %107 : vector<8x64xf32>
    %cst_36 = arith.constant dense<0.000000e+00> : vector<8xf32>
    %109 = vector.multi_reduction <add>, %108, %cst_36 [1] : vector<8x64xf32> to vector<8xf32>
    %110 = vector.shape_cast %109 : vector<8xf32> to vector<8x1xf32>
    %cst_37 = arith.constant 6.400000e+01 : f32
    %111 = vector.broadcast %cst_37 : f32 to vector<8x1xf32>
    %112 = arith.divf %110, %111 : vector<8x1xf32>
    %113 = vector.broadcast %112 : vector<8x1xf32> to vector<8x64xf32>
    %114 = arith.subf %108, %113 : vector<8x64xf32>
    %115 = arith.mulf %114, %114 : vector<8x64xf32>
    %cst_38 = arith.constant dense<0.000000e+00> : vector<8xf32>
    %116 = vector.multi_reduction <add>, %115, %cst_38 [1] : vector<8x64xf32> to vector<8xf32>
    %117 = vector.shape_cast %116 : vector<8xf32> to vector<8x1xf32>
    %cst_39 = arith.constant 6.400000e+01 : f32
    %118 = vector.broadcast %cst_39 : f32 to vector<8x1xf32>
    %119 = arith.divf %117, %118 : vector<8x1xf32>
    %cst_40 = arith.constant 9.99999996E-13 : f32
    %120 = vector.broadcast %cst_40 : f32 to vector<8x1xf32>
    %121 = arith.addf %119, %120 : vector<8x1xf32>
    %122 = math.rsqrt %121 : vector<8x1xf32>
    %123 = vector.broadcast %122 : vector<8x1xf32> to vector<8x64xf32>
    %124 = arith.mulf %114, %123 : vector<8x64xf32>
    %c4 = arith.constant 4 : index
    %c0_41 = arith.constant 0 : index
    %125 = vector.load %arg6[%c4, %c0_41] : memref<13x1536xf32, #tpu.memory_space<vmem>>, vector<1x64xf32>
    %126 = vector.broadcast %125 : vector<1x64xf32> to vector<8x64xf32>
    %127 = arith.mulf %124, %126 : vector<8x64xf32>
    %c5 = arith.constant 5 : index
    %c0_42 = arith.constant 0 : index
    %128 = vector.load %arg6[%c5, %c0_42] : memref<13x1536xf32, #tpu.memory_space<vmem>>, vector<1x64xf32>
    %129 = vector.broadcast %128 : vector<1x64xf32> to vector<8x64xf32>
    %130 = arith.addf %127, %129 : vector<8x64xf32>
    %131 = arith.truncf %130 : vector<8x64xf32> to vector<8x64xbf16>
    %c0_43 = arith.constant 0 : index
    %c1536 = arith.constant 1536 : index
    %132 = vector.load %arg5[%c0_43, %c1536] : memref<64x4352xbf16, #tpu.memory_space<vmem>>, vector<64x512xbf16>
    %cst_44 = arith.constant dense<0.000000e+00> : vector<8x512xf32>
    %133 = tpu.matmul %131, %132, %cst_44 {dimension_numbers = #tpu.dot_dimension_numbers<[1], [0], [0], [1], [0, 0, 1, 1], [], []>} : vector<8x64xbf16>, vector<64x512xbf16>, vector<8x512xf32> -> vector<8x512xf32>
    %c1 = arith.constant 1 : index
    %c0_45 = arith.constant 0 : index
    %134 = vector.load %arg6[%c1, %c0_45] : memref<13x1536xf32, #tpu.memory_space<vmem>>, vector<1x512xf32>
    %135 = vector.broadcast %134 : vector<1x512xf32> to vector<8x512xf32>
    %136 = arith.addf %133, %135 : vector<8x512xf32>
    %137 = arith.truncf %2 : vector<8x64xf32> to vector<8x64xbf16>
    %c0_46 = arith.constant 0 : index
    %c2048 = arith.constant 2048 : index
    %138 = vector.load %arg5[%c0_46, %c2048] : memref<64x4352xbf16, #tpu.memory_space<vmem>>, vector<64x1024xbf16>
    %cst_47 = arith.constant dense<0.000000e+00> : vector<8x1024xf32>
    %139 = tpu.matmul %137, %138, %cst_47 {dimension_numbers = #tpu.dot_dimension_numbers<[1], [0], [0], [1], [0, 0, 1, 1], [], []>} : vector<8x64xbf16>, vector<64x1024xbf16>, vector<8x1024xf32> -> vector<8x1024xf32>
    %c2 = arith.constant 2 : index
    %c0_48 = arith.constant 0 : index
    %140 = vector.load %arg6[%c2, %c0_48] : memref<13x1536xf32, #tpu.memory_space<vmem>>, vector<1x1024xf32>
    %141 = vector.broadcast %140 : vector<1x1024xf32> to vector<8x1024xf32>
    %142 = arith.addf %139, %141 : vector<8x1024xf32>
    %143 = arith.truncf %136 : vector<8x512xf32> to vector<8x512xbf16>
    %144 = arith.truncf %142 : vector<8x1024xf32> to vector<8x1024xbf16>
    %c0_i32_49 = arith.constant 0 : i32
    %145 = arith.addi %0, %c0_i32_49 : i32
    %146 = arith.index_cast %145 : i32 to index
    %c0_50 = arith.constant 0 : index
    %147 = vector.load %arg4[%146, %c0_50] : memref<2x8xi32, #tpu.memory_space<vmem>>, vector<1x8xi32>
    %c0_i32_51 = arith.constant 0 : i32
    %148 = vector.broadcast %c0_i32_51 : i32 to vector<1x8xi32>
    %149 = arith.cmpi ne, %147, %148 : vector<1x8xi32>
    %150 = vector.shape_cast %149 : vector<1x8xi1> to vector<1x8xi1>
    %151 = vector.broadcast %150 : vector<1x8xi1> to vector<8x8xi1>
    %152 = vector.extract_strided_slice %143 {offsets = [0, 0], sizes = [8, 128], strides = [1, 1]} : vector<8x512xbf16> to vector<8x128xbf16>
    %153 = vector.extract_strided_slice %144 {offsets = [0, 0], sizes = [8, 128], strides = [1, 1]} : vector<8x1024xbf16> to vector<8x128xbf16>
    %154 = vector.extract_strided_slice %144 {offsets = [0, 512], sizes = [8, 128], strides = [1, 1]} : vector<8x1024xbf16> to vector<8x128xbf16>
    %cst_52 = arith.constant dense<0.000000e+00> : vector<8x8xf32>
    %155 = tpu.matmul %152, %153, %cst_52 {dimension_numbers = #tpu.dot_dimension_numbers<[1], [1], [0], [0], [0, 0, 1, 0], [], []>} : vector<8x128xbf16>, vector<8x128xbf16>, vector<8x8xf32> -> vector<8x8xf32>
    %cst_53 = arith.constant -1.000000e+09 : f32
    %156 = vector.broadcast %cst_53 : f32 to vector<8x8xf32>
    %157 = arith.select %151, %156, %155 : vector<8x8xi1>, vector<8x8xf32>
    %cst_54 = arith.constant dense<0xFF800000> : vector<8xf32>
    %158 = vector.multi_reduction <maximumf>, %157, %cst_54 [1] : vector<8x8xf32> to vector<8xf32>
    %159 = vector.shape_cast %158 : vector<8xf32> to vector<8x1xf32>
    %160 = vector.broadcast %159 : vector<8x1xf32> to vector<8x8xf32>
    %161 = arith.subf %157, %160 : vector<8x8xf32>
    %162 = math.exp %161 : vector<8x8xf32>
    %cst_55 = arith.constant dense<0.000000e+00> : vector<8xf32>
    %163 = vector.multi_reduction <add>, %162, %cst_55 [1] : vector<8x8xf32> to vector<8xf32>
    %164 = vector.shape_cast %163 : vector<8xf32> to vector<8x1xf32>
    %165 = tpu.reciprocal %164 {approx = true} : vector<8x1xf32> -> vector<8x1xf32>
    %166 = vector.broadcast %165 : vector<8x1xf32> to vector<8x8xf32>
    %167 = arith.mulf %162, %166 : vector<8x8xf32>
    %168 = arith.truncf %167 : vector<8x8xf32> to vector<8x8xbf16>
    %cst_56 = arith.constant dense<0.000000e+00> : vector<8x128xf32>
    %169 = tpu.matmul %168, %154, %cst_56 {dimension_numbers = #tpu.dot_dimension_numbers<[1], [0], [0], [1], [0, 0, 1, 1], [], []>} : vector<8x8xbf16>, vector<8x128xbf16>, vector<8x128xf32> -> vector<8x128xf32>
    %170 = vector.extract_strided_slice %143 {offsets = [0, 128], sizes = [8, 128], strides = [1, 1]} : vector<8x512xbf16> to vector<8x128xbf16>
    %171 = vector.extract_strided_slice %144 {offsets = [0, 128], sizes = [8, 128], strides = [1, 1]} : vector<8x1024xbf16> to vector<8x128xbf16>
    %172 = vector.extract_strided_slice %144 {offsets = [0, 640], sizes = [8, 128], strides = [1, 1]} : vector<8x1024xbf16> to vector<8x128xbf16>
    %cst_57 = arith.constant dense<0.000000e+00> : vector<8x8xf32>
    %173 = tpu.matmul %170, %171, %cst_57 {dimension_numbers = #tpu.dot_dimension_numbers<[1], [1], [0], [0], [0, 0, 1, 0], [], []>} : vector<8x128xbf16>, vector<8x128xbf16>, vector<8x8xf32> -> vector<8x8xf32>
    %cst_58 = arith.constant -1.000000e+09 : f32
    %174 = vector.broadcast %cst_58 : f32 to vector<8x8xf32>
    %175 = arith.select %151, %174, %173 : vector<8x8xi1>, vector<8x8xf32>
    %cst_59 = arith.constant dense<0xFF800000> : vector<8xf32>
    %176 = vector.multi_reduction <maximumf>, %175, %cst_59 [1] : vector<8x8xf32> to vector<8xf32>
    %177 = vector.shape_cast %176 : vector<8xf32> to vector<8x1xf32>
    %178 = vector.broadcast %177 : vector<8x1xf32> to vector<8x8xf32>
    %179 = arith.subf %175, %178 : vector<8x8xf32>
    %180 = math.exp %179 : vector<8x8xf32>
    %cst_60 = arith.constant dense<0.000000e+00> : vector<8xf32>
    %181 = vector.multi_reduction <add>, %180, %cst_60 [1] : vector<8x8xf32> to vector<8xf32>
    %182 = vector.shape_cast %181 : vector<8xf32> to vector<8x1xf32>
    %183 = tpu.reciprocal %182 {approx = true} : vector<8x1xf32> -> vector<8x1xf32>
    %184 = vector.broadcast %183 : vector<8x1xf32> to vector<8x8xf32>
    %185 = arith.mulf %180, %184 : vector<8x8xf32>
    %186 = arith.truncf %185 : vector<8x8xf32> to vector<8x8xbf16>
    %cst_61 = arith.constant dense<0.000000e+00> : vector<8x128xf32>
    %187 = tpu.matmul %186, %172, %cst_61 {dimension_numbers = #tpu.dot_dimension_numbers<[1], [0], [0], [1], [0, 0, 1, 1], [], []>} : vector<8x8xbf16>, vector<8x128xbf16>, vector<8x128xf32> -> vector<8x128xf32>
    %188 = vector.extract_strided_slice %143 {offsets = [0, 256], sizes = [8, 128], strides = [1, 1]} : vector<8x512xbf16> to vector<8x128xbf16>
    %189 = vector.extract_strided_slice %144 {offsets = [0, 256], sizes = [8, 128], strides = [1, 1]} : vector<8x1024xbf16> to vector<8x128xbf16>
    %190 = vector.extract_strided_slice %144 {offsets = [0, 768], sizes = [8, 128], strides = [1, 1]} : vector<8x1024xbf16> to vector<8x128xbf16>
    %cst_62 = arith.constant dense<0.000000e+00> : vector<8x8xf32>
    %191 = tpu.matmul %188, %189, %cst_62 {dimension_numbers = #tpu.dot_dimension_numbers<[1], [1], [0], [0], [0, 0, 1, 0], [], []>} : vector<8x128xbf16>, vector<8x128xbf16>, vector<8x8xf32> -> vector<8x8xf32>
    %cst_63 = arith.constant -1.000000e+09 : f32
    %192 = vector.broadcast %cst_63 : f32 to vector<8x8xf32>
    %193 = arith.select %151, %192, %191 : vector<8x8xi1>, vector<8x8xf32>
    %cst_64 = arith.constant dense<0xFF800000> : vector<8xf32>
    %194 = vector.multi_reduction <maximumf>, %193, %cst_64 [1] : vector<8x8xf32> to vector<8xf32>
    %195 = vector.shape_cast %194 : vector<8xf32> to vector<8x1xf32>
    %196 = vector.broadcast %195 : vector<8x1xf32> to vector<8x8xf32>
    %197 = arith.subf %193, %196 : vector<8x8xf32>
    %198 = math.exp %197 : vector<8x8xf32>
    %cst_65 = arith.constant dense<0.000000e+00> : vector<8xf32>
    %199 = vector.multi_reduction <add>, %198, %cst_65 [1] : vector<8x8xf32> to vector<8xf32>
    %200 = vector.shape_cast %199 : vector<8xf32> to vector<8x1xf32>
    %201 = tpu.reciprocal %200 {approx = true} : vector<8x1xf32> -> vector<8x1xf32>
    %202 = vector.broadcast %201 : vector<8x1xf32> to vector<8x8xf32>
    %203 = arith.mulf %198, %202 : vector<8x8xf32>
    %204 = arith.truncf %203 : vector<8x8xf32> to vector<8x8xbf16>
    %cst_66 = arith.constant dense<0.000000e+00> : vector<8x128xf32>
    %205 = tpu.matmul %204, %190, %cst_66 {dimension_numbers = #tpu.dot_dimension_numbers<[1], [0], [0], [1], [0, 0, 1, 1], [], []>} : vector<8x8xbf16>, vector<8x128xbf16>, vector<8x128xf32> -> vector<8x128xf32>
    %206 = vector.extract_strided_slice %143 {offsets = [0, 384], sizes = [8, 128], strides = [1, 1]} : vector<8x512xbf16> to vector<8x128xbf16>
    %207 = vector.extract_strided_slice %144 {offsets = [0, 384], sizes = [8, 128], strides = [1, 1]} : vector<8x1024xbf16> to vector<8x128xbf16>
    %208 = vector.extract_strided_slice %144 {offsets = [0, 896], sizes = [8, 128], strides = [1, 1]} : vector<8x1024xbf16> to vector<8x128xbf16>
    %cst_67 = arith.constant dense<0.000000e+00> : vector<8x8xf32>
    %209 = tpu.matmul %206, %207, %cst_67 {dimension_numbers = #tpu.dot_dimension_numbers<[1], [1], [0], [0], [0, 0, 1, 0], [], []>} : vector<8x128xbf16>, vector<8x128xbf16>, vector<8x8xf32> -> vector<8x8xf32>
    %cst_68 = arith.constant -1.000000e+09 : f32
    %210 = vector.broadcast %cst_68 : f32 to vector<8x8xf32>
    %211 = arith.select %151, %210, %209 : vector<8x8xi1>, vector<8x8xf32>
    %cst_69 = arith.constant dense<0xFF800000> : vector<8xf32>
    %212 = vector.multi_reduction <maximumf>, %211, %cst_69 [1] : vector<8x8xf32> to vector<8xf32>
    %213 = vector.shape_cast %212 : vector<8xf32> to vector<8x1xf32>
    %214 = vector.broadcast %213 : vector<8x1xf32> to vector<8x8xf32>
    %215 = arith.subf %211, %214 : vector<8x8xf32>
    %216 = math.exp %215 : vector<8x8xf32>
    %cst_70 = arith.constant dense<0.000000e+00> : vector<8xf32>
    %217 = vector.multi_reduction <add>, %216, %cst_70 [1] : vector<8x8xf32> to vector<8xf32>
    %218 = vector.shape_cast %217 : vector<8xf32> to vector<8x1xf32>
    %219 = tpu.reciprocal %218 {approx = true} : vector<8x1xf32> -> vector<8x1xf32>
    %220 = vector.broadcast %219 : vector<8x1xf32> to vector<8x8xf32>
    %221 = arith.mulf %216, %220 : vector<8x8xf32>
    %222 = arith.truncf %221 : vector<8x8xf32> to vector<8x8xbf16>
    %cst_71 = arith.constant dense<0.000000e+00> : vector<8x128xf32>
    %223 = tpu.matmul %222, %208, %cst_71 {dimension_numbers = #tpu.dot_dimension_numbers<[1], [0], [0], [1], [0, 0, 1, 1], [], []>} : vector<8x8xbf16>, vector<8x128xbf16>, vector<8x128xf32> -> vector<8x128xf32>
    %224 = vector.shape_cast %167 : vector<8x8xf32> to vector<1x8x8xf32>
    %225 = vector.shape_cast %185 : vector<8x8xf32> to vector<1x8x8xf32>
    %226 = vector.shape_cast %203 : vector<8x8xf32> to vector<1x8x8xf32>
    %227 = vector.shape_cast %221 : vector<8x8xf32> to vector<1x8x8xf32>
    %228 = tpu.concatenate %224, %225, %226, %227 in 0 : vector<1x8x8xf32>, vector<1x8x8xf32>, vector<1x8x8xf32>, vector<1x8x8xf32> -> vector<4x8x8xf32>
    %c0_72 = arith.constant 0 : index
    %c0_73 = arith.constant 0 : index
    %c0_74 = arith.constant 0 : index
    %c0_75 = arith.constant 0 : index
    %229 = vector.load %arg9[%c0_72, %c0_73, %c0_74, %c0_75] : memref<1x4x8x8xf32, #tpu.memory_space<vmem>>, vector<1x4x8x8xf32>
    %230 = vector.shape_cast %229 : vector<1x4x8x8xf32> to vector<4x8x8xf32>
    %231 = vector.shape_cast %228 : vector<4x8x8xf32> to vector<1x4x8x8xf32>
    tpu.vector_store %arg9[%c0_72, %c0_73, %c0_74, %c0_75], %231 {strides = array<i32>} : memref<1x4x8x8xf32, #tpu.memory_space<vmem>>, vector<1x4x8x8xf32>,
    %232 = tpu.concatenate %169, %187, %205, %223 in 1 : vector<8x128xf32>, vector<8x128xf32>, vector<8x128xf32>, vector<8x128xf32> -> vector<8x512xf32>
    %233 = arith.truncf %232 : vector<8x512xf32> to vector<8x512xbf16>
    %c0_76 = arith.constant 0 : index
    %c3712 = arith.constant 3712 : index
    %234 = vector.load %arg5[%c0_76, %c3712] : memref<64x4352xbf16, #tpu.memory_space<vmem>>, vector<64x512xbf16>
    %cst_77 = arith.constant dense<0.000000e+00> : vector<8x64xf32>
    %235 = tpu.matmul %233, %234, %cst_77 {dimension_numbers = #tpu.dot_dimension_numbers<[1], [1], [0], [0], [0, 0, 1, 0], [], []>} : vector<8x512xbf16>, vector<64x512xbf16>, vector<8x64xf32> -> vector<8x64xf32>
    %c6 = arith.constant 6 : index
    %c0_78 = arith.constant 0 : index
    %236 = vector.load %arg6[%c6, %c0_78] : memref<13x1536xf32, #tpu.memory_space<vmem>>, vector<1x64xf32>
    %237 = vector.broadcast %236 : vector<1x64xf32> to vector<8x64xf32>
    %238 = arith.addf %235, %237 : vector<8x64xf32>
    %239 = arith.addf %130, %238 : vector<8x64xf32>
    %cst_79 = arith.constant dense<0.000000e+00> : vector<8xf32>
    %240 = vector.multi_reduction <add>, %239, %cst_79 [1] : vector<8x64xf32> to vector<8xf32>
    %241 = vector.shape_cast %240 : vector<8xf32> to vector<8x1xf32>
    %cst_80 = arith.constant 6.400000e+01 : f32
    %242 = vector.broadcast %cst_80 : f32 to vector<8x1xf32>
    %243 = arith.divf %241, %242 : vector<8x1xf32>
    %244 = vector.broadcast %243 : vector<8x1xf32> to vector<8x64xf32>
    %245 = arith.subf %239, %244 : vector<8x64xf32>
    %246 = arith.mulf %245, %245 : vector<8x64xf32>
    %cst_81 = arith.constant dense<0.000000e+00> : vector<8xf32>
    %247 = vector.multi_reduction <add>, %246, %cst_81 [1] : vector<8x64xf32> to vector<8xf32>
    %248 = vector.shape_cast %247 : vector<8xf32> to vector<8x1xf32>
    %cst_82 = arith.constant 6.400000e+01 : f32
    %249 = vector.broadcast %cst_82 : f32 to vector<8x1xf32>
    %250 = arith.divf %248, %249 : vector<8x1xf32>
    %cst_83 = arith.constant 9.99999996E-13 : f32
    %251 = vector.broadcast %cst_83 : f32 to vector<8x1xf32>
    %252 = arith.addf %250, %251 : vector<8x1xf32>
    %253 = math.rsqrt %252 : vector<8x1xf32>
    %254 = vector.broadcast %253 : vector<8x1xf32> to vector<8x64xf32>
    %255 = arith.mulf %245, %254 : vector<8x64xf32>
    %c7 = arith.constant 7 : index
    %c0_84 = arith.constant 0 : index
    %256 = vector.load %arg6[%c7, %c0_84] : memref<13x1536xf32, #tpu.memory_space<vmem>>, vector<1x64xf32>
    %257 = vector.broadcast %256 : vector<1x64xf32> to vector<8x64xf32>
    %258 = arith.mulf %255, %257 : vector<8x64xf32>
    %c8 = arith.constant 8 : index
    %c0_85 = arith.constant 0 : index
    %259 = vector.load %arg6[%c8, %c0_85] : memref<13x1536xf32, #tpu.memory_space<vmem>>, vector<1x64xf32>
    %260 = vector.broadcast %259 : vector<1x64xf32> to vector<8x64xf32>
    %261 = arith.addf %258, %260 : vector<8x64xf32>
    %262 = arith.truncf %261 : vector<8x64xf32> to vector<8x64xbf16>
    %c0_86 = arith.constant 0 : index
    %c3072 = arith.constant 3072 : index
    %263 = vector.load %arg5[%c0_86, %c3072] : memref<64x4352xbf16, #tpu.memory_space<vmem>>, vector<64x128xbf16>
    %cst_87 = arith.constant dense<0.000000e+00> : vector<8x128xf32>
    %264 = tpu.matmul %262, %263, %cst_87 {dimension_numbers = #tpu.dot_dimension_numbers<[1], [0], [0], [1], [0, 0, 1, 1], [], []>} : vector<8x64xbf16>, vector<64x128xbf16>, vector<8x128xf32> -> vector<8x128xf32>
    %c9 = arith.constant 9 : index
    %c0_88 = arith.constant 0 : index
    %265 = vector.load %arg6[%c9, %c0_88] : memref<13x1536xf32, #tpu.memory_space<vmem>>, vector<1x128xf32>
    %266 = vector.broadcast %265 : vector<1x128xf32> to vector<8x128xf32>
    %267 = arith.addf %264, %266 : vector<8x128xf32>
    %cst_89 = arith.constant 5.000000e-01 : f32
    %268 = vector.broadcast %cst_89 : f32 to vector<8x128xf32>
    %269 = arith.mulf %268, %267 : vector<8x128xf32>
    %cst_90 = arith.constant 4.471500e-02 : f32
    %270 = vector.broadcast %cst_90 : f32 to vector<8x128xf32>
    %271 = arith.mulf %270, %267 : vector<8x128xf32>
    %272 = arith.mulf %271, %267 : vector<8x128xf32>
    %273 = arith.mulf %272, %267 : vector<8x128xf32>
    %274 = arith.addf %267, %273 : vector<8x128xf32>
    %cst_91 = arith.constant 0.797884583 : f32
    %275 = vector.broadcast %cst_91 : f32 to vector<8x128xf32>
    %276 = arith.mulf %275, %274 : vector<8x128xf32>
    %277 = math.tanh %276 : vector<8x128xf32>
    %cst_92 = arith.constant 1.000000e+00 : f32
    %278 = vector.broadcast %cst_92 : f32 to vector<8x128xf32>
    %279 = arith.addf %278, %277 : vector<8x128xf32>
    %280 = arith.mulf %269, %279 : vector<8x128xf32>
    %281 = arith.truncf %280 : vector<8x128xf32> to vector<8x128xbf16>
    %c0_93 = arith.constant 0 : index
    %c4224 = arith.constant 4224 : index
    %282 = vector.load %arg5[%c0_93, %c4224] : memref<64x4352xbf16, #tpu.memory_space<vmem>>, vector<64x128xbf16>
    %cst_94 = arith.constant dense<0.000000e+00> : vector<8x64xf32>
    %283 = tpu.matmul %281, %282, %cst_94 {dimension_numbers = #tpu.dot_dimension_numbers<[1], [1], [0], [0], [0, 0, 1, 0], [], []>} : vector<8x128xbf16>, vector<64x128xbf16>, vector<8x64xf32> -> vector<8x64xf32>
    %c10 = arith.constant 10 : index
    %c0_95 = arith.constant 0 : index
    %284 = vector.load %arg6[%c10, %c0_95] : memref<13x1536xf32, #tpu.memory_space<vmem>>, vector<1x64xf32>
    %285 = vector.broadcast %284 : vector<1x64xf32> to vector<8x64xf32>
    %286 = arith.addf %283, %285 : vector<8x64xf32>
    %287 = arith.addf %261, %286 : vector<8x64xf32>
    %cst_96 = arith.constant dense<0.000000e+00> : vector<8xf32>
    %288 = vector.multi_reduction <add>, %287, %cst_96 [1] : vector<8x64xf32> to vector<8xf32>
    %289 = vector.shape_cast %288 : vector<8xf32> to vector<8x1xf32>
    %cst_97 = arith.constant 6.400000e+01 : f32
    %290 = vector.broadcast %cst_97 : f32 to vector<8x1xf32>
    %291 = arith.divf %289, %290 : vector<8x1xf32>
    %292 = vector.broadcast %291 : vector<8x1xf32> to vector<8x64xf32>
    %293 = arith.subf %287, %292 : vector<8x64xf32>
    %294 = arith.mulf %293, %293 : vector<8x64xf32>
    %cst_98 = arith.constant dense<0.000000e+00> : vector<8xf32>
    %295 = vector.multi_reduction <add>, %294, %cst_98 [1] : vector<8x64xf32> to vector<8xf32>
    %296 = vector.shape_cast %295 : vector<8xf32> to vector<8x1xf32>
    %cst_99 = arith.constant 6.400000e+01 : f32
    %297 = vector.broadcast %cst_99 : f32 to vector<8x1xf32>
    %298 = arith.divf %296, %297 : vector<8x1xf32>
    %cst_100 = arith.constant 9.99999996E-13 : f32
    %299 = vector.broadcast %cst_100 : f32 to vector<8x1xf32>
    %300 = arith.addf %298, %299 : vector<8x1xf32>
    %301 = math.rsqrt %300 : vector<8x1xf32>
    %302 = vector.broadcast %301 : vector<8x1xf32> to vector<8x64xf32>
    %303 = arith.mulf %293, %302 : vector<8x64xf32>
    %c11 = arith.constant 11 : index
    %c0_101 = arith.constant 0 : index
    %304 = vector.load %arg6[%c11, %c0_101] : memref<13x1536xf32, #tpu.memory_space<vmem>>, vector<1x64xf32>
    %305 = vector.broadcast %304 : vector<1x64xf32> to vector<8x64xf32>
    %306 = arith.mulf %303, %305 : vector<8x64xf32>
    %c12 = arith.constant 12 : index
    %c0_102 = arith.constant 0 : index
    %307 = vector.load %arg6[%c12, %c0_102] : memref<13x1536xf32, #tpu.memory_space<vmem>>, vector<1x64xf32>
    %308 = vector.broadcast %307 : vector<1x64xf32> to vector<8x64xf32>
    %309 = arith.addf %306, %308 : vector<8x64xf32>
    %c0_103 = arith.constant 0 : index
    %c0_104 = arith.constant 0 : index
    %310 = vector.load %arg7[%c0_103, %c0_104] : memref<8x64xf32, #tpu.memory_space<vmem>>, vector<8x64xf32>
    tpu.vector_store %arg7[%c0_103, %c0_104], %309 {strides = array<i32>} : memref<8x64xf32, #tpu.memory_space<vmem>>, vector<8x64xf32>,
    return
  }
  func.func @transform_0(%arg0: i32) -> (i32, i32) {
    %c0_i32 = arith.constant 0 : i32
    %c0_i32_0 = arith.constant 0 : i32
    return %arg0, %c0_i32 : i32, i32
  }
  func.func @transform_1(%arg0: i32) -> (i32, i32) {
    %c0_i32 = arith.constant 0 : i32
    %c0_i32_0 = arith.constant 0 : i32
    return %arg0, %c0_i32 : i32, i32
  }
  func.func @transform_2(%arg0: i32) -> (i32, i32) {
    %c0_i32 = arith.constant 0 : i32
    %c0_i32_0 = arith.constant 0 : i32
    %c0_i32_1 = arith.constant 0 : i32
    return %c0_i32, %c0_i32_0 : i32, i32
  }
  func.func @transform_3(%arg0: i32) -> (i32, i32) {
    %c0_i32 = arith.constant 0 : i32
    %c0_i32_0 = arith.constant 0 : i32
    %c0_i32_1 = arith.constant 0 : i32
    return %c0_i32, %c0_i32_0 : i32, i32
  }
  func.func @transform_4(%arg0: i32) -> (i32, i32) {
    %c0_i32 = arith.constant 0 : i32
    %c0_i32_0 = arith.constant 0 : i32
    %c0_i32_1 = arith.constant 0 : i32
    return %c0_i32, %c0_i32_0 : i32, i32
  }
  func.func @transform_5(%arg0: i32) -> (i32, i32) {
    %c0_i32 = arith.constant 0 : i32
    %c0_i32_0 = arith.constant 0 : i32
    %c0_i32_1 = arith.constant 0 : i32
    return %c0_i32, %c0_i32_0 : i32, i32
  }
  func.func @transform_6(%arg0: i32) -> (i32, i32) {
    %c0_i32 = arith.constant 0 : i32
    %c0_i32_0 = arith.constant 0 : i32
    return %arg0, %c0_i32 : i32, i32
  }
  func.func @transform_7(%arg0: i32) -> (i32, i32, i32, i32) {
    %c0_i32 = arith.constant 0 : i32
    %c0_i32_0 = arith.constant 0 : i32
    %c0_i32_1 = arith.constant 0 : i32
    %c0_i32_2 = arith.constant 0 : i32
    return %arg0, %c0_i32, %c0_i32_0, %c0_i32_1 : i32, i32, i32, i32
  }
  func.func @transform_8(%arg0: i32) -> (i32, i32, i32, i32) {
    %c0_i32 = arith.constant 0 : i32
    %c0_i32_0 = arith.constant 0 : i32
    %c0_i32_1 = arith.constant 0 : i32
    %c0_i32_2 = arith.constant 0 : i32
    return %arg0, %c0_i32, %c0_i32_0, %c0_i32_1 : i32, i32, i32, i32
  }
}

</mosaic_0001>

<llo_original>
// kernel: decoder_forward_pallas.3
$region0: #{decoder_forward_pallas.3}
  #allocation0 [shape = 'u32[]', space=smem, size = 0x4, offset = 0x4, fixed_abs, tag = 'smem constant byte address 0x4 - core index']
  #allocation1 [shape = 'u32[72,128]{1,0:T(1,128)}', space=vmem, size = 0x9000, scoped, tag = 'internal scratch']
  %s0 = inlined_call_operand.vmem [shape: f32[16,64], index: 0, kind: input, shape index: {}]
  %s1 = inlined_call_operand.vmem [shape: f32[16,64], index: 1, kind: input, shape index: {}]
  %s2 = inlined_call_operand.vmem [shape: s32[2,8], index: 2, kind: input, shape index: {}]
  %s3 = inlined_call_operand.vmem [shape: s32[2,8], index: 3, kind: input, shape index: {}]
  %s4 = inlined_call_operand.hbm [shape: bf16[64,4352], index: 4, kind: input, shape index: {}]
  %s5 = inlined_call_operand.hbm [shape: f32[13,1536], index: 5, kind: input, shape index: {}]
  %s6 = inlined_call_operand.hbm [shape: f32[16,64], index: 6, kind: output, shape index: {0}]
  %s7 = inlined_call_operand.hbm [shape: f32[2,4,8,8], index: 7, kind: output, shape index: {1}]
  %s8 = inlined_call_operand.hbm [shape: f32[2,4,8,8], index: 8, kind: output, shape index: {2}]
  %9 = xla_tuple %s6, %s7, %s8
  %s10 = sld [smem:[#allocation0]]
  $region81: #{decoder_forward_pallas.3} parent=0
    _
  %s12 = ssub.s32 1, %s10
  %s13 = scalar_select 0, %s12, %s10
  $region1: #{decoder_forward_pallas.3} parent=0
    #allocation2 [shape = 'u8[557056]{0}', space=vmem, size = 0x88000, scoped, tag = 'input window, operand 4, single buffered']
    #allocation3 [shape = 's32[2]{0}', space=sflag, size = 0x8, scoped, tag = 'scoped memory for decoder_forward_pallas.3']
    #allocation4 [shape = 's32[2]{0}', space=sflag, size = 0x8, scoped, tag = 'scoped memory for decoder_forward_pallas.3']
    #allocation5 [shape = 'u8[98304]{0}', space=vmem, size = 0x18000, scoped, tag = 'input window, operand 5, single buffered']
    #allocation6 [shape = 's32[1]{0}', space=sflag, size = 0x4, scoped, tag = 'scoped memory for decoder_forward_pallas.3']
    #allocation7 [shape = 'u8[8192]{0}', space=vmem, size = 0x2000, scoped, tag = 'output window, operand 0']
    #allocation8 [shape = 'u8[32768]{0}', space=vmem, size = 0x8000, scoped, tag = 'output window, operand 1']
    #allocation9 [shape = 's32[2]{0}', space=sflag, size = 0x8, scoped, tag = 'scoped memory for decoder_forward_pallas.3']
    #allocation10 [shape = 'u8[32768]{0}', space=vmem, size = 0x8000, scoped, tag = 'output window, operand 2']
    %14 = vsyncpa [#allocation3], 0
    %15 = vsyncpa [#allocation6], 0
    %16 = vsyncpa [#allocation4], 0
    %s17 = scalar_lea.sflag [#allocation4], 1
    %18 = vsyncpa %s17, 0
    %19 = vsyncpa [#allocation9], 0
    %s20 = scalar_lea.sflag [#allocation9], 1
    %21 = vsyncpa %s20, 0
    loop: start=0, step=1, limit=4
    $region2: #{decoder_forward_pallas.3} parent=1 // loop_pre_header
      _
    $region3: #{decoder_forward_pallas.3} parent=1 // loop_header
      %s23 = sphi 0, %s27
      %p24 = scmp.ge.s32.totalorder %s23, 4
      %s33 = sphi 0, %s35
      %s36 = sphi 0, %s33
      %s37 = sphi 0, %s36
      %s53 = sphi 0, %s37
      %s59 = sphi 0, %s61
      %s62 = sphi 0, %s59
      %s63 = sphi 0, %s62
      %s79 = sphi 0, %s63
      %s83 = sphi 0, %s83
      %s85 = sphi 0, %s83
      %s86 = sphi 0, %s85
      %s100 = sphi 0, %s86
      %s104 = sphi 0, %s104
      %s106 = sphi 0, %s104
      %s107 = sphi 0, %s106
      %s121 = sphi 0, %s107
      %s125 = sphi 0, %s125
      %s127 = sphi 0, %s125
      %s128 = sphi 0, %s127
      %s142 = sphi 0, %s128
      %s146 = sphi 0, %s146
      %s148 = sphi 0, %s146
      %s149 = sphi 0, %s148
      %s163 = sphi 0, %s149
      %s169 = sphi 0, %s171
      %s172 = sphi 0, %s169
      %s173 = sphi 0, %s172
      %s189 = sphi 0, %s173
      %s195 = sphi 0, %s197
      %s198 = sphi 0, %s195
      %s199 = sphi 0, %s198
      %s215 = sphi 0, %s199
      %s221 = sphi 0, %s223
      %s224 = sphi 0, %s221
      %s225 = sphi 0, %s224
      %s241 = sphi 0, %s225
    $region4: #{decoder_forward_pallas.3} parent=1 // loop_header_branch
      %26 = sbr.rel (%p24) target = $region8
    $region5: #{decoder_forward_pallas.3} parent=1 // loop_body
      %s28 = ssub.s32 %s23, 1
      %s29 = ssub.s32 %s23, 2
      %s30 = sadd.s32 %s23, 1
      %s31 = ssub.s32 %s23, %s30
      %p32 = scmp.eq.s32.totalorder %s31, 0
      %s34 = sadd.s32 %s33, 1
      %s35 = scalar_select %p32, %s33, %s34
      %p38 = pneg %p32
      %p39 = scmp.eq.s32.totalorder %s23, 1
      %p40 = por %p38, %p39
      %p41 = scmp.ne.s32.totalorder %s33, %s36
      %p42 = scmp.eq.s32.totalorder %s23, 0
      %p43 = por %p41, %p42
      %p44 = scmp.ne.s32.totalorder %s33, %s36
      %p45 = scmp.eq.s32.totalorder %s28, 1
      %p46 = por %p44, %p45
      %p47 = scmp.ne.s32.totalorder %s36, %s37
      %p48 = scmp.eq.s32.totalorder %s28, 0
      %p49 = por %p47, %p48
      %p50 = scmp.ne.s32.totalorder %s36, %s37
      %p51 = scmp.eq.s32.totalorder %s29, 1
      %p52 = por %p50, %p51
      %p54 = scmp.ne.s32.totalorder %s37, %s53
      %p55 = scmp.eq.s32.totalorder %s29, 0
      %p56 = por %p54, %p55
      %s57 = ssub.s32 %s23, %s30
      %p58 = scmp.eq.s32.totalorder %s57, 0
      %s60 = sadd.s32 %s59, 1
      %s61 = scalar_select %p58, %s59, %s60
      %p64 = pneg %p58
      %p65 = scmp.eq.s32.totalorder %s23, 1
      %p66 = por %p64, %p65
      %p67 = scmp.ne.s32.totalorder %s59, %s62
      %p68 = scmp.eq.s32.totalorder %s23, 0
      %p69 = por %p67, %p68
      %p70 = scmp.ne.s32.totalorder %s59, %s62
      %p71 = scmp.eq.s32.totalorder %s28, 1
      %p72 = por %p70, %p71
      %p73 = scmp.ne.s32.totalorder %s62, %s63
      %p74 = scmp.eq.s32.totalorder %s28, 0
      %p75 = por %p73, %p74
      %p76 = scmp.ne.s32.totalorder %s62, %s63
      %p77 = scmp.eq.s32.totalorder %s29, 1
      %p78 = por %p76, %p77
      %p80 = scmp.ne.s32.totalorder %s63, %s79
      %p81 = scmp.eq.s32.totalorder %s29, 0
      %p82 = por %p80, %p81
      %s84 = sadd.s32 %s83, 1
      %p87 = scmp.eq.s32.totalorder %s23, 1
      %p88 = scmp.ne.s32.totalorder %s83, %s85
      %p89 = scmp.eq.s32.totalorder %s23, 0
      %p90 = por %p88, %p89
      %p91 = scmp.ne.s32.totalorder %s83, %s85
      %p92 = scmp.eq.s32.totalorder %s28, 1
      %p93 = por %p91, %p92
      %p94 = scmp.ne.s32.totalorder %s85, %s86
      %p95 = scmp.eq.s32.totalorder %s28, 0
      %p96 = por %p94, %p95
      %p97 = scmp.ne.s32.totalorder %s85, %s86
      %p98 = scmp.eq.s32.totalorder %s29, 1
      %p99 = por %p97, %p98
      %p101 = scmp.ne.s32.totalorder %s86, %s100
      %p102 = scmp.eq.s32.totalorder %s29, 0
      %p103 = por %p101, %p102
      %s105 = sadd.s32 %s104, 1
      %p108 = scmp.eq.s32.totalorder %s23, 1
      %p109 = scmp.ne.s32.totalorder %s104, %s106
      %p110 = scmp.eq.s32.totalorder %s23, 0
      %p111 = por %p109, %p110
      %p112 = scmp.ne.s32.totalorder %s104, %s106
      %p113 = scmp.eq.s32.totalorder %s28, 1
      %p114 = por %p112, %p113
      %p115 = scmp.ne.s32.totalorder %s106, %s107
      %p116 = scmp.eq.s32.totalorder %s28, 0
      %p117 = por %p115, %p116
      %p118 = scmp.ne.s32.totalorder %s106, %s107
      %p119 = scmp.eq.s32.totalorder %s29, 1
      %p120 = por %p118, %p119
      %p122 = scmp.ne.s32.totalorder %s107, %s121
      %p123 = scmp.eq.s32.totalorder %s29, 0
      %p124 = por %p122, %p123
      %s126 = sadd.s32 %s125, 1
      %p129 = scmp.eq.s32.totalorder %s23, 1
      %p130 = scmp.ne.s32.totalorder %s125, %s127
      %p131 = scmp.eq.s32.totalorder %s23, 0
      %p132 = por %p130, %p131
      %p133 = scmp.ne.s32.totalorder %s125, %s127
      %p134 = scmp.eq.s32.totalorder %s28, 1
      %p135 = por %p133, %p134
      %p136 = scmp.ne.s32.totalorder %s127, %s128
      %p137 = scmp.eq.s32.totalorder %s28, 0
      %p138 = por %p136, %p137
      %p139 = scmp.ne.s32.totalorder %s127, %s128
      %p140 = scmp.eq.s32.totalorder %s29, 1
      %p141 = por %p139, %p140
      %p143 = scmp.ne.s32.totalorder %s128, %s142
      %p144 = scmp.eq.s32.totalorder %s29, 0
      %p145 = por %p143, %p144
      %s147 = sadd.s32 %s146, 1
      %p150 = scmp.eq.s32.totalorder %s23, 1
      %p151 = scmp.ne.s32.totalorder %s146, %s148
      %p152 = scmp.eq.s32.totalorder %s23, 0
      %p153 = por %p151, %p152
      %p154 = scmp.ne.s32.totalorder %s146, %s148
      %p155 = scmp.eq.s32.totalorder %s28, 1
      %p156 = por %p154, %p155
      %p157 = scmp.ne.s32.totalorder %s148, %s149
      %p158 = scmp.eq.s32.totalorder %s28, 0
      %p159 = por %p157, %p158
      %p160 = scmp.ne.s32.totalorder %s148, %s149
      %p161 = scmp.eq.s32.totalorder %s29, 1
      %p162 = por %p160, %p161
      %p164 = scmp.ne.s32.totalorder %s149, %s163
      %p165 = scmp.eq.s32.totalorder %s29, 0
      %p166 = por %p164, %p165
      %s167 = ssub.s32 %s23, %s30
      %p168 = scmp.eq.s32.totalorder %s167, 0
      %s170 = sadd.s32 %s169, 1
      %s171 = scalar_select %p168, %s169, %s170
      %p174 = pneg %p168
      %p175 = scmp.eq.s32.totalorder %s23, 1
      %p176 = por %p174, %p175
      %p177 = scmp.ne.s32.totalorder %s169, %s172
      %p178 = scmp.eq.s32.totalorder %s23, 0
      %p179 = por %p177, %p178
      %p180 = scmp.ne.s32.totalorder %s169, %s172
      %p181 = scmp.eq.s32.totalorder %s28, 1
      %p182 = por %p180, %p181
      %p183 = scmp.ne.s32.totalorder %s172, %s173
      %p184 = scmp.eq.s32.totalorder %s28, 0
      %p185 = por %p183, %p184
      %p186 = scmp.ne.s32.totalorder %s172, %s173
      %p187 = scmp.eq.s32.totalorder %s29, 1
      %p188 = por %p186, %p187
      %p190 = scmp.ne.s32.totalorder %s173, %s189
      %p191 = scmp.eq.s32.totalorder %s29, 0
      %p192 = por %p190, %p191
      %s193 = ssub.s32 %s23, %s30
      %p194 = scmp.eq.s32.totalorder %s193, 0
      %s196 = sadd.s32 %s195, 1
      %s197 = scalar_select %p194, %s195, %s196
      %p200 = pneg %p194
      %p201 = scmp.eq.s32.totalorder %s23, 1
      %p202 = por %p200, %p201
      %p203 = scmp.ne.s32.totalorder %s195, %s198
      %p204 = scmp.eq.s32.totalorder %s23, 0
      %p205 = por %p203, %p204
      %p206 = scmp.ne.s32.totalorder %s195, %s198
      %p207 = scmp.eq.s32.totalorder %s28, 1
      %p208 = por %p206, %p207
      %p209 = scmp.ne.s32.totalorder %s198, %s199
      %p210 = scmp.eq.s32.totalorder %s28, 0
      %p211 = por %p209, %p210
      %p212 = scmp.ne.s32.totalorder %s198, %s199
      %p213 = scmp.eq.s32.totalorder %s29, 1
      %p214 = por %p212, %p213
      %p216 = scmp.ne.s32.totalorder %s199, %s215
      %p217 = scmp.eq.s32.totalorder %s29, 0
      %p218 = por %p216, %p217
      %s219 = ssub.s32 %s23, %s30
      %p220 = scmp.eq.s32.totalorder %s219, 0
      %s222 = sadd.s32 %s221, 1
      %s223 = scalar_select %p220, %s221, %s222
      %p226 = pneg %p220
      %p227 = scmp.eq.s32.totalorder %s23, 1
      %p228 = por %p226, %p227
      %p229 = scmp.ne.s32.totalorder %s221, %s224
      %p230 = scmp.eq.s32.totalorder %s23, 0
      %p231 = por %p229, %p230
      %p232 = scmp.ne.s32.totalorder %s221, %s224
      %p233 = scmp.eq.s32.totalorder %s28, 1
      %p234 = por %p232, %p233
      %p235 = scmp.ne.s32.totalorder %s224, %s225
      %p236 = scmp.eq.s32.totalorder %s28, 0
      %p237 = por %p235, %p236
      %p238 = scmp.ne.s32.totalorder %s224, %s225
      %p239 = scmp.eq.s32.totalorder %s29, 1
      %p240 = por %p238, %p239
      %p242 = scmp.ne.s32.totalorder %s225, %s241
      %p243 = scmp.eq.s32.totalorder %s29, 0
      %p244 = por %p242, %p243
      %p245 = scmp.le.s32.totalorder 1, %s23
      %p246 = scmp.lt.s32.totalorder %s23, 3
      %p247 = pnand %p245, %p246
      %p248 = pneg %p247
      // Predicated region
      $region9: #{decoder_forward_pallas.3} parent=5 // pred_check
        _
      $region10: #{decoder_forward_pallas.3} parent=5 // pred_check_branch
        %250 = sbr.rel (%p247) target = $region12
      $region11: #{decoder_forward_pallas.3} parent=5 // pred_region
        %s251 = ssub.s32 %s23, 1
        // Predicated region
        $region13: #{decoder_forward_pallas.3} parent=11 // pred_check
          %p252 = pneg %p96
        $region14: #{decoder_forward_pallas.3} parent=11 // pred_check_branch
          %254 = sbr.rel (%p252) target = $region16
        $region15: #{decoder_forward_pallas.3} parent=11 // pred_region
          _
        $region16: #{decoder_forward_pallas.3} parent=11 // pred_fallthru
          _
        // Predicated region
        $region17: #{decoder_forward_pallas.3} parent=11 // pred_check
          %p255 = pneg %p117
        $region18: #{decoder_forward_pallas.3} parent=11 // pred_check_branch
          %257 = sbr.rel (%p255) target = $region20
        $region19: #{decoder_forward_pallas.3} parent=11 // pred_region
          _
        $region20: #{decoder_forward_pallas.3} parent=11 // pred_fallthru
          _
        // Predicated region
        $region21: #{decoder_forward_pallas.3} parent=11 // pred_check
          %p258 = pneg %p138
        $region22: #{decoder_forward_pallas.3} parent=11 // pred_check_branch
          %260 = sbr.rel (%p258) target = $region24
        $region23: #{decoder_forward_pallas.3} parent=11 // pred_region
          %262 = vsyncadd [#allocation3], 0
          %s263 = sshll.u32 %s4, 4
          %s264 = int_to_ptr.hbm [resolvable:$true] %s263
          %s265 = sshll.u32 [#allocation2], 4
          %s266 = int_to_ptr.vmem [resolvable:$true] %s265
          %271 = dma.hbm_to_vmem [thread:$0]  %s264, 17408, %s266, [#allocation3], 2176, 2176, 136
        $region24: #{decoder_forward_pallas.3} parent=11 // pred_fallthru
          _
        // Predicated region
        $region25: #{decoder_forward_pallas.3} parent=11 // pred_check
          %p272 = pneg %p159
        $region26: #{decoder_forward_pallas.3} parent=11 // pred_check_branch
          %274 = sbr.rel (%p272) target = $region28
        $region27: #{decoder_forward_pallas.3} parent=11 // pred_region
          %276 = vsyncadd [#allocation6], 0
          %s277 = sshll.u32 %s5, 4
          %s278 = int_to_ptr.hbm [resolvable:$true] %s277
          %s279 = sshll.u32 [#allocation5], 4
          %s280 = int_to_ptr.vmem [resolvable:$true] %s279
          %285 = dma.hbm_to_vmem [thread:$0]  %s278, 3072, %s280, [#allocation6], 1536, 1536, 96
        $region28: #{decoder_forward_pallas.3} parent=11 // pred_fallthru
          _
      $region12: #{decoder_forward_pallas.3} parent=5 // pred_fallthru
        _
      %p286 = scmp.lt.s32.totalorder %s23, 2
      // Predicated region
      $region29: #{decoder_forward_pallas.3} parent=5 // pred_check
        %p287 = pneg %p286
      $region30: #{decoder_forward_pallas.3} parent=5 // pred_check_branch
        %289 = sbr.rel (%p287) target = $region32
      $region31: #{decoder_forward_pallas.3} parent=5 // pred_region
        // Predicated region
        $region33: #{decoder_forward_pallas.3} parent=31 // pred_check
          %p290 = pneg %p43
        $region34: #{decoder_forward_pallas.3} parent=31 // pred_check_branch
          %292 = sbr.rel (%p290) target = $region36
        $region35: #{decoder_forward_pallas.3} parent=31 // pred_region
          %p293 = scmp.lt.s32.totalorder %s23, 1
          %s294 = scalar_select %p293, %s23, 1
          %s295 = smul.addr %s294, 8
          %s296 = scalar_lea.vmem %s0, %s295
        $region36: #{decoder_forward_pallas.3} parent=31 // pred_fallthru
          _
        // Predicated region
        $region37: #{decoder_forward_pallas.3} parent=31 // pred_check
          %p297 = pneg %p69
        $region38: #{decoder_forward_pallas.3} parent=31 // pred_check_branch
          %299 = sbr.rel (%p297) target = $region40
        $region39: #{decoder_forward_pallas.3} parent=31 // pred_region
          %p300 = scmp.lt.s32.totalorder %s23, 1
          %s301 = scalar_select %p300, %s23, 1
          %s302 = smul.addr %s301, 8
          %s303 = scalar_lea.vmem %s1, %s302
        $region40: #{decoder_forward_pallas.3} parent=31 // pred_fallthru
          _
      $region32: #{decoder_forward_pallas.3} parent=5 // pred_fallthru
        _
      %p304 = scmp.le.s32.totalorder 1, %s23
      %p305 = scmp.lt.s32.totalorder %s23, 3
      %p306 = pnand %p304, %p305
      %p307 = pneg %p306
      // Predicated region
      $region41: #{decoder_forward_pallas.3} parent=5 // pred_check
        _
      $region42: #{decoder_forward_pallas.3} parent=5 // pred_check_branch
        %309 = sbr.rel (%p306) target = $region44
      $region43: #{decoder_forward_pallas.3} parent=5 // pred_region
        %s310 = ssub.s32 %s23, 1
        // Predicated region
        $region45: #{decoder_forward_pallas.3} parent=43 // pred_check
          %p311 = pneg %p138
        $region46: #{decoder_forward_pallas.3} parent=43 // pred_check_branch
          %313 = sbr.rel (%p311) target = $region48
        $region47: #{decoder_forward_pallas.3} parent=43 // pred_region
          %315 = dma.done [#allocation3], 17408
        $region48: #{decoder_forward_pallas.3} parent=43 // pred_fallthru
          _
        // Predicated region
        $region49: #{decoder_forward_pallas.3} parent=43 // pred_check
          %p316 = pneg %p159
        $region50: #{decoder_forward_pallas.3} parent=43 // pred_check_branch
          %318 = sbr.rel (%p316) target = $region52
        $region51: #{decoder_forward_pallas.3} parent=43 // pred_region
          %320 = dma.done [#allocation6], 3072
        $region52: #{decoder_forward_pallas.3} parent=43 // pred_fallthru
          _
        %p321 = scmp.lt.s32.totalorder %s28, 1
        %s322 = scalar_select %p321, %s28, 1
        %s323 = smul.addr %s322, 8
        %s324 = scalar_lea.vmem %s0, %s323
        %p325 = pneg %p49
        %p326 = pneg %p46
        %p327 = scmp.lt.s32.totalorder %s28, 1
        %s328 = scalar_select %p327, %s28, 1
        %s329 = smul.addr %s328, 8
        %s330 = scalar_lea.vmem %s1, %s329
        %p331 = pneg %p75
        %p332 = pneg %p72
        %p333 = pneg %p96
        %p334 = pneg %p93
        %p335 = pneg %p117
        %p336 = pneg %p114
        %p337 = pneg %p138
        %p338 = pneg %p135
        %p339 = pneg %p159
        %p340 = pneg %p156
        %p341 = pneg %p185
        %p342 = pneg %p182
        %s343 = sand.u32 %s172, 1
        %s344 = scalar_lea.sflag [#allocation4], %s343
        %s345 = sand.u32 %s172, 1
        %s346 = smul.addr %s345, 8
        %s347 = scalar_lea.vmem [#allocation7], %s346
        %p348 = pneg %p211
        %p349 = pneg %p208
        %s350 = sand.u32 %s28, 1
        %s351 = scalar_lea.sflag [#allocation9], %s350
        %s352 = sand.u32 %s198, 1
        %s353 = smul.addr %s352, 32
        %s354 = scalar_lea.vmem [#allocation8], %s353
        %p355 = pneg %p237
        %p356 = pneg %p234
        %s357 = sand.u32 %s28, 1
        %s358 = scalar_lea.sflag [#allocation9], %s357
        %s359 = sand.u32 %s224, 1
        %s360 = smul.addr %s359, 32
        %s361 = scalar_lea.vmem [#allocation10], %s360
        %p362 = scmp.lt.s32.totalorder %s28, 1
        %s363 = scalar_select %p362, %s28, 1
        %s364 = smul.addr %s363, 8
        %s365 = scalar_lea.vmem %s0, %s364
        %p366 = scmp.lt.s32.totalorder %s28, 1
        %s367 = scalar_select %p366, %s28, 1
        %s368 = smul.addr %s367, 8
        %s369 = scalar_lea.vmem %s1, %s368
        %v371 = vld [vmem:[%s365] sm:$0xff]
        %v372 = vld [vmem:[%s369] sm:$0xff]
        %v373 = vpack.c.bf16 %v371, %v371
        %v374 = vld [vmem:[#allocation2] sm:$0xff]
        %v375 = vld [vmem:[#allocation2 + $0x8] sm:$0xff]
        %v376 = vld [vmem:[#allocation2 + $0x10] sm:$0xff]
        %v377 = vld [vmem:[#allocation2 + $0x18] sm:$0xff]
        %v378 = vld [vmem:[#allocation2 + $0x20] sm:$0xff]
        %v379 = vld [vmem:[#allocation2 + $0x28] sm:$0xff]
        %v380 = vld [vmem:[#allocation2 + $0x88] sm:$0xff]
        %v381 = vld [vmem:[#allocation2 + $0x90] sm:$0xff]
        %v382 = vld [vmem:[#allocation2 + $0x98] sm:$0xff]
        %v383 = vld [vmem:[#allocation2 + $0xa0] sm:$0xff]
        %v384 = vld [vmem:[#allocation2 + $0xa8] sm:$0xff]
        %v385 = vld [vmem:[#allocation2 + $0xb0] sm:$0xff]
        %v386 = vld [vmem:[#allocation2 + $0x110] sm:$0xff]
        %v387 = vld [vmem:[#allocation2 + $0x118] sm:$0xff]
        %v388 = vld [vmem:[#allocation2 + $0x120] sm:$0xff]
        %v389 = vld [vmem:[#allocation2 + $0x128] sm:$0xff]
        %v390 = vld [vmem:[#allocation2 + $0x130] sm:$0xff]
        %v391 = vld [vmem:[#allocation2 + $0x138] sm:$0xff]
        %v392 = vld [vmem:[#allocation2 + $0x198] sm:$0xff]
        %v393 = vld [vmem:[#allocation2 + $0x1a0] sm:$0xff]
        %v394 = vld [vmem:[#allocation2 + $0x1a8] sm:$0xff]
        %v395 = vld [vmem:[#allocation2 + $0x1b0] sm:$0xff]
        %v396 = vld [vmem:[#allocation2 + $0x1b8] sm:$0xff]
        %v397 = vld [vmem:[#allocation2 + $0x1c0] sm:$0xff]
        %v398 = vld [vmem:[#allocation2 + $0x220] sm:$0xff]
        %v399 = vld [vmem:[#allocation2 + $0x228] sm:$0xff]
        %v400 = vld [vmem:[#allocation2 + $0x230] sm:$0xff]
        %v401 = vld [vmem:[#allocation2 + $0x238] sm:$0xff]
        %v402 = vld [vmem:[#allocation2 + $0x240] sm:$0xff]
        %v403 = vld [vmem:[#allocation2 + $0x248] sm:$0xff]
        %v404 = vld [vmem:[#allocation2 + $0x2a8] sm:$0xff]
        %v405 = vld [vmem:[#allocation2 + $0x2b0] sm:$0xff]
        %v406 = vld [vmem:[#allocation2 + $0x2b8] sm:$0xff]
        %v407 = vld [vmem:[#allocation2 + $0x2c0] sm:$0xff]
        %v408 = vld [vmem:[#allocation2 + $0x2c8] sm:$0xff]
        %v409 = vld [vmem:[#allocation2 + $0x2d0] sm:$0xff]
        %v410 = vld [vmem:[#allocation2 + $0x330] sm:$0xff]
        %v411 = vld [vmem:[#allocation2 + $0x338] sm:$0xff]
        %v412 = vld [vmem:[#allocation2 + $0x340] sm:$0xff]
        %v413 = vld [vmem:[#allocation2 + $0x348] sm:$0xff]
        %v414 = vld [vmem:[#allocation2 + $0x350] sm:$0xff]
        %v415 = vld [vmem:[#allocation2 + $0x358] sm:$0xff]
        %v416 = vld [vmem:[#allocation2 + $0x3b8] sm:$0xff]
        %v417 = vld [vmem:[#allocation2 + $0x3c0] sm:$0xff]
        %v418 = vld [vmem:[#allocation2 + $0x3c8] sm:$0xff]
        %v419 = vld [vmem:[#allocation2 + $0x3d0] sm:$0xff]
        %v420 = vld [vmem:[#allocation2 + $0x3d8] sm:$0xff]
        %v421 = vld [vmem:[#allocation2 + $0x3e0] sm:$0xff]
        %v422 = vld [vmem:[#allocation5] ss:$8 sm:$0xf]
        %v423 = vld [vmem:[#allocation5] ss:$8 sm:$0xf0]
        %v424 = vor.u32 %v422, %v423
        %s425 = scalar_lea.vmem [#allocation5], 64
        %v426 = vld [vmem:[%s425] ss:$8 sm:$0xf]
        %v429 = vperm.slane %v424, 0
        %v430 = vperm.slane %v424, 1
        %v431 = vperm.slane %v424, 2
        %v432 = vperm.slane %v424, 3
        %v433 = vperm.slane %v424, 4
        %v434 = vperm.slane %v424, 5
        %v435 = vperm.slane %v424, 6
        %v436 = vperm.slane %v424, 7
        %v437 = vperm.slane %v426, 0
        %v438 = vperm.slane %v426, 1
        %v439 = vperm.slane %v426, 2
        %v440 = vperm.slane %v426, 3
        %v501 = vunpack.c.l.b16 %v374
        %v502 = vunpack.c.h.b16 %v374
        %v503 = vunpack.c.l.b16 %v375
        %v504 = vunpack.c.h.b16 %v375
        %v505 = vunpack.c.l.b16 %v376
        %v506 = vunpack.c.h.b16 %v376
        %v507 = vunpack.c.l.b16 %v377
        %v508 = vunpack.c.h.b16 %v377
        %v509 = vunpack.c.l.b16 %v378
        %v510 = vunpack.c.h.b16 %v378
        %v511 = vunpack.c.l.b16 %v379
        %v512 = vunpack.c.h.b16 %v379
        %v513 = vunpack.c.l.b16 %v380
        %v514 = vunpack.c.h.b16 %v380
        %v515 = vunpack.c.l.b16 %v381
        %v516 = vunpack.c.h.b16 %v381
        %v517 = vunpack.c.l.b16 %v382
        %v518 = vunpack.c.h.b16 %v382
        %v519 = vunpack.c.l.b16 %v383
        %v520 = vunpack.c.h.b16 %v383
        %v521 = vunpack.c.l.b16 %v384
        %v522 = vunpack.c.h.b16 %v384
        %v523 = vunpack.c.l.b16 %v385
        %v524 = vunpack.c.h.b16 %v385
        %v525 = vunpack.c.l.b16 %v386
        %v526 = vunpack.c.h.b16 %v386
        %v527 = vunpack.c.l.b16 %v387
        %v528 = vunpack.c.h.b16 %v387
        %v529 = vunpack.c.l.b16 %v388
        %v530 = vunpack.c.h.b16 %v388
        %v531 = vunpack.c.l.b16 %v389
        %v532 = vunpack.c.h.b16 %v389
        %v533 = vunpack.c.l.b16 %v390
        %v534 = vunpack.c.h.b16 %v390
        %v535 = vunpack.c.l.b16 %v391
        %v536 = vunpack.c.h.b16 %v391
        %v537 = vunpack.c.l.b16 %v392
        %v538 = vunpack.c.h.b16 %v392
        %v539 = vunpack.c.l.b16 %v393
        %v540 = vunpack.c.h.b16 %v393
        %v541 = vunpack.c.l.b16 %v394
        %v542 = vunpack.c.h.b16 %v394
        %v543 = vunpack.c.l.b16 %v395
        %v544 = vunpack.c.h.b16 %v395
        %v545 = vunpack.c.l.b16 %v396
        %v546 = vunpack.c.h.b16 %v396
        %v547 = vunpack.c.l.b16 %v397
        %v548 = vunpack.c.h.b16 %v397
        %v549 = vunpack.c.l.b16 %v398
        %v550 = vunpack.c.h.b16 %v398
        %v551 = vunpack.c.l.b16 %v399
        %v552 = vunpack.c.h.b16 %v399
        %v553 = vunpack.c.l.b16 %v400
        %v554 = vunpack.c.h.b16 %v400
        %v555 = vunpack.c.l.b16 %v401
        %v556 = vunpack.c.h.b16 %v401
        %v557 = vunpack.c.l.b16 %v402
        %v558 = vunpack.c.h.b16 %v402
        %v559 = vunpack.c.l.b16 %v403
        %v560 = vunpack.c.h.b16 %v403
        %v561 = vunpack.c.l.b16 %v404
        %v562 = vunpack.c.h.b16 %v404
        %v563 = vunpack.c.l.b16 %v405
        %v564 = vunpack.c.h.b16 %v405
        %v565 = vunpack.c.l.b16 %v406
        %v566 = vunpack.c.h.b16 %v406
        %v567 = vunpack.c.l.b16 %v407
        %v568 = vunpack.c.h.b16 %v407
        %v569 = vunpack.c.l.b16 %v408
        %v570 = vunpack.c.h.b16 %v408
        %v571 = vunpack.c.l.b16 %v409
        %v572 = vunpack.c.h.b16 %v409
        %v573 = vunpack.c.l.b16 %v410
        %v574 = vunpack.c.h.b16 %v410
        %v575 = vunpack.c.l.b16 %v411
        %v576 = vunpack.c.h.b16 %v411
        %v577 = vunpack.c.l.b16 %v412
        %v578 = vunpack.c.h.b16 %v412
        %v579 = vunpack.c.l.b16 %v413
        %v580 = vunpack.c.h.b16 %v413
        %v581 = vunpack.c.l.b16 %v414
        %v582 = vunpack.c.h.b16 %v414
        %v583 = vunpack.c.l.b16 %v415
        %v584 = vunpack.c.h.b16 %v415
        %v585 = vunpack.c.l.b16 %v416
        %v586 = vunpack.c.h.b16 %v416
        %v587 = vunpack.c.l.b16 %v417
        %v588 = vunpack.c.h.b16 %v417
        %v589 = vunpack.c.l.b16 %v418
        %v590 = vunpack.c.h.b16 %v418
        %v591 = vunpack.c.l.b16 %v419
        %v592 = vunpack.c.h.b16 %v419
        %v593 = vunpack.c.l.b16 %v420
        %v594 = vunpack.c.h.b16 %v420
        %v595 = vunpack.c.l.b16 %v421
        %v596 = vunpack.c.h.b16 %v421
        %v597 = vpack.c.b16 %v513, %v501
        %v598 = vpack.c.b16 %v514, %v502
        %v599 = vpack.c.b16 %v515, %v503
        %v600 = vpack.c.b16 %v516, %v504
        %v601 = vpack.c.b16 %v517, %v505
        %v602 = vpack.c.b16 %v518, %v506
        %v603 = vpack.c.b16 %v519, %v507
        %v604 = vpack.c.b16 %v520, %v508
        %v605 = vpack.c.b16 %v521, %v509
        %v606 = vpack.c.b16 %v522, %v510
        %v607 = vpack.c.b16 %v523, %v511
        %v608 = vpack.c.b16 %v524, %v512
        %v609 = vpack.c.b16 %v537, %v525
        %v610 = vpack.c.b16 %v538, %v526
        %v611 = vpack.c.b16 %v539, %v527
        %v612 = vpack.c.b16 %v540, %v528
        %v613 = vpack.c.b16 %v541, %v529
        %v614 = vpack.c.b16 %v542, %v530
        %v615 = vpack.c.b16 %v543, %v531
        %v616 = vpack.c.b16 %v544, %v532
        %v617 = vpack.c.b16 %v545, %v533
        %v618 = vpack.c.b16 %v546, %v534
        %v619 = vpack.c.b16 %v547, %v535
        %v620 = vpack.c.b16 %v548, %v536
        %v621 = vpack.c.b16 %v561, %v549
        %v622 = vpack.c.b16 %v562, %v550
        %v623 = vpack.c.b16 %v563, %v551
        %v624 = vpack.c.b16 %v564, %v552
        %v625 = vpack.c.b16 %v565, %v553
        %v626 = vpack.c.b16 %v566, %v554
        %v627 = vpack.c.b16 %v567, %v555
        %v628 = vpack.c.b16 %v568, %v556
        %v629 = vpack.c.b16 %v569, %v557
        %v630 = vpack.c.b16 %v570, %v558
        %v631 = vpack.c.b16 %v571, %v559
        %v632 = vpack.c.b16 %v572, %v560
        %v633 = vpack.c.b16 %v585, %v573
        %v634 = vpack.c.b16 %v586, %v574
        %v635 = vpack.c.b16 %v587, %v575
        %v636 = vpack.c.b16 %v588, %v576
        %v637 = vpack.c.b16 %v589, %v577
        %v638 = vpack.c.b16 %v590, %v578
        %v639 = vpack.c.b16 %v591, %v579
        %v640 = vpack.c.b16 %v592, %v580
        %v641 = vpack.c.b16 %v593, %v581
        %v642 = vpack.c.b16 %v594, %v582
        %v643 = vpack.c.b16 %v595, %v583
        %v644 = vpack.c.b16 %v596, %v584
        %vm693 = vcmask 523264
        %v695 = vsel %vm693, %v373, 0
        %697 = vmatpush.bf16.msra.mxu0 0
        %698 = vmatpush.bf16.msra.mxu0 0
        %699 = vmatpush.bf16.msra.mxu0 0
        %700 = vmatpush.bf16.msra.mxu0 0
        %701 = vmatpush.bf16.msra.mxu0 %v633
        %702 = vmatpush.bf16.msra.mxu0 %v621
        %703 = vmatpush.bf16.msra.mxu0 %v609
        %704 = vmatpush.bf16.msra.mxu0 %v597
        %705 = vmatmul.bf16.gmra.mxu0 %v695
        %v706 = vpop.f32.mrf.mxu0
        %v707 = vadd.f32 %v429, %v706
        %v708 = vpop.f32.mrf.mxu0
        %709 = vdwg.mxu0
        %710 = vmatpush.bf16.msra.mxu0 0
        %711 = vmatpush.bf16.msra.mxu0 0
        %712 = vmatpush.bf16.msra.mxu0 0
        %713 = vmatpush.bf16.msra.mxu0 0
        %714 = vmatpush.bf16.msra.mxu0 %v634
        %715 = vmatpush.bf16.msra.mxu0 %v622
        %716 = vmatpush.bf16.msra.mxu0 %v610
        %717 = vmatpush.bf16.msra.mxu0 %v598
        %718 = vmatmul.bf16.gmra.mxu0 %v695
        %v719 = vpop.f32.mrf.mxu0
        %v720 = vadd.f32 %v430, %v719
        %v721 = vpop.f32.mrf.mxu0
        %722 = vdwg.mxu0
        %723 = vmatpush.bf16.msra.mxu0 0
        %724 = vmatpush.bf16.msra.mxu0 0
        %725 = vmatpush.bf16.msra.mxu0 0
        %726 = vmatpush.bf16.msra.mxu0 0
        %727 = vmatpush.bf16.msra.mxu0 %v635
        %728 = vmatpush.bf16.msra.mxu0 %v623
        %729 = vmatpush.bf16.msra.mxu0 %v611
        %730 = vmatpush.bf16.msra.mxu0 %v599
        %731 = vmatmul.bf16.gmra.mxu0 %v695
        %v732 = vpop.f32.mrf.mxu0
        %v733 = vadd.f32 %v431, %v732
        %v734 = vpop.f32.mrf.mxu0
        %735 = vdwg.mxu0
        %736 = vmatpush.bf16.msra.mxu0 0
        %737 = vmatpush.bf16.msra.mxu0 0
        %738 = vmatpush.bf16.msra.mxu0 0
        %739 = vmatpush.bf16.msra.mxu0 0
        %740 = vmatpush.bf16.msra.mxu0 %v636
        %741 = vmatpush.bf16.msra.mxu0 %v624
        %742 = vmatpush.bf16.msra.mxu0 %v612
        %743 = vmatpush.bf16.msra.mxu0 %v600
        %744 = vmatmul.bf16.gmra.mxu0 %v695
        %v745 = vpop.f32.mrf.mxu0
        %v746 = vadd.f32 %v432, %v745
        %v747 = vpop.f32.mrf.mxu0
        %748 = vdwg.mxu0
        %749 = vmatpush.bf16.msra.mxu0 0
        %750 = vmatpush.bf16.msra.mxu0 0
        %751 = vmatpush.bf16.msra.mxu0 0
        %752 = vmatpush.bf16.msra.mxu0 0
        %753 = vmatpush.bf16.msra.mxu0 %v637
        %754 = vmatpush.bf16.msra.mxu0 %v625
        %755 = vmatpush.bf16.msra.mxu0 %v613
        %756 = vmatpush.bf16.msra.mxu0 %v601
        %757 = vmatmul.bf16.gmra.mxu0 %v695
        %v758 = vpop.f32.mrf.mxu0
        %v759 = vadd.f32 %v433, %v758
        %v760 = vpop.f32.mrf.mxu0
        %761 = vdwg.mxu0
        %762 = vmatpush.bf16.msra.mxu0 0
        %763 = vmatpush.bf16.msra.mxu0 0
        %764 = vmatpush.bf16.msra.mxu0 0
        %765 = vmatpush.bf16.msra.mxu0 0
        %766 = vmatpush.bf16.msra.mxu0 %v638
        %767 = vmatpush.bf16.msra.mxu0 %v626
        %768 = vmatpush.bf16.msra.mxu0 %v614
        %769 = vmatpush.bf16.msra.mxu0 %v602
        %770 = vmatmul.bf16.gmra.mxu0 %v695
        %v771 = vpop.f32.mrf.mxu0
        %v772 = vadd.f32 %v434, %v771
        %v773 = vpop.f32.mrf.mxu0
        %774 = vdwg.mxu0
        %775 = vmatpush.bf16.msra.mxu0 0
        %776 = vmatpush.bf16.msra.mxu0 0
        %777 = vmatpush.bf16.msra.mxu0 0
        %778 = vmatpush.bf16.msra.mxu0 0
        %779 = vmatpush.bf16.msra.mxu0 %v639
        %780 = vmatpush.bf16.msra.mxu0 %v627
        %781 = vmatpush.bf16.msra.mxu0 %v615
        %782 = vmatpush.bf16.msra.mxu0 %v603
        %783 = vmatmul.bf16.gmra.mxu0 %v695
        %v784 = vpop.f32.mrf.mxu0
        %v785 = vadd.f32 %v435, %v784
        %v786 = vpop.f32.mrf.mxu0
        %787 = vdwg.mxu0
        %788 = vmatpush.bf16.msra.mxu0 0
        %789 = vmatpush.bf16.msra.mxu0 0
        %790 = vmatpush.bf16.msra.mxu0 0
        %791 = vmatpush.bf16.msra.mxu0 0
        %792 = vmatpush.bf16.msra.mxu0 %v640
        %793 = vmatpush.bf16.msra.mxu0 %v628
        %794 = vmatpush.bf16.msra.mxu0 %v616
        %795 = vmatpush.bf16.msra.mxu0 %v604
        %796 = vmatmul.bf16.gmra.mxu0 %v695
        %v797 = vpop.f32.mrf.mxu0
        %v798 = vadd.f32 %v436, %v797
        %v799 = vpop.f32.mrf.mxu0
        %800 = vdwg.mxu0
        %801 = vmatpush.bf16.msra.mxu0 0
        %802 = vmatpush.bf16.msra.mxu0 0
        %803 = vmatpush.bf16.msra.mxu0 0
        %804 = vmatpush.bf16.msra.mxu0 0
        %805 = vmatpush.bf16.msra.mxu0 %v641
        %806 = vmatpush.bf16.msra.mxu0 %v629
        %807 = vmatpush.bf16.msra.mxu0 %v617
        %808 = vmatpush.bf16.msra.mxu0 %v605
        %809 = vmatmul.bf16.gmra.mxu0 %v695
        %v810 = vpop.f32.mrf.mxu0
        %v811 = vadd.f32 %v437, %v810
        %v812 = vpop.f32.mrf.mxu0
        %813 = vdwg.mxu0
        %814 = vmatpush.bf16.msra.mxu0 0
        %815 = vmatpush.bf16.msra.mxu0 0
        %816 = vmatpush.bf16.msra.mxu0 0
        %817 = vmatpush.bf16.msra.mxu0 0
        %818 = vmatpush.bf16.msra.mxu0 %v642
        %819 = vmatpush.bf16.msra.mxu0 %v630
        %820 = vmatpush.bf16.msra.mxu0 %v618
        %821 = vmatpush.bf16.msra.mxu0 %v606
        %822 = vmatmul.bf16.gmra.mxu0 %v695
        %v823 = vpop.f32.mrf.mxu0
        %v824 = vadd.f32 %v438, %v823
        %v825 = vpop.f32.mrf.mxu0
        %826 = vdwg.mxu0
        %827 = vmatpush.bf16.msra.mxu0 0
        %828 = vmatpush.bf16.msra.mxu0 0
        %829 = vmatpush.bf16.msra.mxu0 0
        %830 = vmatpush.bf16.msra.mxu0 0
        %831 = vmatpush.bf16.msra.mxu0 %v643
        %832 = vmatpush.bf16.msra.mxu0 %v631
        %833 = vmatpush.bf16.msra.mxu0 %v619
        %834 = vmatpush.bf16.msra.mxu0 %v607
        %835 = vmatmul.bf16.gmra.mxu0 %v695
        %v836 = vpop.f32.mrf.mxu0
        %v837 = vadd.f32 %v439, %v836
        %v838 = vpop.f32.mrf.mxu0
        %839 = vdwg.mxu0
        %840 = vmatpush.bf16.msra.mxu0 0
        %841 = vmatpush.bf16.msra.mxu0 0
        %842 = vmatpush.bf16.msra.mxu0 0
        %843 = vmatpush.bf16.msra.mxu0 0
        %844 = vmatpush.bf16.msra.mxu0 %v644
        %845 = vmatpush.bf16.msra.mxu0 %v632
        %846 = vmatpush.bf16.msra.mxu0 %v620
        %847 = vmatpush.bf16.msra.mxu0 %v608
        %848 = vmatmul.bf16.gmra.mxu0 %v695
        %v849 = vpop.f32.mrf.mxu0
        %v850 = vadd.f32 %v440, %v849
        %v851 = vpop.f32.mrf.mxu0
        %852 = vdwg.mxu0
        %v853 = vpack.c.bf16 %v720, %v707
        %v854 = vpack.c.bf16 %v746, %v733
        %v855 = vpack.c.bf16 %v772, %v759
        %v856 = vpack.c.bf16 %v798, %v785
        %v857 = vpack.c.bf16 %v824, %v811
        %v858 = vpack.c.bf16 %v850, %v837
        %v859 = vlaneseq
        %v860 = vshrl.u32 %v859, 7
        %v861 = vlaneseq
        %v862 = vand.u32 %v861, 127
        %vm863 = vcmp.gt.s32.totalorder %v862, %v860
        %s864 = scalar_lea.vmem %s2, %s28
        %v865 = vld [vmem:[%s864] sm:$0x1]
        %vm866 = vcmp.ne.s32.totalorder %v865, 0
        %v867 = vsel %vm866, 1, 0
        %v868 = vperm.slane %v867, 0
        %vm869 = vcmp.eq.s32.totalorder %v868, 1
        %vm870 = vmor %vm869, %vm863
        %871 = vmatpush.bf16.xpose.msra.mxu0 0
        %872 = vmatpush.bf16.xpose.msra.mxu0 0
        %873 = vmatpush.bf16.xpose.msra.mxu0 0
        %874 = vmatpush.bf16.xpose.msra.mxu0 0
        %875 = vmatpush.bf16.xpose.msra.mxu0 0
        %876 = vmatpush.bf16.xpose.msra.mxu0 0
        %877 = vmatpush.bf16.xpose.msra.mxu0 0
        %878 = vmatpush.bf16.xpose.msra.mxu0 %v855
        %879 = vmatmul.bf16.gmra.mxu0 %v853
        %v880 = vpop.f32.mrf.mxu0
        %v881 = vadd.f32 0.0, %v880
        %v882 = vpop.f32.mrf.mxu0
        %883 = vdwg.mxu0
        %v884 = vsel %vm870, -1e+09, %v881
        %vm885 = vcmask 64512
        %v886 = vsel %vm885, %v884, -inf
        %887 = vmax.xlane.f32.xlu0 %v886
        %v888 = vpop.xlane.xlu0 %887
        %v889 = vsub.f32 %v884, %v888
        %v890 = vmul.f32 %v889, 1.442695
        %v891 = vpow.pop %v890
        %v892 = vsel %vm885, %v891, 0.0
        %893 = vadd.xlane.f32.xlu0 %v892
        %v894 = vpop.xlane.xlu0 %893
        %v895 = vrcp.pop %v894
        %v896 = vmul.f32 %v891, %v895
        %v897 = vpack.c.bf16 %v896, %v896
        %v899 = vsel %vm885, %v897, 0
        %vm901 = vcmask 1043456
        %v903 = vsel %vm901, %v857, 0
        %905 = vmatpush.bf16.msra.mxu0 0
        %906 = vmatpush.bf16.msra.mxu0 0
        %907 = vmatpush.bf16.msra.mxu0 0
        %908 = vmatpush.bf16.msra.mxu0 0
        %909 = vmatpush.bf16.msra.mxu0 0
        %910 = vmatpush.bf16.msra.mxu0 0
        %911 = vmatpush.bf16.msra.mxu0 0
        %912 = vmatpush.bf16.msra.mxu0 %v903
        %913 = vmatmul.bf16.gmra.mxu0 %v899
        %v914 = vpop.f32.mrf.mxu0
        %v915 = vadd.f32 0.0, %v914
        %v916 = vpop.f32.mrf.mxu0
        %917 = vdwg.mxu0
        %v919 = vunpack.c.h.b16 %v853
        %v920 = vpack.c.b16 %v919, %v919
        %v923 = vunpack.c.h.b16 %v855
        %v924 = vpack.c.b16 %v923, %v923
        %926 = vmatpush.bf16.xpose.msra.mxu0 0
        %927 = vmatpush.bf16.xpose.msra.mxu0 0
        %928 = vmatpush.bf16.xpose.msra.mxu0 0
        %929 = vmatpush.bf16.xpose.msra.mxu0 0
        %930 = vmatpush.bf16.xpose.msra.mxu0 0
        %931 = vmatpush.bf16.xpose.msra.mxu0 0
        %932 = vmatpush.bf16.xpose.msra.mxu0 0
        %933 = vmatpush.bf16.xpose.msra.mxu0 %v924
        %934 = vmatmul.bf16.gmra.mxu0 %v920
        %v935 = vpop.f32.mrf.mxu0
        %v936 = vadd.f32 0.0, %v935
        %v937 = vpop.f32.mrf.mxu0
        %938 = vdwg.mxu0
        %v939 = vsel %vm870, -1e+09, %v936
        %v940 = vsel %vm885, %v939, -inf
        %941 = vmax.xlane.f32.xlu0 %v940
        %v942 = vpop.xlane.xlu0 %941
        %v943 = vsub.f32 %v939, %v942
        %v944 = vmul.f32 %v943, 1.442695
        %v945 = vpow.pop %v944
        %v946 = vsel %vm885, %v945, 0.0
        %947 = vadd.xlane.f32.xlu0 %v946
        %v948 = vpop.xlane.xlu0 %947
        %v949 = vrcp.pop %v948
        %v950 = vmul.f32 %v945, %v949
        %v951 = vpack.c.bf16 %v950, %v950
        %v953 = vunpack.c.h.b16 %v857
        %v954 = vpack.c.b16 %v953, %v953
        %v956 = vsel %vm885, %v951, 0
        %v959 = vsel %vm901, %v954, 0
        %961 = vmatpush.bf16.msra.mxu0 0
        %962 = vmatpush.bf16.msra.mxu0 0
        %963 = vmatpush.bf16.msra.mxu0 0
        %964 = vmatpush.bf16.msra.mxu0 0
        %965 = vmatpush.bf16.msra.mxu0 0
        %966 = vmatpush.bf16.msra.mxu0 0
        %967 = vmatpush.bf16.msra.mxu0 0
        %968 = vmatpush.bf16.msra.mxu0 %v959
        %969 = vmatmul.bf16.gmra.mxu0 %v956
        %v970 = vpop.f32.mrf.mxu0
        %v971 = vadd.f32 0.0, %v970
        %v972 = vpop.f32.mrf.mxu0
        %973 = vdwg.mxu0
        %974 = vmatpush.bf16.xpose.msra.mxu0 0
        %975 = vmatpush.bf16.xpose.msra.mxu0 0
        %976 = vmatpush.bf16.xpose.msra.mxu0 0
        %977 = vmatpush.bf16.xpose.msra.mxu0 0
        %978 = vmatpush.bf16.xpose.msra.mxu0 0
        %979 = vmatpush.bf16.xpose.msra.mxu0 0
        %980 = vmatpush.bf16.xpose.msra.mxu0 0
        %981 = vmatpush.bf16.xpose.msra.mxu0 %v856
        %982 = vmatmul.bf16.gmra.mxu0 %v854
        %v983 = vpop.f32.mrf.mxu0
        %v984 = vadd.f32 0.0, %v983
        %v985 = vpop.f32.mrf.mxu0
        %986 = vdwg.mxu0
        %v987 = vsel %vm870, -1e+09, %v984
        %v988 = vsel %vm885, %v987, -inf
        %989 = vmax.xlane.f32.xlu0 %v988
        %v990 = vpop.xlane.xlu0 %989
        %v991 = vsub.f32 %v987, %v990
        %v992 = vmul.f32 %v991, 1.442695
        %v993 = vpow.pop %v992
        %v994 = vsel %vm885, %v993, 0.0
        %995 = vadd.xlane.f32.xlu0 %v994
        %v996 = vpop.xlane.xlu0 %995
        %v997 = vrcp.pop %v996
        %v998 = vmul.f32 %v993, %v997
        %v999 = vpack.c.bf16 %v998, %v998
        %v1001 = vsel %vm885, %v999, 0
        %v1004 = vsel %vm901, %v858, 0
        %1006 = vmatpush.bf16.msra.mxu0 0
        %1007 = vmatpush.bf16.msra.mxu0 0
        %1008 = vmatpush.bf16.msra.mxu0 0
        %1009 = vmatpush.bf16.msra.mxu0 0
        %1010 = vmatpush.bf16.msra.mxu0 0
        %1011 = vmatpush.bf16.msra.mxu0 0
        %1012 = vmatpush.bf16.msra.mxu0 0
        %1013 = vmatpush.bf16.msra.mxu0 %v1004
        %1014 = vmatmul.bf16.gmra.mxu0 %v1001
        %v1015 = vpop.f32.mrf.mxu0
        %v1016 = vadd.f32 0.0, %v1015
        %v1017 = vpop.f32.mrf.mxu0
        %1018 = vdwg.mxu0
        %v1020 = vunpack.c.h.b16 %v854
        %v1021 = vpack.c.b16 %v1020, %v1020
        %v1024 = vunpack.c.h.b16 %v856
        %v1025 = vpack.c.b16 %v1024, %v1024
        %1027 = vmatpush.bf16.xpose.msra.mxu0 0
        %1028 = vmatpush.bf16.xpose.msra.mxu0 0
        %1029 = vmatpush.bf16.xpose.msra.mxu0 0
        %1030 = vmatpush.bf16.xpose.msra.mxu0 0
        %1031 = vmatpush.bf16.xpose.msra.mxu0 0
        %1032 = vmatpush.bf16.xpose.msra.mxu0 0
        %1033 = vmatpush.bf16.xpose.msra.mxu0 0
        %1034 = vmatpush.bf16.xpose.msra.mxu0 %v1025
        %1035 = vmatmul.bf16.gmra.mxu0 %v1021
        %v1036 = vpop.f32.mrf.mxu0
        %v1037 = vadd.f32 0.0, %v1036
        %v1038 = vpop.f32.mrf.mxu0
        %1039 = vdwg.mxu0
        %v1040 = vsel %vm870, -1e+09, %v1037
        %v1041 = vsel %vm885, %v1040, -inf
        %1042 = vmax.xlane.f32.xlu0 %v1041
        %v1043 = vpop.xlane.xlu0 %1042
        %v1044 = vsub.f32 %v1040, %v1043
        %v1045 = vmul.f32 %v1044, 1.442695
        %v1046 = vpow.pop %v1045
        %v1047 = vsel %vm885, %v1046, 0.0
        %1048 = vadd.xlane.f32.xlu0 %v1047
        %v1049 = vpop.xlane.xlu0 %1048
        %v1050 = vrcp.pop %v1049
        %v1051 = vmul.f32 %v1046, %v1050
        %v1052 = vpack.c.bf16 %v1051, %v1051
        %v1054 = vunpack.c.h.b16 %v858
        %v1055 = vpack.c.b16 %v1054, %v1054
        %v1057 = vsel %vm885, %v1052, 0
        %v1060 = vsel %vm901, %v1055, 0
        %1062 = vmatpush.bf16.msra.mxu0 0
        %1063 = vmatpush.bf16.msra.mxu0 0
        %1064 = vmatpush.bf16.msra.mxu0 0
        %1065 = vmatpush.bf16.msra.mxu0 0
        %1066 = vmatpush.bf16.msra.mxu0 0
        %1067 = vmatpush.bf16.msra.mxu0 0
        %1068 = vmatpush.bf16.msra.mxu0 0
        %1069 = vmatpush.bf16.msra.mxu0 %v1060
        %1070 = vmatmul.bf16.gmra.mxu0 %v1057
        %v1071 = vpop.f32.mrf.mxu0
        %v1072 = vadd.f32 0.0, %v1071
        %v1073 = vpop.f32.mrf.mxu0
        %1074 = vdwg.mxu0
        %1075 = vst.msk [vmem:[%s354] sm:$0xff] %vm885, %v896
        %1076 = vst.msk [vmem:[%s354 + $0x8] sm:$0xff] %vm885, %v950
        %1077 = vst.msk [vmem:[%s354 + $0x10] sm:$0xff] %vm885, %v998
        %1078 = vst.msk [vmem:[%s354 + $0x18] sm:$0xff] %vm885, %v1051
        %v1079 = vpack.c.bf16 %v915, %v915
        %v1080 = vpack.c.bf16 %v971, %v971
        %v1081 = vpack.c.bf16 %v1016, %v1016
        %v1082 = vpack.c.bf16 %v1072, %v1072
        %v1083 = vld [vmem:[#allocation2 + $0x64] sm:$0xff]
        %v1084 = vld [vmem:[#allocation2 + $0x6c] sm:$0xff]
        %v1085 = vld [vmem:[#allocation2 + $0xec] sm:$0xff]
        %v1086 = vld [vmem:[#allocation2 + $0xf4] sm:$0xff]
        %v1087 = vld [vmem:[#allocation2 + $0x174] sm:$0xff]
        %v1088 = vld [vmem:[#allocation2 + $0x17c] sm:$0xff]
        %v1089 = vld [vmem:[#allocation2 + $0x1fc] sm:$0xff]
        %v1090 = vld [vmem:[#allocation2 + $0x204] sm:$0xff]
        %v1091 = vld [vmem:[#allocation2 + $0x284] sm:$0xff]
        %v1092 = vld [vmem:[#allocation2 + $0x28c] sm:$0xff]
        %v1093 = vld [vmem:[#allocation2 + $0x30c] sm:$0xff]
        %v1094 = vld [vmem:[#allocation2 + $0x314] sm:$0xff]
        %v1095 = vld [vmem:[#allocation2 + $0x394] sm:$0xff]
        %v1096 = vld [vmem:[#allocation2 + $0x39c] sm:$0xff]
        %v1097 = vld [vmem:[#allocation2 + $0x41c] sm:$0xff]
        %v1098 = vld [vmem:[#allocation2 + $0x424] sm:$0xff]
        %v1099 = vld [vmem:[#allocation5 + $0x3] ss:$0 sm:$0xff]
        %v1116 = vunpack.c.l.b16 %v1083
        %v1117 = vunpack.c.h.b16 %v1083
        %v1118 = vunpack.c.l.b16 %v1084
        %v1119 = vunpack.c.h.b16 %v1084
        %v1120 = vunpack.c.l.b16 %v1085
        %v1121 = vunpack.c.h.b16 %v1085
        %v1122 = vunpack.c.l.b16 %v1086
        %v1123 = vunpack.c.h.b16 %v1086
        %v1124 = vunpack.c.l.b16 %v1087
        %v1125 = vunpack.c.h.b16 %v1087
        %v1126 = vunpack.c.l.b16 %v1088
        %v1127 = vunpack.c.h.b16 %v1088
        %v1128 = vunpack.c.l.b16 %v1089
        %v1129 = vunpack.c.h.b16 %v1089
        %v1130 = vunpack.c.l.b16 %v1090
        %v1131 = vunpack.c.h.b16 %v1090
        %v1132 = vunpack.c.l.b16 %v1091
        %v1133 = vunpack.c.h.b16 %v1091
        %v1134 = vunpack.c.l.b16 %v1092
        %v1135 = vunpack.c.h.b16 %v1092
        %v1136 = vunpack.c.l.b16 %v1093
        %v1137 = vunpack.c.h.b16 %v1093
        %v1138 = vunpack.c.l.b16 %v1094
        %v1139 = vunpack.c.h.b16 %v1094
        %v1140 = vunpack.c.l.b16 %v1095
        %v1141 = vunpack.c.h.b16 %v1095
        %v1142 = vunpack.c.l.b16 %v1096
        %v1143 = vunpack.c.h.b16 %v1096
        %v1144 = vunpack.c.l.b16 %v1097
        %v1145 = vunpack.c.h.b16 %v1097
        %v1146 = vunpack.c.l.b16 %v1098
        %v1147 = vunpack.c.h.b16 %v1098
        %v1148 = vpack.c.b16 %v1120, %v1116
        %v1149 = vpack.c.b16 %v1121, %v1117
        %v1150 = vpack.c.b16 %v1122, %v1118
        %v1151 = vpack.c.b16 %v1123, %v1119
        %v1152 = vpack.c.b16 %v1128, %v1124
        %v1153 = vpack.c.b16 %v1129, %v1125
        %v1154 = vpack.c.b16 %v1130, %v1126
        %v1155 = vpack.c.b16 %v1131, %v1127
        %v1156 = vpack.c.b16 %v1136, %v1132
        %v1157 = vpack.c.b16 %v1137, %v1133
        %v1158 = vpack.c.b16 %v1138, %v1134
        %v1159 = vpack.c.b16 %v1139, %v1135
        %v1160 = vpack.c.b16 %v1144, %v1140
        %v1161 = vpack.c.b16 %v1145, %v1141
        %v1162 = vpack.c.b16 %v1146, %v1142
        %v1163 = vpack.c.b16 %v1147, %v1143
        %1180 = vmatpush.bf16.xpose.msra.mxu0 0
        %1181 = vmatpush.bf16.xpose.msra.mxu0 0
        %1182 = vmatpush.bf16.xpose.msra.mxu0 0
        %1183 = vmatpush.bf16.xpose.msra.mxu0 0
        %1184 = vmatpush.bf16.xpose.msra.mxu0 %v1160
        %1185 = vmatpush.bf16.xpose.msra.mxu0 %v1156
        %1186 = vmatpush.bf16.xpose.msra.mxu0 %v1152
        %1187 = vmatpush.bf16.xpose.msra.mxu0 %v1148
        %1188 = vmatmul.bf16.gmra.mxu0 %v1079
        %v1189 = vpop.f32.mrf.mxu0
        %v1190 = vadd.f32 %v1099, %v1189
        %v1191 = vpop.f32.mrf.mxu0
        %1192 = vdwg.mxu0
        %1193 = vmatpush.bf16.xpose.msra.mxu0 0
        %1194 = vmatpush.bf16.xpose.msra.mxu0 0
        %1195 = vmatpush.bf16.xpose.msra.mxu0 0
        %1196 = vmatpush.bf16.xpose.msra.mxu0 0
        %1197 = vmatpush.bf16.xpose.msra.mxu0 %v1161
        %1198 = vmatpush.bf16.xpose.msra.mxu0 %v1157
        %1199 = vmatpush.bf16.xpose.msra.mxu0 %v1153
        %1200 = vmatpush.bf16.xpose.msra.mxu0 %v1149
        %1201 = vmatmul.bf16.gmra.mxu0 %v1080
        %v1202 = vpop.f32.mrf.mxu0
        %v1203 = vadd.f32 %v1190, %v1202
        %v1204 = vpop.f32.mrf.mxu0
        %1205 = vdwg.mxu0
        %1206 = vmatpush.bf16.xpose.msra.mxu0 0
        %1207 = vmatpush.bf16.xpose.msra.mxu0 0
        %1208 = vmatpush.bf16.xpose.msra.mxu0 0
        %1209 = vmatpush.bf16.xpose.msra.mxu0 0
        %1210 = vmatpush.bf16.xpose.msra.mxu0 %v1162
        %1211 = vmatpush.bf16.xpose.msra.mxu0 %v1158
        %1212 = vmatpush.bf16.xpose.msra.mxu0 %v1154
        %1213 = vmatpush.bf16.xpose.msra.mxu0 %v1150
        %1214 = vmatmul.bf16.gmra.mxu0 %v1081
        %v1215 = vpop.f32.mrf.mxu0
        %v1216 = vadd.f32 %v1203, %v1215
        %v1217 = vpop.f32.mrf.mxu0
        %1218 = vdwg.mxu0
        %1219 = vmatpush.bf16.xpose.msra.mxu0 0
        %1220 = vmatpush.bf16.xpose.msra.mxu0 0
        %1221 = vmatpush.bf16.xpose.msra.mxu0 0
        %1222 = vmatpush.bf16.xpose.msra.mxu0 0
        %1223 = vmatpush.bf16.xpose.msra.mxu0 %v1163
        %1224 = vmatpush.bf16.xpose.msra.mxu0 %v1159
        %1225 = vmatpush.bf16.xpose.msra.mxu0 %v1155
        %1226 = vmatpush.bf16.xpose.msra.mxu0 %v1151
        %1227 = vmatmul.bf16.gmra.mxu0 %v1082
        %v1228 = vpop.f32.mrf.mxu0
        %v1229 = vadd.f32 %v1216, %v1228
        %v1230 = vpop.f32.mrf.mxu0
        %1231 = vdwg.mxu0
        %v1232 = vadd.f32 %v371, %v1229
        %v1233 = vsel %vm693, %v1232, 0.0
        %1234 = vadd.xlane.f32.xlu0 %v1233
        %v1235 = vpop.xlane.xlu0 %1234
        %v1236 = vrcp.pop 64.0
        %v1237 = vmul.f32 64.0, %v1236
        %v1238 = vsub.f32 1.0, %v1237
        %v1239 = vmul.f32 %v1236, %v1238
        %v1240 = vadd.f32 %v1236, %v1239
        %vm1241 = vweird.f32 %v1236
        %v1242 = vsel %vm1241, %v1236, %v1240
        %v1243 = vmul.f32 %v1235, %v1242
        %v1244 = vsub.f32 %v1232, %v1243
        %v1245 = vmul.f32 %v1244, %v1244
        %v1246 = vsel %vm693, %v1245, 0.0
        %1247 = vadd.xlane.f32.xlu0 %v1246
        %v1248 = vpop.xlane.xlu0 %1247
        %v1249 = vmul.f32 %v1248, %v1242
        %v1250 = vadd.f32 %v1249, 1e-12
        %v1251 = vrsqrt.pop %v1250
        %v1252 = vmul.f32 %v1251, %v1250
        %v1253 = vmul.f32 %v1252, %v1251
        %v1254 = vmul.f32 0.5, %v1253
        %v1255 = vsub.f32 1.5, %v1254
        %v1256 = vmul.f32 %v1251, %v1255
        %vm1257 = vweird.f32 %v1250
        %vm1258 = vweird.f32 %v1251
        %vm1259 = vmor %vm1257, %vm1258
        %v1260 = vsel %vm1259, %v1251, %v1256
        %v1261 = vmul.f32 %v1244, %v1260
        %v1262 = vld [vmem:[#allocation5 + $0x4] ss:$0 sm:$0xff]
        %v1263 = vmul.f32 %v1261, %v1262
        %v1264 = vld [vmem:[#allocation5 + $0x5] ss:$0 sm:$0xff]
        %v1265 = vadd.f32 %v1263, %v1264
        %v1266 = vpack.c.bf16 %v1265, %v1265
        %v1267 = vld [vmem:[#allocation2 + $0x30] sm:$0xff]
        %v1268 = vld [vmem:[#allocation2 + $0x38] sm:$0xff]
        %v1269 = vld [vmem:[#allocation2 + $0xb8] sm:$0xff]
        %v1270 = vld [vmem:[#allocation2 + $0xc0] sm:$0xff]
        %v1271 = vld [vmem:[#allocation2 + $0x140] sm:$0xff]
        %v1272 = vld [vmem:[#allocation2 + $0x148] sm:$0xff]
        %v1273 = vld [vmem:[#allocation2 + $0x1c8] sm:$0xff]
        %v1274 = vld [vmem:[#allocation2 + $0x1d0] sm:$0xff]
        %v1275 = vld [vmem:[#allocation2 + $0x250] sm:$0xff]
        %v1276 = vld [vmem:[#allocation2 + $0x258] sm:$0xff]
        %v1277 = vld [vmem:[#allocation2 + $0x2d8] sm:$0xff]
        %v1278 = vld [vmem:[#allocation2 + $0x2e0] sm:$0xff]
        %v1279 = vld [vmem:[#allocation2 + $0x360] sm:$0xff]
        %v1280 = vld [vmem:[#allocation2 + $0x368] sm:$0xff]
        %v1281 = vld [vmem:[#allocation2 + $0x3e8] sm:$0xff]
        %v1282 = vld [vmem:[#allocation2 + $0x3f0] sm:$0xff]
        %s1283 = scalar_lea.vmem [#allocation5], 1
        %v1284 = vld [vmem:[%s1283] ss:$8 sm:$0xf]
        %v1286 = vperm.slane %v1284, 0
        %v1287 = vperm.slane %v1284, 1
        %v1288 = vperm.slane %v1284, 2
        %v1289 = vperm.slane %v1284, 3
        %v1310 = vunpack.c.l.b16 %v1267
        %v1311 = vunpack.c.h.b16 %v1267
        %v1312 = vunpack.c.l.b16 %v1268
        %v1313 = vunpack.c.h.b16 %v1268
        %v1314 = vunpack.c.l.b16 %v1269
        %v1315 = vunpack.c.h.b16 %v1269
        %v1316 = vunpack.c.l.b16 %v1270
        %v1317 = vunpack.c.h.b16 %v1270
        %v1318 = vunpack.c.l.b16 %v1271
        %v1319 = vunpack.c.h.b16 %v1271
        %v1320 = vunpack.c.l.b16 %v1272
        %v1321 = vunpack.c.h.b16 %v1272
        %v1322 = vunpack.c.l.b16 %v1273
        %v1323 = vunpack.c.h.b16 %v1273
        %v1324 = vunpack.c.l.b16 %v1274
        %v1325 = vunpack.c.h.b16 %v1274
        %v1326 = vunpack.c.l.b16 %v1275
        %v1327 = vunpack.c.h.b16 %v1275
        %v1328 = vunpack.c.l.b16 %v1276
        %v1329 = vunpack.c.h.b16 %v1276
        %v1330 = vunpack.c.l.b16 %v1277
        %v1331 = vunpack.c.h.b16 %v1277
        %v1332 = vunpack.c.l.b16 %v1278
        %v1333 = vunpack.c.h.b16 %v1278
        %v1334 = vunpack.c.l.b16 %v1279
        %v1335 = vunpack.c.h.b16 %v1279
        %v1336 = vunpack.c.l.b16 %v1280
        %v1337 = vunpack.c.h.b16 %v1280
        %v1338 = vunpack.c.l.b16 %v1281
        %v1339 = vunpack.c.h.b16 %v1281
        %v1340 = vunpack.c.l.b16 %v1282
        %v1341 = vunpack.c.h.b16 %v1282
        %v1342 = vpack.c.b16 %v1314, %v1310
        %v1343 = vpack.c.b16 %v1315, %v1311
        %v1344 = vpack.c.b16 %v1316, %v1312
        %v1345 = vpack.c.b16 %v1317, %v1313
        %v1346 = vpack.c.b16 %v1322, %v1318
        %v1347 = vpack.c.b16 %v1323, %v1319
        %v1348 = vpack.c.b16 %v1324, %v1320
        %v1349 = vpack.c.b16 %v1325, %v1321
        %v1350 = vpack.c.b16 %v1330, %v1326
        %v1351 = vpack.c.b16 %v1331, %v1327
        %v1352 = vpack.c.b16 %v1332, %v1328
        %v1353 = vpack.c.b16 %v1333, %v1329
        %v1354 = vpack.c.b16 %v1338, %v1334
        %v1355 = vpack.c.b16 %v1339, %v1335
        %v1356 = vpack.c.b16 %v1340, %v1336
        %v1357 = vpack.c.b16 %v1341, %v1337
        %v1375 = vsel %vm693, %v1266, 0
        %1377 = vmatpush.bf16.msra.mxu0 0
        %1378 = vmatpush.bf16.msra.mxu0 0
        %1379 = vmatpush.bf16.msra.mxu0 0
        %1380 = vmatpush.bf16.msra.mxu0 0
        %1381 = vmatpush.bf16.msra.mxu0 %v1354
        %1382 = vmatpush.bf16.msra.mxu0 %v1350
        %1383 = vmatpush.bf16.msra.mxu0 %v1346
        %1384 = vmatpush.bf16.msra.mxu0 %v1342
        %1385 = vmatmul.bf16.gmra.mxu0 %v1375
        %v1386 = vpop.f32.mrf.mxu0
        %v1387 = vadd.f32 %v1286, %v1386
        %v1388 = vpop.f32.mrf.mxu0
        %1389 = vdwg.mxu0
        %1390 = vmatpush.bf16.msra.mxu0 0
        %1391 = vmatpush.bf16.msra.mxu0 0
        %1392 = vmatpush.bf16.msra.mxu0 0
        %1393 = vmatpush.bf16.msra.mxu0 0
        %1394 = vmatpush.bf16.msra.mxu0 %v1355
        %1395 = vmatpush.bf16.msra.mxu0 %v1351
        %1396 = vmatpush.bf16.msra.mxu0 %v1347
        %1397 = vmatpush.bf16.msra.mxu0 %v1343
        %1398 = vmatmul.bf16.gmra.mxu0 %v1375
        %v1399 = vpop.f32.mrf.mxu0
        %v1400 = vadd.f32 %v1287, %v1399
        %v1401 = vpop.f32.mrf.mxu0
        %1402 = vdwg.mxu0
        %1403 = vmatpush.bf16.msra.mxu0 0
        %1404 = vmatpush.bf16.msra.mxu0 0
        %1405 = vmatpush.bf16.msra.mxu0 0
        %1406 = vmatpush.bf16.msra.mxu0 0
        %1407 = vmatpush.bf16.msra.mxu0 %v1356
        %1408 = vmatpush.bf16.msra.mxu0 %v1352
        %1409 = vmatpush.bf16.msra.mxu0 %v1348
        %1410 = vmatpush.bf16.msra.mxu0 %v1344
        %1411 = vmatmul.bf16.gmra.mxu0 %v1375
        %v1412 = vpop.f32.mrf.mxu0
        %v1413 = vadd.f32 %v1288, %v1412
        %v1414 = vpop.f32.mrf.mxu0
        %1415 = vdwg.mxu0
        %1416 = vmatpush.bf16.msra.mxu0 0
        %1417 = vmatpush.bf16.msra.mxu0 0
        %1418 = vmatpush.bf16.msra.mxu0 0
        %1419 = vmatpush.bf16.msra.mxu0 0
        %1420 = vmatpush.bf16.msra.mxu0 %v1357
        %1421 = vmatpush.bf16.msra.mxu0 %v1353
        %1422 = vmatpush.bf16.msra.mxu0 %v1349
        %1423 = vmatpush.bf16.msra.mxu0 %v1345
        %1424 = vmatmul.bf16.gmra.mxu0 %v1375
        %v1425 = vpop.f32.mrf.mxu0
        %v1426 = vadd.f32 %v1289, %v1425
        %v1427 = vpop.f32.mrf.mxu0
        %1428 = vdwg.mxu0
        %v1429 = vpack.c.bf16 %v372, %v372
        %v1430 = vld [vmem:[#allocation2 + $0x40] sm:$0xff]
        %v1431 = vld [vmem:[#allocation2 + $0x48] sm:$0xff]
        %v1432 = vld [vmem:[#allocation2 + $0x50] sm:$0xff]
        %v1433 = vld [vmem:[#allocation2 + $0x58] sm:$0xff]
        %v1434 = vld [vmem:[#allocation2 + $0xc8] sm:$0xff]
        %v1435 = vld [vmem:[#allocation2 + $0xd0] sm:$0xff]
        %v1436 = vld [vmem:[#allocation2 + $0xd8] sm:$0xff]
        %v1437 = vld [vmem:[#allocation2 + $0xe0] sm:$0xff]
        %v1438 = vld [vmem:[#allocation2 + $0x150] sm:$0xff]
        %v1439 = vld [vmem:[#allocation2 + $0x158] sm:$0xff]
        %v1440 = vld [vmem:[#allocation2 + $0x160] sm:$0xff]
        %v1441 = vld [vmem:[#allocation2 + $0x168] sm:$0xff]
        %v1442 = vld [vmem:[#allocation2 + $0x1d8] sm:$0xff]
        %v1443 = vld [vmem:[#allocation2 + $0x1e0] sm:$0xff]
        %v1444 = vld [vmem:[#allocation2 + $0x1e8] sm:$0xff]
        %v1445 = vld [vmem:[#allocation2 + $0x1f0] sm:$0xff]
        %v1446 = vld [vmem:[#allocation2 + $0x260] sm:$0xff]
        %v1447 = vld [vmem:[#allocation2 + $0x268] sm:$0xff]
        %v1448 = vld [vmem:[#allocation2 + $0x270] sm:$0xff]
        %v1449 = vld [vmem:[#allocation2 + $0x278] sm:$0xff]
        %v1450 = vld [vmem:[#allocation2 + $0x2e8] sm:$0xff]
        %v1451 = vld [vmem:[#allocation2 + $0x2f0] sm:$0xff]
        %v1452 = vld [vmem:[#allocation2 + $0x2f8] sm:$0xff]
        %v1453 = vld [vmem:[#allocation2 + $0x300] sm:$0xff]
        %v1454 = vld [vmem:[#allocation2 + $0x370] sm:$0xff]
        %v1455 = vld [vmem:[#allocation2 + $0x378] sm:$0xff]
        %v1456 = vld [vmem:[#allocation2 + $0x380] sm:$0xff]
        %v1457 = vld [vmem:[#allocation2 + $0x388] sm:$0xff]
        %v1458 = vld [vmem:[#allocation2 + $0x3f8] sm:$0xff]
        %v1459 = vld [vmem:[#allocation2 + $0x400] sm:$0xff]
        %v1460 = vld [vmem:[#allocation2 + $0x408] sm:$0xff]
        %v1461 = vld [vmem:[#allocation2 + $0x410] sm:$0xff]
        %s1462 = scalar_lea.vmem [#allocation5], 2
        %v1463 = vld [vmem:[%s1462] ss:$8 sm:$0xf]
        %v1464 = vld [vmem:[%s1462] ss:$8 sm:$0xf0]
        %v1465 = vor.u32 %v1463, %v1464
        %v1467 = vperm.slane %v1465, 0
        %v1468 = vperm.slane %v1465, 1
        %v1469 = vperm.slane %v1465, 2
        %v1470 = vperm.slane %v1465, 3
        %v1471 = vperm.slane %v1465, 4
        %v1472 = vperm.slane %v1465, 5
        %v1473 = vperm.slane %v1465, 6
        %v1474 = vperm.slane %v1465, 7
        %v1515 = vunpack.c.l.b16 %v1430
        %v1516 = vunpack.c.h.b16 %v1430
        %v1517 = vunpack.c.l.b16 %v1431
        %v1518 = vunpack.c.h.b16 %v1431
        %v1519 = vunpack.c.l.b16 %v1432
        %v1520 = vunpack.c.h.b16 %v1432
        %v1521 = vunpack.c.l.b16 %v1433
        %v1522 = vunpack.c.h.b16 %v1433
        %v1523 = vunpack.c.l.b16 %v1434
        %v1524 = vunpack.c.h.b16 %v1434
        %v1525 = vunpack.c.l.b16 %v1435
        %v1526 = vunpack.c.h.b16 %v1435
        %v1527 = vunpack.c.l.b16 %v1436
        %v1528 = vunpack.c.h.b16 %v1436
        %v1529 = vunpack.c.l.b16 %v1437
        %v1530 = vunpack.c.h.b16 %v1437
        %v1531 = vunpack.c.l.b16 %v1438
        %v1532 = vunpack.c.h.b16 %v1438
        %v1533 = vunpack.c.l.b16 %v1439
        %v1534 = vunpack.c.h.b16 %v1439
        %v1535 = vunpack.c.l.b16 %v1440
        %v1536 = vunpack.c.h.b16 %v1440
        %v1537 = vunpack.c.l.b16 %v1441
        %v1538 = vunpack.c.h.b16 %v1441
        %v1539 = vunpack.c.l.b16 %v1442
        %v1540 = vunpack.c.h.b16 %v1442
        %v1541 = vunpack.c.l.b16 %v1443
        %v1542 = vunpack.c.h.b16 %v1443
        %v1543 = vunpack.c.l.b16 %v1444
        %v1544 = vunpack.c.h.b16 %v1444
        %v1545 = vunpack.c.l.b16 %v1445
        %v1546 = vunpack.c.h.b16 %v1445
        %v1547 = vunpack.c.l.b16 %v1446
        %v1548 = vunpack.c.h.b16 %v1446
        %v1549 = vunpack.c.l.b16 %v1447
        %v1550 = vunpack.c.h.b16 %v1447
        %v1551 = vunpack.c.l.b16 %v1448
        %v1552 = vunpack.c.h.b16 %v1448
        %v1553 = vunpack.c.l.b16 %v1449
        %v1554 = vunpack.c.h.b16 %v1449
        %v1555 = vunpack.c.l.b16 %v1450
        %v1556 = vunpack.c.h.b16 %v1450
        %v1557 = vunpack.c.l.b16 %v1451
        %v1558 = vunpack.c.h.b16 %v1451
        %v1559 = vunpack.c.l.b16 %v1452
        %v1560 = vunpack.c.h.b16 %v1452
        %v1561 = vunpack.c.l.b16 %v1453
        %v1562 = vunpack.c.h.b16 %v1453
        %v1563 = vunpack.c.l.b16 %v1454
        %v1564 = vunpack.c.h.b16 %v1454
        %v1565 = vunpack.c.l.b16 %v1455
        %v1566 = vunpack.c.h.b16 %v1455
        %v1567 = vunpack.c.l.b16 %v1456
        %v1568 = vunpack.c.h.b16 %v1456
        %v1569 = vunpack.c.l.b16 %v1457
        %v1570 = vunpack.c.h.b16 %v1457
        %v1571 = vunpack.c.l.b16 %v1458
        %v1572 = vunpack.c.h.b16 %v1458
        %v1573 = vunpack.c.l.b16 %v1459
        %v1574 = vunpack.c.h.b16 %v1459
        %v1575 = vunpack.c.l.b16 %v1460
        %v1576 = vunpack.c.h.b16 %v1460
        %v1577 = vunpack.c.l.b16 %v1461
        %v1578 = vunpack.c.h.b16 %v1461
        %v1579 = vpack.c.b16 %v1523, %v1515
        %v1580 = vpack.c.b16 %v1524, %v1516
        %v1581 = vpack.c.b16 %v1525, %v1517
        %v1582 = vpack.c.b16 %v1526, %v1518
        %v1583 = vpack.c.b16 %v1527, %v1519
        %v1584 = vpack.c.b16 %v1528, %v1520
        %v1585 = vpack.c.b16 %v1529, %v1521
        %v1586 = vpack.c.b16 %v1530, %v1522
        %v1587 = vpack.c.b16 %v1539, %v1531
        %v1588 = vpack.c.b16 %v1540, %v1532
        %v1589 = vpack.c.b16 %v1541, %v1533
        %v1590 = vpack.c.b16 %v1542, %v1534
        %v1591 = vpack.c.b16 %v1543, %v1535
        %v1592 = vpack.c.b16 %v1544, %v1536
        %v1593 = vpack.c.b16 %v1545, %v1537
        %v1594 = vpack.c.b16 %v1546, %v1538
        %v1595 = vpack.c.b16 %v1555, %v1547
        %v1596 = vpack.c.b16 %v1556, %v1548
        %v1597 = vpack.c.b16 %v1557, %v1549
        %v1598 = vpack.c.b16 %v1558, %v1550
        %v1599 = vpack.c.b16 %v1559, %v1551
        %v1600 = vpack.c.b16 %v1560, %v1552
        %v1601 = vpack.c.b16 %v1561, %v1553
        %v1602 = vpack.c.b16 %v1562, %v1554
        %v1603 = vpack.c.b16 %v1571, %v1563
        %v1604 = vpack.c.b16 %v1572, %v1564
        %v1605 = vpack.c.b16 %v1573, %v1565
        %v1606 = vpack.c.b16 %v1574, %v1566
        %v1607 = vpack.c.b16 %v1575, %v1567
        %v1608 = vpack.c.b16 %v1576, %v1568
        %v1609 = vpack.c.b16 %v1577, %v1569
        %v1610 = vpack.c.b16 %v1578, %v1570
        %v1644 = vsel %vm693, %v1429, 0
        %1646 = vmatpush.bf16.msra.mxu0 0
        %1647 = vmatpush.bf16.msra.mxu0 0
        %1648 = vmatpush.bf16.msra.mxu0 0
        %1649 = vmatpush.bf16.msra.mxu0 0
        %1650 = vmatpush.bf16.msra.mxu0 %v1603
        %1651 = vmatpush.bf16.msra.mxu0 %v1595
        %1652 = vmatpush.bf16.msra.mxu0 %v1587
        %1653 = vmatpush.bf16.msra.mxu0 %v1579
        %1654 = vmatmul.bf16.gmra.mxu0 %v1644
        %v1655 = vpop.f32.mrf.mxu0
        %v1656 = vadd.f32 %v1467, %v1655
        %v1657 = vpop.f32.mrf.mxu0
        %1658 = vdwg.mxu0
        %1659 = vmatpush.bf16.msra.mxu0 0
        %1660 = vmatpush.bf16.msra.mxu0 0
        %1661 = vmatpush.bf16.msra.mxu0 0
        %1662 = vmatpush.bf16.msra.mxu0 0
        %1663 = vmatpush.bf16.msra.mxu0 %v1604
        %1664 = vmatpush.bf16.msra.mxu0 %v1596
        %1665 = vmatpush.bf16.msra.mxu0 %v1588
        %1666 = vmatpush.bf16.msra.mxu0 %v1580
        %1667 = vmatmul.bf16.gmra.mxu0 %v1644
        %v1668 = vpop.f32.mrf.mxu0
        %v1669 = vadd.f32 %v1468, %v1668
        %v1670 = vpop.f32.mrf.mxu0
        %1671 = vdwg.mxu0
        %1672 = vmatpush.bf16.msra.mxu0 0
        %1673 = vmatpush.bf16.msra.mxu0 0
        %1674 = vmatpush.bf16.msra.mxu0 0
        %1675 = vmatpush.bf16.msra.mxu0 0
        %1676 = vmatpush.bf16.msra.mxu0 %v1605
        %1677 = vmatpush.bf16.msra.mxu0 %v1597
        %1678 = vmatpush.bf16.msra.mxu0 %v1589
        %1679 = vmatpush.bf16.msra.mxu0 %v1581
        %1680 = vmatmul.bf16.gmra.mxu0 %v1644
        %v1681 = vpop.f32.mrf.mxu0
        %v1682 = vadd.f32 %v1469, %v1681
        %v1683 = vpop.f32.mrf.mxu0
        %1684 = vdwg.mxu0
        %1685 = vmatpush.bf16.msra.mxu0 0
        %1686 = vmatpush.bf16.msra.mxu0 0
        %1687 = vmatpush.bf16.msra.mxu0 0
        %1688 = vmatpush.bf16.msra.mxu0 0
        %1689 = vmatpush.bf16.msra.mxu0 %v1606
        %1690 = vmatpush.bf16.msra.mxu0 %v1598
        %1691 = vmatpush.bf16.msra.mxu0 %v1590
        %1692 = vmatpush.bf16.msra.mxu0 %v1582
        %1693 = vmatmul.bf16.gmra.mxu0 %v1644
        %v1694 = vpop.f32.mrf.mxu0
        %v1695 = vadd.f32 %v1470, %v1694
        %v1696 = vpop.f32.mrf.mxu0
        %1697 = vdwg.mxu0
        %1698 = vmatpush.bf16.msra.mxu0 0
        %1699 = vmatpush.bf16.msra.mxu0 0
        %1700 = vmatpush.bf16.msra.mxu0 0
        %1701 = vmatpush.bf16.msra.mxu0 0
        %1702 = vmatpush.bf16.msra.mxu0 %v1607
        %1703 = vmatpush.bf16.msra.mxu0 %v1599
        %1704 = vmatpush.bf16.msra.mxu0 %v1591
        %1705 = vmatpush.bf16.msra.mxu0 %v1583
        %1706 = vmatmul.bf16.gmra.mxu0 %v1644
        %v1707 = vpop.f32.mrf.mxu0
        %v1708 = vadd.f32 %v1471, %v1707
        %v1709 = vpop.f32.mrf.mxu0
        %1710 = vdwg.mxu0
        %1711 = vmatpush.bf16.msra.mxu0 0
        %1712 = vmatpush.bf16.msra.mxu0 0
        %1713 = vmatpush.bf16.msra.mxu0 0
        %1714 = vmatpush.bf16.msra.mxu0 0
        %1715 = vmatpush.bf16.msra.mxu0 %v1608
        %1716 = vmatpush.bf16.msra.mxu0 %v1600
        %1717 = vmatpush.bf16.msra.mxu0 %v1592
        %1718 = vmatpush.bf16.msra.mxu0 %v1584
        %1719 = vmatmul.bf16.gmra.mxu0 %v1644
        %v1720 = vpop.f32.mrf.mxu0
        %v1721 = vadd.f32 %v1472, %v1720
        %v1722 = vpop.f32.mrf.mxu0
        %1723 = vdwg.mxu0
        %1724 = vmatpush.bf16.msra.mxu0 0
        %1725 = vmatpush.bf16.msra.mxu0 0
        %1726 = vmatpush.bf16.msra.mxu0 0
        %1727 = vmatpush.bf16.msra.mxu0 0
        %1728 = vmatpush.bf16.msra.mxu0 %v1609
        %1729 = vmatpush.bf16.msra.mxu0 %v1601
        %1730 = vmatpush.bf16.msra.mxu0 %v1593
        %1731 = vmatpush.bf16.msra.mxu0 %v1585
        %1732 = vmatmul.bf16.gmra.mxu0 %v1644
        %v1733 = vpop.f32.mrf.mxu0
        %v1734 = vadd.f32 %v1473, %v1733
        %v1735 = vpop.f32.mrf.mxu0
        %1736 = vdwg.mxu0
        %1737 = vmatpush.bf16.msra.mxu0 0
        %1738 = vmatpush.bf16.msra.mxu0 0
        %1739 = vmatpush.bf16.msra.mxu0 0
        %1740 = vmatpush.bf16.msra.mxu0 0
        %1741 = vmatpush.bf16.msra.mxu0 %v1610
        %1742 = vmatpush.bf16.msra.mxu0 %v1602
        %1743 = vmatpush.bf16.msra.mxu0 %v1594
        %1744 = vmatpush.bf16.msra.mxu0 %v1586
        %1745 = vmatmul.bf16.gmra.mxu0 %v1644
        %v1746 = vpop.f32.mrf.mxu0
        %v1747 = vadd.f32 %v1474, %v1746
        %v1748 = vpop.f32.mrf.mxu0
        %1749 = vdwg.mxu0
        %v1750 = vpack.c.bf16 %v1400, %v1387
        %v1751 = vpack.c.bf16 %v1426, %v1413
        %v1752 = vpack.c.bf16 %v1669, %v1656
        %v1753 = vpack.c.bf16 %v1695, %v1682
        %v1754 = vpack.c.bf16 %v1721, %v1708
        %v1755 = vpack.c.bf16 %v1747, %v1734
        %s1756 = scalar_lea.vmem %s3, %s28
        %v1757 = vld [vmem:[%s1756] sm:$0x1]
        %vm1758 = vcmp.ne.s32.totalorder %v1757, 0
        %v1759 = vsel %vm1758, 1, 0
        %v1760 = vperm.slane %v1759, 0
        %vm1761 = vcmp.eq.s32.totalorder %v1760, 1
        %1762 = vmatpush.bf16.xpose.msra.mxu0 0
        %1763 = vmatpush.bf16.xpose.msra.mxu0 0
        %1764 = vmatpush.bf16.xpose.msra.mxu0 0
        %1765 = vmatpush.bf16.xpose.msra.mxu0 0
        %1766 = vmatpush.bf16.xpose.msra.mxu0 0
        %1767 = vmatpush.bf16.xpose.msra.mxu0 0
        %1768 = vmatpush.bf16.xpose.msra.mxu0 0
        %1769 = vmatpush.bf16.xpose.msra.mxu0 %v1752
        %1770 = vmatmul.bf16.gmra.mxu0 %v1750
        %v1771 = vpop.f32.mrf.mxu0
        %v1772 = vadd.f32 0.0, %v1771
        %v1773 = vpop.f32.mrf.mxu0
        %1774 = vdwg.mxu0
        %v1775 = vsel %vm1761, -1e+09, %v1772
        %v1776 = vsel %vm885, %v1775, -inf
        %1777 = vmax.xlane.f32.xlu0 %v1776
        %v1778 = vpop.xlane.xlu0 %1777
        %v1779 = vsub.f32 %v1775, %v1778
        %v1780 = vmul.f32 %v1779, 1.442695
        %v1781 = vpow.pop %v1780
        %v1782 = vsel %vm885, %v1781, 0.0
        %1783 = vadd.xlane.f32.xlu0 %v1782
        %v1784 = vpop.xlane.xlu0 %1783
        %v1785 = vrcp.pop %v1784
        %v1786 = vmul.f32 %v1781, %v1785
        %v1787 = vpack.c.bf16 %v1786, %v1786
        %v1789 = vsel %vm885, %v1787, 0
        %v1792 = vsel %vm901, %v1754, 0
        %1794 = vmatpush.bf16.msra.mxu0 0
        %1795 = vmatpush.bf16.msra.mxu0 0
        %1796 = vmatpush.bf16.msra.mxu0 0
        %1797 = vmatpush.bf16.msra.mxu0 0
        %1798 = vmatpush.bf16.msra.mxu0 0
        %1799 = vmatpush.bf16.msra.mxu0 0
        %1800 = vmatpush.bf16.msra.mxu0 0
        %1801 = vmatpush.bf16.msra.mxu0 %v1792
        %1802 = vmatmul.bf16.gmra.mxu0 %v1789
        %v1803 = vpop.f32.mrf.mxu0
        %v1804 = vadd.f32 0.0, %v1803
        %v1805 = vpop.f32.mrf.mxu0
        %1806 = vdwg.mxu0
        %v1808 = vunpack.c.h.b16 %v1750
        %v1809 = vpack.c.b16 %v1808, %v1808
        %v1812 = vunpack.c.h.b16 %v1752
        %v1813 = vpack.c.b16 %v1812, %v1812
        %1815 = vmatpush.bf16.xpose.msra.mxu0 0
        %1816 = vmatpush.bf16.xpose.msra.mxu0 0
        %1817 = vmatpush.bf16.xpose.msra.mxu0 0
        %1818 = vmatpush.bf16.xpose.msra.mxu0 0
        %1819 = vmatpush.bf16.xpose.msra.mxu0 0
        %1820 = vmatpush.bf16.xpose.msra.mxu0 0
        %1821 = vmatpush.bf16.xpose.msra.mxu0 0
        %1822 = vmatpush.bf16.xpose.msra.mxu0 %v1813
        %1823 = vmatmul.bf16.gmra.mxu0 %v1809
        %v1824 = vpop.f32.mrf.mxu0
        %v1825 = vadd.f32 0.0, %v1824
        %v1826 = vpop.f32.mrf.mxu0
        %1827 = vdwg.mxu0
        %v1828 = vsel %vm1761, -1e+09, %v1825
        %v1829 = vsel %vm885, %v1828, -inf
        %1830 = vmax.xlane.f32.xlu0 %v1829
        %v1831 = vpop.xlane.xlu0 %1830
        %v1832 = vsub.f32 %v1828, %v1831
        %v1833 = vmul.f32 %v1832, 1.442695
        %v1834 = vpow.pop %v1833
        %v1835 = vsel %vm885, %v1834, 0.0
        %1836 = vadd.xlane.f32.xlu0 %v1835
        %v1837 = vpop.xlane.xlu0 %1836
        %v1838 = vrcp.pop %v1837
        %v1839 = vmul.f32 %v1834, %v1838
        %v1840 = vpack.c.bf16 %v1839, %v1839
        %v1842 = vunpack.c.h.b16 %v1754
        %v1843 = vpack.c.b16 %v1842, %v1842
        %v1845 = vsel %vm885, %v1840, 0
        %v1848 = vsel %vm901, %v1843, 0
        %1850 = vmatpush.bf16.msra.mxu0 0
        %1851 = vmatpush.bf16.msra.mxu0 0
        %1852 = vmatpush.bf16.msra.mxu0 0
        %1853 = vmatpush.bf16.msra.mxu0 0
        %1854 = vmatpush.bf16.msra.mxu0 0
        %1855 = vmatpush.bf16.msra.mxu0 0
        %1856 = vmatpush.bf16.msra.mxu0 0
        %1857 = vmatpush.bf16.msra.mxu0 %v1848
        %1858 = vmatmul.bf16.gmra.mxu0 %v1845
        %v1859 = vpop.f32.mrf.mxu0
        %v1860 = vadd.f32 0.0, %v1859
        %v1861 = vpop.f32.mrf.mxu0
        %1862 = vdwg.mxu0
        %1863 = vmatpush.bf16.xpose.msra.mxu0 0
        %1864 = vmatpush.bf16.xpose.msra.mxu0 0
        %1865 = vmatpush.bf16.xpose.msra.mxu0 0
        %1866 = vmatpush.bf16.xpose.msra.mxu0 0
        %1867 = vmatpush.bf16.xpose.msra.mxu0 0
        %1868 = vmatpush.bf16.xpose.msra.mxu0 0
        %1869 = vmatpush.bf16.xpose.msra.mxu0 0
        %1870 = vmatpush.bf16.xpose.msra.mxu0 %v1753
        %1871 = vmatmul.bf16.gmra.mxu0 %v1751
        %v1872 = vpop.f32.mrf.mxu0
        %v1873 = vadd.f32 0.0, %v1872
        %v1874 = vpop.f32.mrf.mxu0
        %1875 = vdwg.mxu0
        %v1876 = vsel %vm1761, -1e+09, %v1873
        %v1877 = vsel %vm885, %v1876, -inf
        %1878 = vmax.xlane.f32.xlu0 %v1877
        %v1879 = vpop.xlane.xlu0 %1878
        %v1880 = vsub.f32 %v1876, %v1879
        %v1881 = vmul.f32 %v1880, 1.442695
        %v1882 = vpow.pop %v1881
        %v1883 = vsel %vm885, %v1882, 0.0
        %1884 = vadd.xlane.f32.xlu0 %v1883
        %v1885 = vpop.xlane.xlu0 %1884
        %v1886 = vrcp.pop %v1885
        %v1887 = vmul.f32 %v1882, %v1886
        %v1888 = vpack.c.bf16 %v1887, %v1887
        %v1890 = vsel %vm885, %v1888, 0
        %v1893 = vsel %vm901, %v1755, 0
        %1895 = vmatpush.bf16.msra.mxu0 0
        %1896 = vmatpush.bf16.msra.mxu0 0
        %1897 = vmatpush.bf16.msra.mxu0 0
        %1898 = vmatpush.bf16.msra.mxu0 0
        %1899 = vmatpush.bf16.msra.mxu0 0
        %1900 = vmatpush.bf16.msra.mxu0 0
        %1901 = vmatpush.bf16.msra.mxu0 0
        %1902 = vmatpush.bf16.msra.mxu0 %v1893
        %1903 = vmatmul.bf16.gmra.mxu0 %v1890
        %v1904 = vpop.f32.mrf.mxu0
        %v1905 = vadd.f32 0.0, %v1904
        %v1906 = vpop.f32.mrf.mxu0
        %1907 = vdwg.mxu0
        %v1909 = vunpack.c.h.b16 %v1751
        %v1910 = vpack.c.b16 %v1909, %v1909
        %v1913 = vunpack.c.h.b16 %v1753
        %v1914 = vpack.c.b16 %v1913, %v1913
        %1916 = vmatpush.bf16.xpose.msra.mxu0 0
        %1917 = vmatpush.bf16.xpose.msra.mxu0 0
        %1918 = vmatpush.bf16.xpose.msra.mxu0 0
        %1919 = vmatpush.bf16.xpose.msra.mxu0 0
        %1920 = vmatpush.bf16.xpose.msra.mxu0 0
        %1921 = vmatpush.bf16.xpose.msra.mxu0 0
        %1922 = vmatpush.bf16.xpose.msra.mxu0 0
        %1923 = vmatpush.bf16.xpose.msra.mxu0 %v1914
        %1924 = vmatmul.bf16.gmra.mxu0 %v1910
        %v1925 = vpop.f32.mrf.mxu0
        %v1926 = vadd.f32 0.0, %v1925
        %v1927 = vpop.f32.mrf.mxu0
        %1928 = vdwg.mxu0
        %v1929 = vsel %vm1761, -1e+09, %v1926
        %v1930 = vsel %vm885, %v1929, -inf
        %1931 = vmax.xlane.f32.xlu0 %v1930
        %v1932 = vpop.xlane.xlu0 %1931
        %v1933 = vsub.f32 %v1929, %v1932
        %v1934 = vmul.f32 %v1933, 1.442695
        %v1935 = vpow.pop %v1934
        %v1936 = vsel %vm885, %v1935, 0.0
        %1937 = vadd.xlane.f32.xlu0 %v1936
        %v1938 = vpop.xlane.xlu0 %1937
        %v1939 = vrcp.pop %v1938
        %v1940 = vmul.f32 %v1935, %v1939
        %v1941 = vpack.c.bf16 %v1940, %v1940
        %v1943 = vunpack.c.h.b16 %v1755
        %v1944 = vpack.c.b16 %v1943, %v1943
        %v1946 = vsel %vm885, %v1941, 0
        %v1949 = vsel %vm901, %v1944, 0
        %1951 = vmatpush.bf16.msra.mxu0 0
        %1952 = vmatpush.bf16.msra.mxu0 0
        %1953 = vmatpush.bf16.msra.mxu0 0
        %1954 = vmatpush.bf16.msra.mxu0 0
        %1955 = vmatpush.bf16.msra.mxu0 0
        %1956 = vmatpush.bf16.msra.mxu0 0
        %1957 = vmatpush.bf16.msra.mxu0 0
        %1958 = vmatpush.bf16.msra.mxu0 %v1949
        %1959 = vmatmul.bf16.gmra.mxu0 %v1946
        %v1960 = vpop.f32.mrf.mxu0
        %v1961 = vadd.f32 0.0, %v1960
        %v1962 = vpop.f32.mrf.mxu0
        %1963 = vdwg.mxu0
        %1964 = vst.msk [vmem:[%s361] sm:$0xff] %vm885, %v1786
        %1965 = vst.msk [vmem:[%s361 + $0x8] sm:$0xff] %vm885, %v1839
        %1966 = vst.msk [vmem:[%s361 + $0x10] sm:$0xff] %vm885, %v1887
        %1967 = vst.msk [vmem:[%s361 + $0x18] sm:$0xff] %vm885, %v1940
        %v1968 = vpack.c.bf16 %v1804, %v1804
        %v1969 = vpack.c.bf16 %v1860, %v1860
        %v1970 = vpack.c.bf16 %v1905, %v1905
        %v1971 = vpack.c.bf16 %v1961, %v1961
        %v1972 = vld [vmem:[#allocation2 + $0x74] sm:$0xff]
        %v1973 = vld [vmem:[#allocation2 + $0x7c] sm:$0xff]
        %v1974 = vld [vmem:[#allocation2 + $0xfc] sm:$0xff]
        %v1975 = vld [vmem:[#allocation2 + $0x104] sm:$0xff]
        %v1976 = vld [vmem:[#allocation2 + $0x184] sm:$0xff]
        %v1977 = vld [vmem:[#allocation2 + $0x18c] sm:$0xff]
        %v1978 = vld [vmem:[#allocation2 + $0x20c] sm:$0xff]
        %v1979 = vld [vmem:[#allocation2 + $0x214] sm:$0xff]
        %v1980 = vld [vmem:[#allocation2 + $0x294] sm:$0xff]
        %v1981 = vld [vmem:[#allocation2 + $0x29c] sm:$0xff]
        %v1982 = vld [vmem:[#allocation2 + $0x31c] sm:$0xff]
        %v1983 = vld [vmem:[#allocation2 + $0x324] sm:$0xff]
        %v1984 = vld [vmem:[#allocation2 + $0x3a4] sm:$0xff]
        %v1985 = vld [vmem:[#allocation2 + $0x3ac] sm:$0xff]
        %v1986 = vld [vmem:[#allocation2 + $0x42c] sm:$0xff]
        %v1987 = vld [vmem:[#allocation2 + $0x434] sm:$0xff]
        %v1988 = vld [vmem:[#allocation5 + $0x6] ss:$0 sm:$0xff]
        %v2005 = vunpack.c.l.b16 %v1972
        %v2006 = vunpack.c.h.b16 %v1972
        %v2007 = vunpack.c.l.b16 %v1973
        %v2008 = vunpack.c.h.b16 %v1973
        %v2009 = vunpack.c.l.b16 %v1974
        %v2010 = vunpack.c.h.b16 %v1974
        %v2011 = vunpack.c.l.b16 %v1975
        %v2012 = vunpack.c.h.b16 %v1975
        %v2013 = vunpack.c.l.b16 %v1976
        %v2014 = vunpack.c.h.b16 %v1976
        %v2015 = vunpack.c.l.b16 %v1977
        %v2016 = vunpack.c.h.b16 %v1977
        %v2017 = vunpack.c.l.b16 %v1978
        %v2018 = vunpack.c.h.b16 %v1978
        %v2019 = vunpack.c.l.b16 %v1979
        %v2020 = vunpack.c.h.b16 %v1979
        %v2021 = vunpack.c.l.b16 %v1980
        %v2022 = vunpack.c.h.b16 %v1980
        %v2023 = vunpack.c.l.b16 %v1981
        %v2024 = vunpack.c.h.b16 %v1981
        %v2025 = vunpack.c.l.b16 %v1982
        %v2026 = vunpack.c.h.b16 %v1982
        %v2027 = vunpack.c.l.b16 %v1983
        %v2028 = vunpack.c.h.b16 %v1983
        %v2029 = vunpack.c.l.b16 %v1984
        %v2030 = vunpack.c.h.b16 %v1984
        %v2031 = vunpack.c.l.b16 %v1985
        %v2032 = vunpack.c.h.b16 %v1985
        %v2033 = vunpack.c.l.b16 %v1986
        %v2034 = vunpack.c.h.b16 %v1986
        %v2035 = vunpack.c.l.b16 %v1987
        %v2036 = vunpack.c.h.b16 %v1987
        %v2037 = vpack.c.b16 %v2009, %v2005
        %v2038 = vpack.c.b16 %v2010, %v2006
        %v2039 = vpack.c.b16 %v2011, %v2007
        %v2040 = vpack.c.b16 %v2012, %v2008
        %v2041 = vpack.c.b16 %v2017, %v2013
        %v2042 = vpack.c.b16 %v2018, %v2014
        %v2043 = vpack.c.b16 %v2019, %v2015
        %v2044 = vpack.c.b16 %v2020, %v2016
        %v2045 = vpack.c.b16 %v2025, %v2021
        %v2046 = vpack.c.b16 %v2026, %v2022
        %v2047 = vpack.c.b16 %v2027, %v2023
        %v2048 = vpack.c.b16 %v2028, %v2024
        %v2049 = vpack.c.b16 %v2033, %v2029
        %v2050 = vpack.c.b16 %v2034, %v2030
        %v2051 = vpack.c.b16 %v2035, %v2031
        %v2052 = vpack.c.b16 %v2036, %v2032
        %2069 = vmatpush.bf16.xpose.msra.mxu0 0
        %2070 = vmatpush.bf16.xpose.msra.mxu0 0
        %2071 = vmatpush.bf16.xpose.msra.mxu0 0
        %2072 = vmatpush.bf16.xpose.msra.mxu0 0
        %2073 = vmatpush.bf16.xpose.msra.mxu0 %v2049
        %2074 = vmatpush.bf16.xpose.msra.mxu0 %v2045
        %2075 = vmatpush.bf16.xpose.msra.mxu0 %v2041
        %2076 = vmatpush.bf16.xpose.msra.mxu0 %v2037
        %2077 = vmatmul.bf16.gmra.mxu0 %v1968
        %v2078 = vpop.f32.mrf.mxu0
        %v2079 = vadd.f32 %v1988, %v2078
        %v2080 = vpop.f32.mrf.mxu0
        %2081 = vdwg.mxu0
        %2082 = vmatpush.bf16.xpose.msra.mxu0 0
        %2083 = vmatpush.bf16.xpose.msra.mxu0 0
        %2084 = vmatpush.bf16.xpose.msra.mxu0 0
        %2085 = vmatpush.bf16.xpose.msra.mxu0 0
        %2086 = vmatpush.bf16.xpose.msra.mxu0 %v2050
        %2087 = vmatpush.bf16.xpose.msra.mxu0 %v2046
        %2088 = vmatpush.bf16.xpose.msra.mxu0 %v2042
        %2089 = vmatpush.bf16.xpose.msra.mxu0 %v2038
        %2090 = vmatmul.bf16.gmra.mxu0 %v1969
        %v2091 = vpop.f32.mrf.mxu0
        %v2092 = vadd.f32 %v2079, %v2091
        %v2093 = vpop.f32.mrf.mxu0
        %2094 = vdwg.mxu0
        %2095 = vmatpush.bf16.xpose.msra.mxu0 0
        %2096 = vmatpush.bf16.xpose.msra.mxu0 0
        %2097 = vmatpush.bf16.xpose.msra.mxu0 0
        %2098 = vmatpush.bf16.xpose.msra.mxu0 0
        %2099 = vmatpush.bf16.xpose.msra.mxu0 %v2051
        %2100 = vmatpush.bf16.xpose.msra.mxu0 %v2047
        %2101 = vmatpush.bf16.xpose.msra.mxu0 %v2043
        %2102 = vmatpush.bf16.xpose.msra.mxu0 %v2039
        %2103 = vmatmul.bf16.gmra.mxu0 %v1970
        %v2104 = vpop.f32.mrf.mxu0
        %v2105 = vadd.f32 %v2092, %v2104
        %v2106 = vpop.f32.mrf.mxu0
        %2107 = vdwg.mxu0
        %2108 = vmatpush.bf16.xpose.msra.mxu0 0
        %2109 = vmatpush.bf16.xpose.msra.mxu0 0
        %2110 = vmatpush.bf16.xpose.msra.mxu0 0
        %2111 = vmatpush.bf16.xpose.msra.mxu0 0
        %2112 = vmatpush.bf16.xpose.msra.mxu0 %v2052
        %2113 = vmatpush.bf16.xpose.msra.mxu0 %v2048
        %2114 = vmatpush.bf16.xpose.msra.mxu0 %v2044
        %2115 = vmatpush.bf16.xpose.msra.mxu0 %v2040
        %2116 = vmatmul.bf16.gmra.mxu0 %v1971
        %v2117 = vpop.f32.mrf.mxu0
        %v2118 = vadd.f32 %v2105, %v2117
        %v2119 = vpop.f32.mrf.mxu0
        %2120 = vdwg.mxu0
        %v2121 = vadd.f32 %v1265, %v2118
        %v2122 = vsel %vm693, %v2121, 0.0
        %2123 = vadd.xlane.f32.xlu0 %v2122
        %v2124 = vpop.xlane.xlu0 %2123
        %v2125 = vmul.f32 %v2124, %v1242
        %v2126 = vsub.f32 %v2121, %v2125
        %v2127 = vmul.f32 %v2126, %v2126
        %v2128 = vsel %vm693, %v2127, 0.0
        %2129 = vadd.xlane.f32.xlu0 %v2128
        %v2130 = vpop.xlane.xlu0 %2129
        %v2131 = vmul.f32 %v2130, %v1242
        %v2132 = vadd.f32 %v2131, 1e-12
        %v2133 = vrsqrt.pop %v2132
        %v2134 = vmul.f32 %v2133, %v2132
        %v2135 = vmul.f32 %v2134, %v2133
        %v2136 = vmul.f32 0.5, %v2135
        %v2137 = vsub.f32 1.5, %v2136
        %v2138 = vmul.f32 %v2133, %v2137
        %vm2139 = vweird.f32 %v2132
        %vm2140 = vweird.f32 %v2133
        %vm2141 = vmor %vm2139, %vm2140
        %v2142 = vsel %vm2141, %v2133, %v2138
        %v2143 = vmul.f32 %v2126, %v2142
        %v2144 = vld [vmem:[#allocation5 + $0x7] ss:$0 sm:$0xff]
        %v2145 = vmul.f32 %v2143, %v2144
        %v2146 = vld [vmem:[#allocation5 + $0x60] ss:$0 sm:$0xff]
        %v2147 = vadd.f32 %v2145, %v2146
        %v2148 = vpack.c.bf16 %v2147, %v2147
        %v2149 = vld [vmem:[#allocation2 + $0x60] sm:$0xf]
        %v2150 = vld [vmem:[#allocation2 + $0xe8] sm:$0xf]
        %v2151 = vld [vmem:[#allocation2 + $0x170] sm:$0xf]
        %v2152 = vld [vmem:[#allocation2 + $0x1f8] sm:$0xf]
        %v2153 = vld [vmem:[#allocation2 + $0x280] sm:$0xf]
        %v2154 = vld [vmem:[#allocation2 + $0x308] sm:$0xf]
        %v2155 = vld [vmem:[#allocation2 + $0x390] sm:$0xf]
        %v2156 = vld [vmem:[#allocation2 + $0x418] sm:$0xf]
        %v2157 = vld [vmem:[#allocation5 + $0x61] ss:$0 sm:$0xff]
        %v2166 = vunpack.c.l.b16 %v2149
        %v2167 = vunpack.c.l.b16 %v2150
        %v2168 = vunpack.c.l.b16 %v2151
        %v2169 = vunpack.c.l.b16 %v2152
        %v2170 = vunpack.c.l.b16 %v2153
        %v2171 = vunpack.c.l.b16 %v2154
        %v2172 = vunpack.c.l.b16 %v2155
        %v2173 = vunpack.c.l.b16 %v2156
        %v2174 = vpack.c.b16 %v2167, %v2166
        %v2175 = vpack.c.b16 %v2169, %v2168
        %v2176 = vpack.c.b16 %v2171, %v2170
        %v2177 = vpack.c.b16 %v2173, %v2172
        %v2183 = vsel %vm693, %v2148, 0
        %2185 = vmatpush.bf16.msra.mxu0 0
        %2186 = vmatpush.bf16.msra.mxu0 0
        %2187 = vmatpush.bf16.msra.mxu0 0
        %2188 = vmatpush.bf16.msra.mxu0 0
        %2189 = vmatpush.bf16.msra.mxu0 %v2177
        %2190 = vmatpush.bf16.msra.mxu0 %v2176
        %2191 = vmatpush.bf16.msra.mxu0 %v2175
        %2192 = vmatpush.bf16.msra.mxu0 %v2174
        %2193 = vmatmul.bf16.gmra.mxu0 %v2183
        %v2194 = vpop.f32.mrf.mxu0
        %v2195 = vadd.f32 %v2157, %v2194
        %v2196 = vpop.f32.mrf.mxu0
        %2197 = vdwg.mxu0
        %v2198 = vmul.f32 %v2195, 0.5
        %v2199 = vmul.f32 %v2195, 0.044715
        %v2200 = vmul.f32 %v2199, %v2195
        %v2201 = vmul.f32 %v2200, %v2195
        %v2202 = vadd.f32 %v2195, %v2201
        %v2203 = vmul.f32 %v2202, 0.7978846
        %v2204 = vtanh.pop %v2203
        %v2205 = vadd.f32 %v2204, 1.0
        %v2206 = vmul.f32 %v2198, %v2205
        %v2207 = vpack.c.bf16 %v2206, %v2206
        %v2208 = vld [vmem:[#allocation2 + $0x84] sm:$0xf]
        %v2209 = vld [vmem:[#allocation2 + $0x10c] sm:$0xf]
        %v2210 = vld [vmem:[#allocation2 + $0x194] sm:$0xf]
        %v2211 = vld [vmem:[#allocation2 + $0x21c] sm:$0xf]
        %v2212 = vld [vmem:[#allocation2 + $0x2a4] sm:$0xf]
        %v2213 = vld [vmem:[#allocation2 + $0x32c] sm:$0xf]
        %v2214 = vld [vmem:[#allocation2 + $0x3b4] sm:$0xf]
        %v2215 = vld [vmem:[#allocation2 + $0x43c] sm:$0xf]
        %v2216 = vld [vmem:[#allocation5 + $0x62] ss:$0 sm:$0xff]
        %v2225 = vunpack.c.l.b16 %v2208
        %v2226 = vunpack.c.l.b16 %v2209
        %v2227 = vunpack.c.l.b16 %v2210
        %v2228 = vunpack.c.l.b16 %v2211
        %v2229 = vunpack.c.l.b16 %v2212
        %v2230 = vunpack.c.l.b16 %v2213
        %v2231 = vunpack.c.l.b16 %v2214
        %v2232 = vunpack.c.l.b16 %v2215
        %v2233 = vpack.c.b16 %v2226, %v2225
        %v2234 = vpack.c.b16 %v2228, %v2227
        %v2235 = vpack.c.b16 %v2230, %v2229
        %v2236 = vpack.c.b16 %v2232, %v2231
        %2241 = vmatpush.bf16.xpose.msra.mxu0 0
        %2242 = vmatpush.bf16.xpose.msra.mxu0 0
        %2243 = vmatpush.bf16.xpose.msra.mxu0 0
        %2244 = vmatpush.bf16.xpose.msra.mxu0 0
        %2245 = vmatpush.bf16.xpose.msra.mxu0 %v2236
        %2246 = vmatpush.bf16.xpose.msra.mxu0 %v2235
        %2247 = vmatpush.bf16.xpose.msra.mxu0 %v2234
        %2248 = vmatpush.bf16.xpose.msra.mxu0 %v2233
        %2249 = vmatmul.bf16.gmra.mxu0 %v2207
        %v2250 = vpop.f32.mrf.mxu0
        %v2251 = vadd.f32 %v2216, %v2250
        %v2252 = vpop.f32.mrf.mxu0
        %2253 = vdwg.mxu0
        %v2254 = vadd.f32 %v2147, %v2251
        %v2255 = vsel %vm693, %v2254, 0.0
        %2256 = vadd.xlane.f32.xlu0 %v2255
        %v2257 = vpop.xlane.xlu0 %2256
        %v2258 = vmul.f32 %v2257, %v1242
        %v2259 = vsub.f32 %v2254, %v2258
        %v2260 = vmul.f32 %v2259, %v2259
        %v2261 = vsel %vm693, %v2260, 0.0
        %2262 = vadd.xlane.f32.xlu0 %v2261
        %v2263 = vpop.xlane.xlu0 %2262
        %v2264 = vmul.f32 %v2263, %v1242
        %v2265 = vadd.f32 %v2264, 1e-12
        %v2266 = vrsqrt.pop %v2265
        %v2267 = vmul.f32 %v2266, %v2265
        %v2268 = vmul.f32 %v2267, %v2266
        %v2269 = vmul.f32 0.5, %v2268
        %v2270 = vsub.f32 1.5, %v2269
        %v2271 = vmul.f32 %v2266, %v2270
        %vm2272 = vweird.f32 %v2265
        %vm2273 = vweird.f32 %v2266
        %vm2274 = vmor %vm2272, %vm2273
        %v2275 = vsel %vm2274, %v2266, %v2271
        %v2276 = vmul.f32 %v2259, %v2275
        %v2277 = vld [vmem:[#allocation5 + $0x63] ss:$0 sm:$0xff]
        %v2278 = vmul.f32 %v2276, %v2277
        %v2279 = vld [vmem:[#allocation5 + $0x64] ss:$0 sm:$0xff]
        %v2280 = vadd.f32 %v2278, %v2279
        %2281 = vst.msk [vmem:[%s347] sm:$0xff] %vm693, %v2280
        %s2282 = sand.u32 %s172, 1
        %s2283 = scalar_lea.sflag [#allocation4], %s2282
        %s2284 = sand.u32 %s172, 1
        %s2285 = smul.addr %s2284, 8
        %s2286 = scalar_lea.vmem [#allocation7], %s2285
        %s2287 = sand.u32 %s28, 1
        %s2288 = scalar_lea.sflag [#allocation9], %s2287
        %s2289 = sand.u32 %s198, 1
        %s2290 = smul.addr %s2289, 32
        %s2291 = scalar_lea.vmem [#allocation8], %s2290
        %s2292 = sand.u32 %s28, 1
        %s2293 = scalar_lea.sflag [#allocation9], %s2292
        %s2294 = sand.u32 %s224, 1
        %s2295 = smul.addr %s2294, 32
        %s2296 = scalar_lea.vmem [#allocation10], %s2295
        // Predicated region
        $region53: #{decoder_forward_pallas.3} parent=43 // pred_check
          %p2297 = pneg %p182
        $region54: #{decoder_forward_pallas.3} parent=43 // pred_check_branch
          %2299 = sbr.rel (%p2297) target = $region56
        $region55: #{decoder_forward_pallas.3} parent=43 // pred_region
          %2301 = vsyncadd %s2283, 0
          %s2302 = smul.addr %s28, 8
          %s2303 = scalar_lea.hbm %s6, %s2302
          %s2305 = sshll.u32 %s2286, 4
          %s2306 = int_to_ptr.vmem [resolvable:$true] %s2305
          %s2307 = sshll.u32 %s2303, 4
          %s2308 = int_to_ptr.hbm [resolvable:$true] %s2307
          %2310 = dma.vmem_to_hbm [thread:$0]  %s2306, 128, %s2308, %s2283
        $region56: #{decoder_forward_pallas.3} parent=43 // pred_fallthru
          _
        // Predicated region
        $region57: #{decoder_forward_pallas.3} parent=43 // pred_check
          %p2311 = pneg %p208
        $region58: #{decoder_forward_pallas.3} parent=43 // pred_check_branch
          %2313 = sbr.rel (%p2311) target = $region60
        $region59: #{decoder_forward_pallas.3} parent=43 // pred_region
          %2315 = vsyncadd %s2288, 0
          %s2316 = smul.addr %s28, 4
          %s2317 = smul.addr %s2316, 8
          %s2318 = scalar_lea.hbm %s7, %s2317
          %s2319 = sshll.u32 %s2291, 4
          %s2320 = int_to_ptr.vmem [resolvable:$true] %s2319
          %s2321 = sshll.u32 %s2318, 4
          %s2322 = int_to_ptr.hbm [resolvable:$true] %s2321
          %2327 = dma.vmem_to_hbm [thread:$0]  %s2320, 512, %s2322, %s2288, 128, 128, 8
        $region60: #{decoder_forward_pallas.3} parent=43 // pred_fallthru
          _
        // Predicated region
        $region61: #{decoder_forward_pallas.3} parent=43 // pred_check
          %p2328 = pneg %p234
        $region62: #{decoder_forward_pallas.3} parent=43 // pred_check_branch
          %2330 = sbr.rel (%p2328) target = $region64
        $region63: #{decoder_forward_pallas.3} parent=43 // pred_region
          %2332 = vsyncadd %s2293, 0
          %s2333 = smul.addr %s28, 4
          %s2334 = smul.addr %s2333, 8
          %s2335 = scalar_lea.hbm %s8, %s2334
          %s2336 = sshll.u32 %s2296, 4
          %s2337 = int_to_ptr.vmem [resolvable:$true] %s2336
          %s2338 = sshll.u32 %s2335, 4
          %s2339 = int_to_ptr.hbm [resolvable:$true] %s2338
          %2344 = dma.vmem_to_hbm [thread:$0]  %s2337, 512, %s2339, %s2293, 128, 128, 8
        $region64: #{decoder_forward_pallas.3} parent=43 // pred_fallthru
          _
      $region44: #{decoder_forward_pallas.3} parent=5 // pred_fallthru
        _
      %p2345 = scmp.le.s32.totalorder 2, %s23
      // Predicated region
      $region65: #{decoder_forward_pallas.3} parent=5 // pred_check
        %p2346 = pneg %p2345
      $region66: #{decoder_forward_pallas.3} parent=5 // pred_check_branch
        %2348 = sbr.rel (%p2346) target = $region68
      $region67: #{decoder_forward_pallas.3} parent=5 // pred_region
        %s2349 = ssub.s32 %s23, 2
        // Predicated region
        $region69: #{decoder_forward_pallas.3} parent=67 // pred_check
          %p2350 = pneg %p188
        $region70: #{decoder_forward_pallas.3} parent=67 // pred_check_branch
          %2352 = sbr.rel (%p2350) target = $region72
        $region71: #{decoder_forward_pallas.3} parent=67 // pred_region
          %s2353 = sand.u32 %s173, 1
          %s2354 = scalar_lea.sflag [#allocation4], %s2353
          %s2355 = sand.u32 %s173, 1
          %s2356 = smul.addr %s2355, 8
          %s2357 = scalar_lea.vmem [#allocation7], %s2356
          %2359 = dma.done %s2354, 128
        $region72: #{decoder_forward_pallas.3} parent=67 // pred_fallthru
          _
        // Predicated region
        $region73: #{decoder_forward_pallas.3} parent=67 // pred_check
          %p2360 = pneg %p214
        $region74: #{decoder_forward_pallas.3} parent=67 // pred_check_branch
          %2362 = sbr.rel (%p2360) target = $region76
        $region75: #{decoder_forward_pallas.3} parent=67 // pred_region
          %s2363 = sand.u32 %s29, 1
          %s2364 = scalar_lea.sflag [#allocation9], %s2363
          %s2365 = sand.u32 %s199, 1
          %s2366 = smul.addr %s2365, 32
          %s2367 = scalar_lea.vmem [#allocation8], %s2366
          %2369 = dma.done %s2364, 512
        $region76: #{decoder_forward_pallas.3} parent=67 // pred_fallthru
          _
        // Predicated region
        $region77: #{decoder_forward_pallas.3} parent=67 // pred_check
          %p2370 = pneg %p240
        $region78: #{decoder_forward_pallas.3} parent=67 // pred_check_branch
          %2372 = sbr.rel (%p2370) target = $region80
        $region79: #{decoder_forward_pallas.3} parent=67 // pred_region
          %s2373 = sand.u32 %s29, 1
          %s2374 = scalar_lea.sflag [#allocation9], %s2373
          %s2375 = sand.u32 %s225, 1
          %s2376 = smul.addr %s2375, 32
          %s2377 = scalar_lea.vmem [#allocation10], %s2376
          %2379 = dma.done %s2374, 512
        $region80: #{decoder_forward_pallas.3} parent=67 // pred_fallthru
          _
      $region68: #{decoder_forward_pallas.3} parent=5 // pred_fallthru
        _
    $region6: #{decoder_forward_pallas.3} parent=1 // loop_footer
      %s27 = sadd.s32 1, %s23
    $region7: #{decoder_forward_pallas.3} parent=1 // loop_footer_branch
      %22 = sbr.rel target = $region3
    $region8: #{decoder_forward_pallas.3} parent=1 // loop_exit
      _
    %2380 = vsyncpa [#allocation3], 1
    %s2381 = scalar_lea.sflag [#allocation3], 1
    %2382 = vsyncpa %s2381, 1
    %2383 = vsyncpa [#allocation6], 1
    %2384 = vsyncpa [#allocation4], 1
    %s2385 = scalar_lea.sflag [#allocation4], 1
    %2386 = vsyncpa %s2385, 1
    %2387 = vsyncpa [#allocation9], 1
    %s2388 = scalar_lea.sflag [#allocation9], 1
    %2389 = vsyncpa %s2388, 1

// kernel: decoder_forward_pallas.2
$region0: #{decoder_forward_pallas.2}
  #allocation0 [shape = 'u32[]', space=smem, size = 0x4, offset = 0x4, fixed_abs, tag = 'smem constant byte address 0x4 - core index']
  #allocation1 [shape = 'u32[72,128]{1,0:T(1,128)}', space=vmem, size = 0x9000, scoped, tag = 'internal scratch']
  %s0 = inlined_call_operand.vmem [shape: f32[16,64], index: 0, kind: input, shape index: {}]
  %s1 = inlined_call_operand.vmem [shape: f32[16,64], index: 1, kind: input, shape index: {}]
  %s2 = inlined_call_operand.vmem [shape: s32[2,8], index: 2, kind: input, shape index: {}]
  %s3 = inlined_call_operand.vmem [shape: s32[2,8], index: 3, kind: input, shape index: {}]
  %s4 = inlined_call_operand.hbm [shape: bf16[64,4352], index: 4, kind: input, shape index: {}]
  %s5 = inlined_call_operand.vmem [shape: f32[13,1536], index: 5, kind: input, shape index: {}]
  %s6 = inlined_call_operand.vmem [shape: f32[16,64], index: 6, kind: output, shape index: {0}]
  %s7 = inlined_call_operand.hbm [shape: f32[2,4,8,8], index: 7, kind: output, shape index: {1}]
  %s8 = inlined_call_operand.hbm [shape: f32[2,4,8,8], index: 8, kind: output, shape index: {2}]
  %9 = xla_tuple %s6, %s7, %s8
  %s10 = sld [smem:[#allocation0]]
  $region77: #{decoder_forward_pallas.2} parent=0
    _
  %s12 = ssub.s32 1, %s10
  %s13 = scalar_select 0, %s12, %s10
  $region1: #{decoder_forward_pallas.2} parent=0
    #allocation2 [shape = 'u8[557056]{0}', space=vmem, size = 0x88000, scoped, tag = 'input window, operand 4, single buffered']
    #allocation3 [shape = 's32[2]{0}', space=sflag, size = 0x8, scoped, tag = 'scoped memory for decoder_forward_pallas.2']
    #allocation4 [shape = 's32[2]{0}', space=sflag, size = 0x8, scoped, tag = 'scoped memory for decoder_forward_pallas.2']
    #allocation5 [shape = 'u8[32768]{0}', space=vmem, size = 0x8000, scoped, tag = 'output window, operand 1']
    #allocation6 [shape = 'u8[32768]{0}', space=vmem, size = 0x8000, scoped, tag = 'output window, operand 2']
    #allocation7 [shape = 's32[2]{0}', space=sflag, size = 0x8, scoped, tag = 'scoped memory for decoder_forward_pallas.2']
    %14 = vsyncpa [#allocation3], 0
    %15 = vsyncpa [#allocation4], 0
    %s16 = scalar_lea.sflag [#allocation4], 1
    %17 = vsyncpa %s16, 0
    %18 = vsyncpa [#allocation7], 0
    %s19 = scalar_lea.sflag [#allocation7], 1
    %20 = vsyncpa %s19, 0
    loop: start=0, step=1, limit=4
    $region2: #{decoder_forward_pallas.2} parent=1 // loop_pre_header
      _
    $region3: #{decoder_forward_pallas.2} parent=1 // loop_header
      %s22 = sphi 0, %s26
      %p23 = scmp.ge.s32.totalorder %s22, 4
      %s32 = sphi 0, %s34
      %s35 = sphi 0, %s32
      %s36 = sphi 0, %s35
      %s52 = sphi 0, %s36
      %s58 = sphi 0, %s60
      %s61 = sphi 0, %s58
      %s62 = sphi 0, %s61
      %s78 = sphi 0, %s62
      %s82 = sphi 0, %s82
      %s84 = sphi 0, %s82
      %s85 = sphi 0, %s84
      %s99 = sphi 0, %s85
      %s103 = sphi 0, %s103
      %s105 = sphi 0, %s103
      %s106 = sphi 0, %s105
      %s120 = sphi 0, %s106
      %s124 = sphi 0, %s124
      %s126 = sphi 0, %s124
      %s127 = sphi 0, %s126
      %s141 = sphi 0, %s127
      %s145 = sphi 0, %s145
      %s147 = sphi 0, %s145
      %s148 = sphi 0, %s147
      %s162 = sphi 0, %s148
      %s168 = sphi 0, %s170
      %s171 = sphi 0, %s168
      %s172 = sphi 0, %s171
      %s188 = sphi 0, %s172
      %s194 = sphi 0, %s196
      %s197 = sphi 0, %s194
      %s198 = sphi 0, %s197
      %s214 = sphi 0, %s198
      %s220 = sphi 0, %s222
      %s223 = sphi 0, %s220
      %s224 = sphi 0, %s223
      %s240 = sphi 0, %s224
    $region4: #{decoder_forward_pallas.2} parent=1 // loop_header_branch
      %25 = sbr.rel (%p23) target = $region8
    $region5: #{decoder_forward_pallas.2} parent=1 // loop_body
      %s27 = ssub.s32 %s22, 1
      %s28 = ssub.s32 %s22, 2
      %s29 = sadd.s32 %s22, 1
      %s30 = ssub.s32 %s22, %s29
      %p31 = scmp.eq.s32.totalorder %s30, 0
      %s33 = sadd.s32 %s32, 1
      %s34 = scalar_select %p31, %s32, %s33
      %p37 = pneg %p31
      %p38 = scmp.eq.s32.totalorder %s22, 1
      %p39 = por %p37, %p38
      %p40 = scmp.ne.s32.totalorder %s32, %s35
      %p41 = scmp.eq.s32.totalorder %s22, 0
      %p42 = por %p40, %p41
      %p43 = scmp.ne.s32.totalorder %s32, %s35
      %p44 = scmp.eq.s32.totalorder %s27, 1
      %p45 = por %p43, %p44
      %p46 = scmp.ne.s32.totalorder %s35, %s36
      %p47 = scmp.eq.s32.totalorder %s27, 0
      %p48 = por %p46, %p47
      %p49 = scmp.ne.s32.totalorder %s35, %s36
      %p50 = scmp.eq.s32.totalorder %s28, 1
      %p51 = por %p49, %p50
      %p53 = scmp.ne.s32.totalorder %s36, %s52
      %p54 = scmp.eq.s32.totalorder %s28, 0
      %p55 = por %p53, %p54
      %s56 = ssub.s32 %s22, %s29
      %p57 = scmp.eq.s32.totalorder %s56, 0
      %s59 = sadd.s32 %s58, 1
      %s60 = scalar_select %p57, %s58, %s59
      %p63 = pneg %p57
      %p64 = scmp.eq.s32.totalorder %s22, 1
      %p65 = por %p63, %p64
      %p66 = scmp.ne.s32.totalorder %s58, %s61
      %p67 = scmp.eq.s32.totalorder %s22, 0
      %p68 = por %p66, %p67
      %p69 = scmp.ne.s32.totalorder %s58, %s61
      %p70 = scmp.eq.s32.totalorder %s27, 1
      %p71 = por %p69, %p70
      %p72 = scmp.ne.s32.totalorder %s61, %s62
      %p73 = scmp.eq.s32.totalorder %s27, 0
      %p74 = por %p72, %p73
      %p75 = scmp.ne.s32.totalorder %s61, %s62
      %p76 = scmp.eq.s32.totalorder %s28, 1
      %p77 = por %p75, %p76
      %p79 = scmp.ne.s32.totalorder %s62, %s78
      %p80 = scmp.eq.s32.totalorder %s28, 0
      %p81 = por %p79, %p80
      %s83 = sadd.s32 %s82, 1
      %p86 = scmp.eq.s32.totalorder %s22, 1
      %p87 = scmp.ne.s32.totalorder %s82, %s84
      %p88 = scmp.eq.s32.totalorder %s22, 0
      %p89 = por %p87, %p88
      %p90 = scmp.ne.s32.totalorder %s82, %s84
      %p91 = scmp.eq.s32.totalorder %s27, 1
      %p92 = por %p90, %p91
      %p93 = scmp.ne.s32.totalorder %s84, %s85
      %p94 = scmp.eq.s32.totalorder %s27, 0
      %p95 = por %p93, %p94
      %p96 = scmp.ne.s32.totalorder %s84, %s85
      %p97 = scmp.eq.s32.totalorder %s28, 1
      %p98 = por %p96, %p97
      %p100 = scmp.ne.s32.totalorder %s85, %s99
      %p101 = scmp.eq.s32.totalorder %s28, 0
      %p102 = por %p100, %p101
      %s104 = sadd.s32 %s103, 1
      %p107 = scmp.eq.s32.totalorder %s22, 1
      %p108 = scmp.ne.s32.totalorder %s103, %s105
      %p109 = scmp.eq.s32.totalorder %s22, 0
      %p110 = por %p108, %p109
      %p111 = scmp.ne.s32.totalorder %s103, %s105
      %p112 = scmp.eq.s32.totalorder %s27, 1
      %p113 = por %p111, %p112
      %p114 = scmp.ne.s32.totalorder %s105, %s106
      %p115 = scmp.eq.s32.totalorder %s27, 0
      %p116 = por %p114, %p115
      %p117 = scmp.ne.s32.totalorder %s105, %s106
      %p118 = scmp.eq.s32.totalorder %s28, 1
      %p119 = por %p117, %p118
      %p121 = scmp.ne.s32.totalorder %s106, %s120
      %p122 = scmp.eq.s32.totalorder %s28, 0
      %p123 = por %p121, %p122
      %s125 = sadd.s32 %s124, 1
      %p128 = scmp.eq.s32.totalorder %s22, 1
      %p129 = scmp.ne.s32.totalorder %s124, %s126
      %p130 = scmp.eq.s32.totalorder %s22, 0
      %p131 = por %p129, %p130
      %p132 = scmp.ne.s32.totalorder %s124, %s126
      %p133 = scmp.eq.s32.totalorder %s27, 1
      %p134 = por %p132, %p133
      %p135 = scmp.ne.s32.totalorder %s126, %s127
      %p136 = scmp.eq.s32.totalorder %s27, 0
      %p137 = por %p135, %p136
      %p138 = scmp.ne.s32.totalorder %s126, %s127
      %p139 = scmp.eq.s32.totalorder %s28, 1
      %p140 = por %p138, %p139
      %p142 = scmp.ne.s32.totalorder %s127, %s141
      %p143 = scmp.eq.s32.totalorder %s28, 0
      %p144 = por %p142, %p143
      %s146 = sadd.s32 %s145, 1
      %p149 = scmp.eq.s32.totalorder %s22, 1
      %p150 = scmp.ne.s32.totalorder %s145, %s147
      %p151 = scmp.eq.s32.totalorder %s22, 0
      %p152 = por %p150, %p151
      %p153 = scmp.ne.s32.totalorder %s145, %s147
      %p154 = scmp.eq.s32.totalorder %s27, 1
      %p155 = por %p153, %p154
      %p156 = scmp.ne.s32.totalorder %s147, %s148
      %p157 = scmp.eq.s32.totalorder %s27, 0
      %p158 = por %p156, %p157
      %p159 = scmp.ne.s32.totalorder %s147, %s148
      %p160 = scmp.eq.s32.totalorder %s28, 1
      %p161 = por %p159, %p160
      %p163 = scmp.ne.s32.totalorder %s148, %s162
      %p164 = scmp.eq.s32.totalorder %s28, 0
      %p165 = por %p163, %p164
      %s166 = ssub.s32 %s22, %s29
      %p167 = scmp.eq.s32.totalorder %s166, 0
      %s169 = sadd.s32 %s168, 1
      %s170 = scalar_select %p167, %s168, %s169
      %p173 = pneg %p167
      %p174 = scmp.eq.s32.totalorder %s22, 1
      %p175 = por %p173, %p174
      %p176 = scmp.ne.s32.totalorder %s168, %s171
      %p177 = scmp.eq.s32.totalorder %s22, 0
      %p178 = por %p176, %p177
      %p179 = scmp.ne.s32.totalorder %s168, %s171
      %p180 = scmp.eq.s32.totalorder %s27, 1
      %p181 = por %p179, %p180
      %p182 = scmp.ne.s32.totalorder %s171, %s172
      %p183 = scmp.eq.s32.totalorder %s27, 0
      %p184 = por %p182, %p183
      %p185 = scmp.ne.s32.totalorder %s171, %s172
      %p186 = scmp.eq.s32.totalorder %s28, 1
      %p187 = por %p185, %p186
      %p189 = scmp.ne.s32.totalorder %s172, %s188
      %p190 = scmp.eq.s32.totalorder %s28, 0
      %p191 = por %p189, %p190
      %s192 = ssub.s32 %s22, %s29
      %p193 = scmp.eq.s32.totalorder %s192, 0
      %s195 = sadd.s32 %s194, 1
      %s196 = scalar_select %p193, %s194, %s195
      %p199 = pneg %p193
      %p200 = scmp.eq.s32.totalorder %s22, 1
      %p201 = por %p199, %p200
      %p202 = scmp.ne.s32.totalorder %s194, %s197
      %p203 = scmp.eq.s32.totalorder %s22, 0
      %p204 = por %p202, %p203
      %p205 = scmp.ne.s32.totalorder %s194, %s197
      %p206 = scmp.eq.s32.totalorder %s27, 1
      %p207 = por %p205, %p206
      %p208 = scmp.ne.s32.totalorder %s197, %s198
      %p209 = scmp.eq.s32.totalorder %s27, 0
      %p210 = por %p208, %p209
      %p211 = scmp.ne.s32.totalorder %s197, %s198
      %p212 = scmp.eq.s32.totalorder %s28, 1
      %p213 = por %p211, %p212
      %p215 = scmp.ne.s32.totalorder %s198, %s214
      %p216 = scmp.eq.s32.totalorder %s28, 0
      %p217 = por %p215, %p216
      %s218 = ssub.s32 %s22, %s29
      %p219 = scmp.eq.s32.totalorder %s218, 0
      %s221 = sadd.s32 %s220, 1
      %s222 = scalar_select %p219, %s220, %s221
      %p225 = pneg %p219
      %p226 = scmp.eq.s32.totalorder %s22, 1
      %p227 = por %p225, %p226
      %p228 = scmp.ne.s32.totalorder %s220, %s223
      %p229 = scmp.eq.s32.totalorder %s22, 0
      %p230 = por %p228, %p229
      %p231 = scmp.ne.s32.totalorder %s220, %s223
      %p232 = scmp.eq.s32.totalorder %s27, 1
      %p233 = por %p231, %p232
      %p234 = scmp.ne.s32.totalorder %s223, %s224
      %p235 = scmp.eq.s32.totalorder %s27, 0
      %p236 = por %p234, %p235
      %p237 = scmp.ne.s32.totalorder %s223, %s224
      %p238 = scmp.eq.s32.totalorder %s28, 1
      %p239 = por %p237, %p238
      %p241 = scmp.ne.s32.totalorder %s224, %s240
      %p242 = scmp.eq.s32.totalorder %s28, 0
      %p243 = por %p241, %p242
      %p244 = scmp.le.s32.totalorder 1, %s22
      %p245 = scmp.lt.s32.totalorder %s22, 3
      %p246 = pnand %p244, %p245
      %p247 = pneg %p246
      // Predicated region
      $region9: #{decoder_forward_pallas.2} parent=5 // pred_check
        _
      $region10: #{decoder_forward_pallas.2} parent=5 // pred_check_branch
        %249 = sbr.rel (%p246) target = $region12
      $region11: #{decoder_forward_pallas.2} parent=5 // pred_region
        %s250 = ssub.s32 %s22, 1
        // Predicated region
        $region13: #{decoder_forward_pallas.2} parent=11 // pred_check
          %p251 = pneg %p95
        $region14: #{decoder_forward_pallas.2} parent=11 // pred_check_branch
          %253 = sbr.rel (%p251) target = $region16
        $region15: #{decoder_forward_pallas.2} parent=11 // pred_region
          _
        $region16: #{decoder_forward_pallas.2} parent=11 // pred_fallthru
          _
        // Predicated region
        $region17: #{decoder_forward_pallas.2} parent=11 // pred_check
          %p254 = pneg %p116
        $region18: #{decoder_forward_pallas.2} parent=11 // pred_check_branch
          %256 = sbr.rel (%p254) target = $region20
        $region19: #{decoder_forward_pallas.2} parent=11 // pred_region
          _
        $region20: #{decoder_forward_pallas.2} parent=11 // pred_fallthru
          _
        // Predicated region
        $region21: #{decoder_forward_pallas.2} parent=11 // pred_check
          %p257 = pneg %p137
        $region22: #{decoder_forward_pallas.2} parent=11 // pred_check_branch
          %259 = sbr.rel (%p257) target = $region24
        $region23: #{decoder_forward_pallas.2} parent=11 // pred_region
          %261 = vsyncadd [#allocation3], 0
          %s262 = sshll.u32 %s4, 4
          %s263 = int_to_ptr.hbm [resolvable:$true] %s262
          %s264 = sshll.u32 [#allocation2], 4
          %s265 = int_to_ptr.vmem [resolvable:$true] %s264
          %270 = dma.hbm_to_vmem [thread:$0]  %s263, 17408, %s265, [#allocation3], 2176, 2176, 136
        $region24: #{decoder_forward_pallas.2} parent=11 // pred_fallthru
          _
        // Predicated region
        $region25: #{decoder_forward_pallas.2} parent=11 // pred_check
          %p271 = pneg %p158
        $region26: #{decoder_forward_pallas.2} parent=11 // pred_check_branch
          %273 = sbr.rel (%p271) target = $region28
        $region27: #{decoder_forward_pallas.2} parent=11 // pred_region
          _
        $region28: #{decoder_forward_pallas.2} parent=11 // pred_fallthru
          _
      $region12: #{decoder_forward_pallas.2} parent=5 // pred_fallthru
        _
      %p274 = scmp.lt.s32.totalorder %s22, 2
      // Predicated region
      $region29: #{decoder_forward_pallas.2} parent=5 // pred_check
        %p275 = pneg %p274
      $region30: #{decoder_forward_pallas.2} parent=5 // pred_check_branch
        %277 = sbr.rel (%p275) target = $region32
      $region31: #{decoder_forward_pallas.2} parent=5 // pred_region
        // Predicated region
        $region33: #{decoder_forward_pallas.2} parent=31 // pred_check
          %p278 = pneg %p42
        $region34: #{decoder_forward_pallas.2} parent=31 // pred_check_branch
          %280 = sbr.rel (%p278) target = $region36
        $region35: #{decoder_forward_pallas.2} parent=31 // pred_region
          %p281 = scmp.lt.s32.totalorder %s22, 1
          %s282 = scalar_select %p281, %s22, 1
          %s283 = smul.addr %s282, 8
          %s284 = scalar_lea.vmem %s0, %s283
        $region36: #{decoder_forward_pallas.2} parent=31 // pred_fallthru
          _
        // Predicated region
        $region37: #{decoder_forward_pallas.2} parent=31 // pred_check
          %p285 = pneg %p68
        $region38: #{decoder_forward_pallas.2} parent=31 // pred_check_branch
          %287 = sbr.rel (%p285) target = $region40
        $region39: #{decoder_forward_pallas.2} parent=31 // pred_region
          %p288 = scmp.lt.s32.totalorder %s22, 1
          %s289 = scalar_select %p288, %s22, 1
          %s290 = smul.addr %s289, 8
          %s291 = scalar_lea.vmem %s1, %s290
        $region40: #{decoder_forward_pallas.2} parent=31 // pred_fallthru
          _
      $region32: #{decoder_forward_pallas.2} parent=5 // pred_fallthru
        _
      %p292 = scmp.le.s32.totalorder 1, %s22
      %p293 = scmp.lt.s32.totalorder %s22, 3
      %p294 = pnand %p292, %p293
      %p295 = pneg %p294
      // Predicated region
      $region41: #{decoder_forward_pallas.2} parent=5 // pred_check
        _
      $region42: #{decoder_forward_pallas.2} parent=5 // pred_check_branch
        %297 = sbr.rel (%p294) target = $region44
      $region43: #{decoder_forward_pallas.2} parent=5 // pred_region
        %s298 = ssub.s32 %s22, 1
        // Predicated region
        $region45: #{decoder_forward_pallas.2} parent=43 // pred_check
          %p299 = pneg %p137
        $region46: #{decoder_forward_pallas.2} parent=43 // pred_check_branch
          %301 = sbr.rel (%p299) target = $region48
        $region47: #{decoder_forward_pallas.2} parent=43 // pred_region
          %303 = dma.done [#allocation3], 17408
        $region48: #{decoder_forward_pallas.2} parent=43 // pred_fallthru
          _
        %p304 = scmp.lt.s32.totalorder %s27, 1
        %s305 = scalar_select %p304, %s27, 1
        %s306 = smul.addr %s305, 8
        %s307 = scalar_lea.vmem %s0, %s306
        %p308 = pneg %p48
        %p309 = pneg %p45
        %p310 = scmp.lt.s32.totalorder %s27, 1
        %s311 = scalar_select %p310, %s27, 1
        %s312 = smul.addr %s311, 8
        %s313 = scalar_lea.vmem %s1, %s312
        %p314 = pneg %p74
        %p315 = pneg %p71
        %p316 = pneg %p95
        %p317 = pneg %p92
        %p318 = pneg %p116
        %p319 = pneg %p113
        %p320 = pneg %p137
        %p321 = pneg %p134
        %p322 = pneg %p158
        %p323 = pneg %p155
        %p324 = pneg %p184
        %p325 = pneg %p181
        %p326 = scmp.lt.s32.totalorder %s27, 1
        %s327 = scalar_select %p326, %s27, 1
        %s328 = smul.addr %s327, 8
        %s329 = scalar_lea.vmem %s6, %s328
        %p330 = pneg %p210
        %p331 = pneg %p207
        %s332 = sand.u32 %s197, 1
        %s333 = scalar_lea.sflag [#allocation4], %s332
        %s334 = sand.u32 %s197, 1
        %s335 = smul.addr %s334, 32
        %s336 = scalar_lea.vmem [#allocation5], %s335
        %p337 = pneg %p236
        %p338 = pneg %p233
        %s339 = sand.u32 %s223, 1
        %s340 = scalar_lea.sflag [#allocation7], %s339
        %s341 = sand.u32 %s223, 1
        %s342 = smul.addr %s341, 32
        %s343 = scalar_lea.vmem [#allocation6], %s342
        %p344 = scmp.lt.s32.totalorder %s27, 1
        %s345 = scalar_select %p344, %s27, 1
        %s346 = smul.addr %s345, 8
        %s347 = scalar_lea.vmem %s0, %s346
        %p348 = scmp.lt.s32.totalorder %s27, 1
        %s349 = scalar_select %p348, %s27, 1
        %s350 = smul.addr %s349, 8
        %s351 = scalar_lea.vmem %s1, %s350
        %p352 = scmp.lt.s32.totalorder %s27, 1
        %s353 = scalar_select %p352, %s27, 1
        %s354 = smul.addr %s353, 8
        %s355 = scalar_lea.vmem %s6, %s354
        %v357 = vld [vmem:[%s347] sm:$0xff]
        %v358 = vld [vmem:[%s351] sm:$0xff]
        %v359 = vpack.c.bf16 %v357, %v357
        %v360 = vld [vmem:[#allocation2] sm:$0xff]
        %v361 = vld [vmem:[#allocation2 + $0x8] sm:$0xff]
        %v362 = vld [vmem:[#allocation2 + $0x10] sm:$0xff]
        %v363 = vld [vmem:[#allocation2 + $0x18] sm:$0xff]
        %v364 = vld [vmem:[#allocation2 + $0x20] sm:$0xff]
        %v365 = vld [vmem:[#allocation2 + $0x28] sm:$0xff]
        %v366 = vld [vmem:[#allocation2 + $0x88] sm:$0xff]
        %v367 = vld [vmem:[#allocation2 + $0x90] sm:$0xff]
        %v368 = vld [vmem:[#allocation2 + $0x98] sm:$0xff]
        %v369 = vld [vmem:[#allocation2 + $0xa0] sm:$0xff]
        %v370 = vld [vmem:[#allocation2 + $0xa8] sm:$0xff]
        %v371 = vld [vmem:[#allocation2 + $0xb0] sm:$0xff]
        %v372 = vld [vmem:[#allocation2 + $0x110] sm:$0xff]
        %v373 = vld [vmem:[#allocation2 + $0x118] sm:$0xff]
        %v374 = vld [vmem:[#allocation2 + $0x120] sm:$0xff]
        %v375 = vld [vmem:[#allocation2 + $0x128] sm:$0xff]
        %v376 = vld [vmem:[#allocation2 + $0x130] sm:$0xff]
        %v377 = vld [vmem:[#allocation2 + $0x138] sm:$0xff]
        %v378 = vld [vmem:[#allocation2 + $0x198] sm:$0xff]
        %v379 = vld [vmem:[#allocation2 + $0x1a0] sm:$0xff]
        %v380 = vld [vmem:[#allocation2 + $0x1a8] sm:$0xff]
        %v381 = vld [vmem:[#allocation2 + $0x1b0] sm:$0xff]
        %v382 = vld [vmem:[#allocation2 + $0x1b8] sm:$0xff]
        %v383 = vld [vmem:[#allocation2 + $0x1c0] sm:$0xff]
        %v384 = vld [vmem:[#allocation2 + $0x220] sm:$0xff]
        %v385 = vld [vmem:[#allocation2 + $0x228] sm:$0xff]
        %v386 = vld [vmem:[#allocation2 + $0x230] sm:$0xff]
        %v387 = vld [vmem:[#allocation2 + $0x238] sm:$0xff]
        %v388 = vld [vmem:[#allocation2 + $0x240] sm:$0xff]
        %v389 = vld [vmem:[#allocation2 + $0x248] sm:$0xff]
        %v390 = vld [vmem:[#allocation2 + $0x2a8] sm:$0xff]
        %v391 = vld [vmem:[#allocation2 + $0x2b0] sm:$0xff]
        %v392 = vld [vmem:[#allocation2 + $0x2b8] sm:$0xff]
        %v393 = vld [vmem:[#allocation2 + $0x2c0] sm:$0xff]
        %v394 = vld [vmem:[#allocation2 + $0x2c8] sm:$0xff]
        %v395 = vld [vmem:[#allocation2 + $0x2d0] sm:$0xff]
        %v396 = vld [vmem:[#allocation2 + $0x330] sm:$0xff]
        %v397 = vld [vmem:[#allocation2 + $0x338] sm:$0xff]
        %v398 = vld [vmem:[#allocation2 + $0x340] sm:$0xff]
        %v399 = vld [vmem:[#allocation2 + $0x348] sm:$0xff]
        %v400 = vld [vmem:[#allocation2 + $0x350] sm:$0xff]
        %v401 = vld [vmem:[#allocation2 + $0x358] sm:$0xff]
        %v402 = vld [vmem:[#allocation2 + $0x3b8] sm:$0xff]
        %v403 = vld [vmem:[#allocation2 + $0x3c0] sm:$0xff]
        %v404 = vld [vmem:[#allocation2 + $0x3c8] sm:$0xff]
        %v405 = vld [vmem:[#allocation2 + $0x3d0] sm:$0xff]
        %v406 = vld [vmem:[#allocation2 + $0x3d8] sm:$0xff]
        %v407 = vld [vmem:[#allocation2 + $0x3e0] sm:$0xff]
        %v408 = vld [vmem:[%s5] ss:$8 sm:$0xf]
        %v409 = vld [vmem:[%s5] ss:$8 sm:$0xf0]
        %v410 = vor.u32 %v408, %v409
        %s411 = scalar_lea.vmem %s5, 64
        %v412 = vld [vmem:[%s411] ss:$8 sm:$0xf]
        %v415 = vperm.slane %v410, 0
        %v416 = vperm.slane %v410, 1
        %v417 = vperm.slane %v410, 2
        %v418 = vperm.slane %v410, 3
        %v419 = vperm.slane %v410, 4
        %v420 = vperm.slane %v410, 5
        %v421 = vperm.slane %v410, 6
        %v422 = vperm.slane %v410, 7
        %v423 = vperm.slane %v412, 0
        %v424 = vperm.slane %v412, 1
        %v425 = vperm.slane %v412, 2
        %v426 = vperm.slane %v412, 3
        %v487 = vunpack.c.l.b16 %v360
        %v488 = vunpack.c.h.b16 %v360
        %v489 = vunpack.c.l.b16 %v361
        %v490 = vunpack.c.h.b16 %v361
        %v491 = vunpack.c.l.b16 %v362
        %v492 = vunpack.c.h.b16 %v362
        %v493 = vunpack.c.l.b16 %v363
        %v494 = vunpack.c.h.b16 %v363
        %v495 = vunpack.c.l.b16 %v364
        %v496 = vunpack.c.h.b16 %v364
        %v497 = vunpack.c.l.b16 %v365
        %v498 = vunpack.c.h.b16 %v365
        %v499 = vunpack.c.l.b16 %v366
        %v500 = vunpack.c.h.b16 %v366
        %v501 = vunpack.c.l.b16 %v367
        %v502 = vunpack.c.h.b16 %v367
        %v503 = vunpack.c.l.b16 %v368
        %v504 = vunpack.c.h.b16 %v368
        %v505 = vunpack.c.l.b16 %v369
        %v506 = vunpack.c.h.b16 %v369
        %v507 = vunpack.c.l.b16 %v370
        %v508 = vunpack.c.h.b16 %v370
        %v509 = vunpack.c.l.b16 %v371
        %v510 = vunpack.c.h.b16 %v371
        %v511 = vunpack.c.l.b16 %v372
        %v512 = vunpack.c.h.b16 %v372
        %v513 = vunpack.c.l.b16 %v373
        %v514 = vunpack.c.h.b16 %v373
        %v515 = vunpack.c.l.b16 %v374
        %v516 = vunpack.c.h.b16 %v374
        %v517 = vunpack.c.l.b16 %v375
        %v518 = vunpack.c.h.b16 %v375
        %v519 = vunpack.c.l.b16 %v376
        %v520 = vunpack.c.h.b16 %v376
        %v521 = vunpack.c.l.b16 %v377
        %v522 = vunpack.c.h.b16 %v377
        %v523 = vunpack.c.l.b16 %v378
        %v524 = vunpack.c.h.b16 %v378
        %v525 = vunpack.c.l.b16 %v379
        %v526 = vunpack.c.h.b16 %v379
        %v527 = vunpack.c.l.b16 %v380
        %v528 = vunpack.c.h.b16 %v380
        %v529 = vunpack.c.l.b16 %v381
        %v530 = vunpack.c.h.b16 %v381
        %v531 = vunpack.c.l.b16 %v382
        %v532 = vunpack.c.h.b16 %v382
        %v533 = vunpack.c.l.b16 %v383
        %v534 = vunpack.c.h.b16 %v383
        %v535 = vunpack.c.l.b16 %v384
        %v536 = vunpack.c.h.b16 %v384
        %v537 = vunpack.c.l.b16 %v385
        %v538 = vunpack.c.h.b16 %v385
        %v539 = vunpack.c.l.b16 %v386
        %v540 = vunpack.c.h.b16 %v386
        %v541 = vunpack.c.l.b16 %v387
        %v542 = vunpack.c.h.b16 %v387
        %v543 = vunpack.c.l.b16 %v388
        %v544 = vunpack.c.h.b16 %v388
        %v545 = vunpack.c.l.b16 %v389
        %v546 = vunpack.c.h.b16 %v389
        %v547 = vunpack.c.l.b16 %v390
        %v548 = vunpack.c.h.b16 %v390
        %v549 = vunpack.c.l.b16 %v391
        %v550 = vunpack.c.h.b16 %v391
        %v551 = vunpack.c.l.b16 %v392
        %v552 = vunpack.c.h.b16 %v392
        %v553 = vunpack.c.l.b16 %v393
        %v554 = vunpack.c.h.b16 %v393
        %v555 = vunpack.c.l.b16 %v394
        %v556 = vunpack.c.h.b16 %v394
        %v557 = vunpack.c.l.b16 %v395
        %v558 = vunpack.c.h.b16 %v395
        %v559 = vunpack.c.l.b16 %v396
        %v560 = vunpack.c.h.b16 %v396
        %v561 = vunpack.c.l.b16 %v397
        %v562 = vunpack.c.h.b16 %v397
        %v563 = vunpack.c.l.b16 %v398
        %v564 = vunpack.c.h.b16 %v398
        %v565 = vunpack.c.l.b16 %v399
        %v566 = vunpack.c.h.b16 %v399
        %v567 = vunpack.c.l.b16 %v400
        %v568 = vunpack.c.h.b16 %v400
        %v569 = vunpack.c.l.b16 %v401
        %v570 = vunpack.c.h.b16 %v401
        %v571 = vunpack.c.l.b16 %v402
        %v572 = vunpack.c.h.b16 %v402
        %v573 = vunpack.c.l.b16 %v403
        %v574 = vunpack.c.h.b16 %v403
        %v575 = vunpack.c.l.b16 %v404
        %v576 = vunpack.c.h.b16 %v404
        %v577 = vunpack.c.l.b16 %v405
        %v578 = vunpack.c.h.b16 %v405
        %v579 = vunpack.c.l.b16 %v406
        %v580 = vunpack.c.h.b16 %v406
        %v581 = vunpack.c.l.b16 %v407
        %v582 = vunpack.c.h.b16 %v407
        %v583 = vpack.c.b16 %v499, %v487
        %v584 = vpack.c.b16 %v500, %v488
        %v585 = vpack.c.b16 %v501, %v489
        %v586 = vpack.c.b16 %v502, %v490
        %v587 = vpack.c.b16 %v503, %v491
        %v588 = vpack.c.b16 %v504, %v492
        %v589 = vpack.c.b16 %v505, %v493
        %v590 = vpack.c.b16 %v506, %v494
        %v591 = vpack.c.b16 %v507, %v495
        %v592 = vpack.c.b16 %v508, %v496
        %v593 = vpack.c.b16 %v509, %v497
        %v594 = vpack.c.b16 %v510, %v498
        %v595 = vpack.c.b16 %v523, %v511
        %v596 = vpack.c.b16 %v524, %v512
        %v597 = vpack.c.b16 %v525, %v513
        %v598 = vpack.c.b16 %v526, %v514
        %v599 = vpack.c.b16 %v527, %v515
        %v600 = vpack.c.b16 %v528, %v516
        %v601 = vpack.c.b16 %v529, %v517
        %v602 = vpack.c.b16 %v530, %v518
        %v603 = vpack.c.b16 %v531, %v519
        %v604 = vpack.c.b16 %v532, %v520
        %v605 = vpack.c.b16 %v533, %v521
        %v606 = vpack.c.b16 %v534, %v522
        %v607 = vpack.c.b16 %v547, %v535
        %v608 = vpack.c.b16 %v548, %v536
        %v609 = vpack.c.b16 %v549, %v537
        %v610 = vpack.c.b16 %v550, %v538
        %v611 = vpack.c.b16 %v551, %v539
        %v612 = vpack.c.b16 %v552, %v540
        %v613 = vpack.c.b16 %v553, %v541
        %v614 = vpack.c.b16 %v554, %v542
        %v615 = vpack.c.b16 %v555, %v543
        %v616 = vpack.c.b16 %v556, %v544
        %v617 = vpack.c.b16 %v557, %v545
        %v618 = vpack.c.b16 %v558, %v546
        %v619 = vpack.c.b16 %v571, %v559
        %v620 = vpack.c.b16 %v572, %v560
        %v621 = vpack.c.b16 %v573, %v561
        %v622 = vpack.c.b16 %v574, %v562
        %v623 = vpack.c.b16 %v575, %v563
        %v624 = vpack.c.b16 %v576, %v564
        %v625 = vpack.c.b16 %v577, %v565
        %v626 = vpack.c.b16 %v578, %v566
        %v627 = vpack.c.b16 %v579, %v567
        %v628 = vpack.c.b16 %v580, %v568
        %v629 = vpack.c.b16 %v581, %v569
        %v630 = vpack.c.b16 %v582, %v570
        %vm679 = vcmask 523264
        %v681 = vsel %vm679, %v359, 0
        %683 = vmatpush.bf16.msra.mxu0 0
        %684 = vmatpush.bf16.msra.mxu0 0
        %685 = vmatpush.bf16.msra.mxu0 0
        %686 = vmatpush.bf16.msra.mxu0 0
        %687 = vmatpush.bf16.msra.mxu0 %v619
        %688 = vmatpush.bf16.msra.mxu0 %v607
        %689 = vmatpush.bf16.msra.mxu0 %v595
        %690 = vmatpush.bf16.msra.mxu0 %v583
        %691 = vmatmul.bf16.gmra.mxu0 %v681
        %v692 = vpop.f32.mrf.mxu0
        %v693 = vadd.f32 %v415, %v692
        %v694 = vpop.f32.mrf.mxu0
        %695 = vdwg.mxu0
        %696 = vmatpush.bf16.msra.mxu0 0
        %697 = vmatpush.bf16.msra.mxu0 0
        %698 = vmatpush.bf16.msra.mxu0 0
        %699 = vmatpush.bf16.msra.mxu0 0
        %700 = vmatpush.bf16.msra.mxu0 %v620
        %701 = vmatpush.bf16.msra.mxu0 %v608
        %702 = vmatpush.bf16.msra.mxu0 %v596
        %703 = vmatpush.bf16.msra.mxu0 %v584
        %704 = vmatmul.bf16.gmra.mxu0 %v681
        %v705 = vpop.f32.mrf.mxu0
        %v706 = vadd.f32 %v416, %v705
        %v707 = vpop.f32.mrf.mxu0
        %708 = vdwg.mxu0
        %709 = vmatpush.bf16.msra.mxu0 0
        %710 = vmatpush.bf16.msra.mxu0 0
        %711 = vmatpush.bf16.msra.mxu0 0
        %712 = vmatpush.bf16.msra.mxu0 0
        %713 = vmatpush.bf16.msra.mxu0 %v621
        %714 = vmatpush.bf16.msra.mxu0 %v609
        %715 = vmatpush.bf16.msra.mxu0 %v597
        %716 = vmatpush.bf16.msra.mxu0 %v585
        %717 = vmatmul.bf16.gmra.mxu0 %v681
        %v718 = vpop.f32.mrf.mxu0
        %v719 = vadd.f32 %v417, %v718
        %v720 = vpop.f32.mrf.mxu0
        %721 = vdwg.mxu0
        %722 = vmatpush.bf16.msra.mxu0 0
        %723 = vmatpush.bf16.msra.mxu0 0
        %724 = vmatpush.bf16.msra.mxu0 0
        %725 = vmatpush.bf16.msra.mxu0 0
        %726 = vmatpush.bf16.msra.mxu0 %v622
        %727 = vmatpush.bf16.msra.mxu0 %v610
        %728 = vmatpush.bf16.msra.mxu0 %v598
        %729 = vmatpush.bf16.msra.mxu0 %v586
        %730 = vmatmul.bf16.gmra.mxu0 %v681
        %v731 = vpop.f32.mrf.mxu0
        %v732 = vadd.f32 %v418, %v731
        %v733 = vpop.f32.mrf.mxu0
        %734 = vdwg.mxu0
        %735 = vmatpush.bf16.msra.mxu0 0
        %736 = vmatpush.bf16.msra.mxu0 0
        %737 = vmatpush.bf16.msra.mxu0 0
        %738 = vmatpush.bf16.msra.mxu0 0
        %739 = vmatpush.bf16.msra.mxu0 %v623
        %740 = vmatpush.bf16.msra.mxu0 %v611
        %741 = vmatpush.bf16.msra.mxu0 %v599
        %742 = vmatpush.bf16.msra.mxu0 %v587
        %743 = vmatmul.bf16.gmra.mxu0 %v681
        %v744 = vpop.f32.mrf.mxu0
        %v745 = vadd.f32 %v419, %v744
        %v746 = vpop.f32.mrf.mxu0
        %747 = vdwg.mxu0
        %748 = vmatpush.bf16.msra.mxu0 0
        %749 = vmatpush.bf16.msra.mxu0 0
        %750 = vmatpush.bf16.msra.mxu0 0
        %751 = vmatpush.bf16.msra.mxu0 0
        %752 = vmatpush.bf16.msra.mxu0 %v624
        %753 = vmatpush.bf16.msra.mxu0 %v612
        %754 = vmatpush.bf16.msra.mxu0 %v600
        %755 = vmatpush.bf16.msra.mxu0 %v588
        %756 = vmatmul.bf16.gmra.mxu0 %v681
        %v757 = vpop.f32.mrf.mxu0
        %v758 = vadd.f32 %v420, %v757
        %v759 = vpop.f32.mrf.mxu0
        %760 = vdwg.mxu0
        %761 = vmatpush.bf16.msra.mxu0 0
        %762 = vmatpush.bf16.msra.mxu0 0
        %763 = vmatpush.bf16.msra.mxu0 0
        %764 = vmatpush.bf16.msra.mxu0 0
        %765 = vmatpush.bf16.msra.mxu0 %v625
        %766 = vmatpush.bf16.msra.mxu0 %v613
        %767 = vmatpush.bf16.msra.mxu0 %v601
        %768 = vmatpush.bf16.msra.mxu0 %v589
        %769 = vmatmul.bf16.gmra.mxu0 %v681
        %v770 = vpop.f32.mrf.mxu0
        %v771 = vadd.f32 %v421, %v770
        %v772 = vpop.f32.mrf.mxu0
        %773 = vdwg.mxu0
        %774 = vmatpush.bf16.msra.mxu0 0
        %775 = vmatpush.bf16.msra.mxu0 0
        %776 = vmatpush.bf16.msra.mxu0 0
        %777 = vmatpush.bf16.msra.mxu0 0
        %778 = vmatpush.bf16.msra.mxu0 %v626
        %779 = vmatpush.bf16.msra.mxu0 %v614
        %780 = vmatpush.bf16.msra.mxu0 %v602
        %781 = vmatpush.bf16.msra.mxu0 %v590
        %782 = vmatmul.bf16.gmra.mxu0 %v681
        %v783 = vpop.f32.mrf.mxu0
        %v784 = vadd.f32 %v422, %v783
        %v785 = vpop.f32.mrf.mxu0
        %786 = vdwg.mxu0
        %787 = vmatpush.bf16.msra.mxu0 0
        %788 = vmatpush.bf16.msra.mxu0 0
        %789 = vmatpush.bf16.msra.mxu0 0
        %790 = vmatpush.bf16.msra.mxu0 0
        %791 = vmatpush.bf16.msra.mxu0 %v627
        %792 = vmatpush.bf16.msra.mxu0 %v615
        %793 = vmatpush.bf16.msra.mxu0 %v603
        %794 = vmatpush.bf16.msra.mxu0 %v591
        %795 = vmatmul.bf16.gmra.mxu0 %v681
        %v796 = vpop.f32.mrf.mxu0
        %v797 = vadd.f32 %v423, %v796
        %v798 = vpop.f32.mrf.mxu0
        %799 = vdwg.mxu0
        %800 = vmatpush.bf16.msra.mxu0 0
        %801 = vmatpush.bf16.msra.mxu0 0
        %802 = vmatpush.bf16.msra.mxu0 0
        %803 = vmatpush.bf16.msra.mxu0 0
        %804 = vmatpush.bf16.msra.mxu0 %v628
        %805 = vmatpush.bf16.msra.mxu0 %v616
        %806 = vmatpush.bf16.msra.mxu0 %v604
        %807 = vmatpush.bf16.msra.mxu0 %v592
        %808 = vmatmul.bf16.gmra.mxu0 %v681
        %v809 = vpop.f32.mrf.mxu0
        %v810 = vadd.f32 %v424, %v809
        %v811 = vpop.f32.mrf.mxu0
        %812 = vdwg.mxu0
        %813 = vmatpush.bf16.msra.mxu0 0
        %814 = vmatpush.bf16.msra.mxu0 0
        %815 = vmatpush.bf16.msra.mxu0 0
        %816 = vmatpush.bf16.msra.mxu0 0
        %817 = vmatpush.bf16.msra.mxu0 %v629
        %818 = vmatpush.bf16.msra.mxu0 %v617
        %819 = vmatpush.bf16.msra.mxu0 %v605
        %820 = vmatpush.bf16.msra.mxu0 %v593
        %821 = vmatmul.bf16.gmra.mxu0 %v681
        %v822 = vpop.f32.mrf.mxu0
        %v823 = vadd.f32 %v425, %v822
        %v824 = vpop.f32.mrf.mxu0
        %825 = vdwg.mxu0
        %826 = vmatpush.bf16.msra.mxu0 0
        %827 = vmatpush.bf16.msra.mxu0 0
        %828 = vmatpush.bf16.msra.mxu0 0
        %829 = vmatpush.bf16.msra.mxu0 0
        %830 = vmatpush.bf16.msra.mxu0 %v630
        %831 = vmatpush.bf16.msra.mxu0 %v618
        %832 = vmatpush.bf16.msra.mxu0 %v606
        %833 = vmatpush.bf16.msra.mxu0 %v594
        %834 = vmatmul.bf16.gmra.mxu0 %v681
        %v835 = vpop.f32.mrf.mxu0
        %v836 = vadd.f32 %v426, %v835
        %v837 = vpop.f32.mrf.mxu0
        %838 = vdwg.mxu0
        %v839 = vpack.c.bf16 %v706, %v693
        %v840 = vpack.c.bf16 %v732, %v719
        %v841 = vpack.c.bf16 %v758, %v745
        %v842 = vpack.c.bf16 %v784, %v771
        %v843 = vpack.c.bf16 %v810, %v797
        %v844 = vpack.c.bf16 %v836, %v823
        %v845 = vlaneseq
        %v846 = vshrl.u32 %v845, 7
        %v847 = vlaneseq
        %v848 = vand.u32 %v847, 127
        %vm849 = vcmp.gt.s32.totalorder %v848, %v846
        %s850 = scalar_lea.vmem %s2, %s27
        %v851 = vld [vmem:[%s850] sm:$0x1]
        %vm852 = vcmp.ne.s32.totalorder %v851, 0
        %v853 = vsel %vm852, 1, 0
        %v854 = vperm.slane %v853, 0
        %vm855 = vcmp.eq.s32.totalorder %v854, 1
        %vm856 = vmor %vm855, %vm849
        %857 = vmatpush.bf16.xpose.msra.mxu0 0
        %858 = vmatpush.bf16.xpose.msra.mxu0 0
        %859 = vmatpush.bf16.xpose.msra.mxu0 0
        %860 = vmatpush.bf16.xpose.msra.mxu0 0
        %861 = vmatpush.bf16.xpose.msra.mxu0 0
        %862 = vmatpush.bf16.xpose.msra.mxu0 0
        %863 = vmatpush.bf16.xpose.msra.mxu0 0
        %864 = vmatpush.bf16.xpose.msra.mxu0 %v841
        %865 = vmatmul.bf16.gmra.mxu0 %v839
        %v866 = vpop.f32.mrf.mxu0
        %v867 = vadd.f32 0.0, %v866
        %v868 = vpop.f32.mrf.mxu0
        %869 = vdwg.mxu0
        %v870 = vsel %vm856, -1e+09, %v867
        %vm871 = vcmask 64512
        %v872 = vsel %vm871, %v870, -inf
        %873 = vmax.xlane.f32.xlu0 %v872
        %v874 = vpop.xlane.xlu0 %873
        %v875 = vsub.f32 %v870, %v874
        %v876 = vmul.f32 %v875, 1.442695
        %v877 = vpow.pop %v876
        %v878 = vsel %vm871, %v877, 0.0
        %879 = vadd.xlane.f32.xlu0 %v878
        %v880 = vpop.xlane.xlu0 %879
        %v881 = vrcp.pop %v880
        %v882 = vmul.f32 %v877, %v881
        %v883 = vpack.c.bf16 %v882, %v882
        %v885 = vsel %vm871, %v883, 0
        %vm887 = vcmask 1043456
        %v889 = vsel %vm887, %v843, 0
        %891 = vmatpush.bf16.msra.mxu0 0
        %892 = vmatpush.bf16.msra.mxu0 0
        %893 = vmatpush.bf16.msra.mxu0 0
        %894 = vmatpush.bf16.msra.mxu0 0
        %895 = vmatpush.bf16.msra.mxu0 0
        %896 = vmatpush.bf16.msra.mxu0 0
        %897 = vmatpush.bf16.msra.mxu0 0
        %898 = vmatpush.bf16.msra.mxu0 %v889
        %899 = vmatmul.bf16.gmra.mxu0 %v885
        %v900 = vpop.f32.mrf.mxu0
        %v901 = vadd.f32 0.0, %v900
        %v902 = vpop.f32.mrf.mxu0
        %903 = vdwg.mxu0
        %v905 = vunpack.c.h.b16 %v839
        %v906 = vpack.c.b16 %v905, %v905
        %v909 = vunpack.c.h.b16 %v841
        %v910 = vpack.c.b16 %v909, %v909
        %912 = vmatpush.bf16.xpose.msra.mxu0 0
        %913 = vmatpush.bf16.xpose.msra.mxu0 0
        %914 = vmatpush.bf16.xpose.msra.mxu0 0
        %915 = vmatpush.bf16.xpose.msra.mxu0 0
        %916 = vmatpush.bf16.xpose.msra.mxu0 0
        %917 = vmatpush.bf16.xpose.msra.mxu0 0
        %918 = vmatpush.bf16.xpose.msra.mxu0 0
        %919 = vmatpush.bf16.xpose.msra.mxu0 %v910
        %920 = vmatmul.bf16.gmra.mxu0 %v906
        %v921 = vpop.f32.mrf.mxu0
        %v922 = vadd.f32 0.0, %v921
        %v923 = vpop.f32.mrf.mxu0
        %924 = vdwg.mxu0
        %v925 = vsel %vm856, -1e+09, %v922
        %v926 = vsel %vm871, %v925, -inf
        %927 = vmax.xlane.f32.xlu0 %v926
        %v928 = vpop.xlane.xlu0 %927
        %v929 = vsub.f32 %v925, %v928
        %v930 = vmul.f32 %v929, 1.442695
        %v931 = vpow.pop %v930
        %v932 = vsel %vm871, %v931, 0.0
        %933 = vadd.xlane.f32.xlu0 %v932
        %v934 = vpop.xlane.xlu0 %933
        %v935 = vrcp.pop %v934
        %v936 = vmul.f32 %v931, %v935
        %v937 = vpack.c.bf16 %v936, %v936
        %v939 = vunpack.c.h.b16 %v843
        %v940 = vpack.c.b16 %v939, %v939
        %v942 = vsel %vm871, %v937, 0
        %v945 = vsel %vm887, %v940, 0
        %947 = vmatpush.bf16.msra.mxu0 0
        %948 = vmatpush.bf16.msra.mxu0 0
        %949 = vmatpush.bf16.msra.mxu0 0
        %950 = vmatpush.bf16.msra.mxu0 0
        %951 = vmatpush.bf16.msra.mxu0 0
        %952 = vmatpush.bf16.msra.mxu0 0
        %953 = vmatpush.bf16.msra.mxu0 0
        %954 = vmatpush.bf16.msra.mxu0 %v945
        %955 = vmatmul.bf16.gmra.mxu0 %v942
        %v956 = vpop.f32.mrf.mxu0
        %v957 = vadd.f32 0.0, %v956
        %v958 = vpop.f32.mrf.mxu0
        %959 = vdwg.mxu0
        %960 = vmatpush.bf16.xpose.msra.mxu0 0
        %961 = vmatpush.bf16.xpose.msra.mxu0 0
        %962 = vmatpush.bf16.xpose.msra.mxu0 0
        %963 = vmatpush.bf16.xpose.msra.mxu0 0
        %964 = vmatpush.bf16.xpose.msra.mxu0 0
        %965 = vmatpush.bf16.xpose.msra.mxu0 0
        %966 = vmatpush.bf16.xpose.msra.mxu0 0
        %967 = vmatpush.bf16.xpose.msra.mxu0 %v842
        %968 = vmatmul.bf16.gmra.mxu0 %v840
        %v969 = vpop.f32.mrf.mxu0
        %v970 = vadd.f32 0.0, %v969
        %v971 = vpop.f32.mrf.mxu0
        %972 = vdwg.mxu0
        %v973 = vsel %vm856, -1e+09, %v970
        %v974 = vsel %vm871, %v973, -inf
        %975 = vmax.xlane.f32.xlu0 %v974
        %v976 = vpop.xlane.xlu0 %975
        %v977 = vsub.f32 %v973, %v976
        %v978 = vmul.f32 %v977, 1.442695
        %v979 = vpow.pop %v978
        %v980 = vsel %vm871, %v979, 0.0
        %981 = vadd.xlane.f32.xlu0 %v980
        %v982 = vpop.xlane.xlu0 %981
        %v983 = vrcp.pop %v982
        %v984 = vmul.f32 %v979, %v983
        %v985 = vpack.c.bf16 %v984, %v984
        %v987 = vsel %vm871, %v985, 0
        %v990 = vsel %vm887, %v844, 0
        %992 = vmatpush.bf16.msra.mxu0 0
        %993 = vmatpush.bf16.msra.mxu0 0
        %994 = vmatpush.bf16.msra.mxu0 0
        %995 = vmatpush.bf16.msra.mxu0 0
        %996 = vmatpush.bf16.msra.mxu0 0
        %997 = vmatpush.bf16.msra.mxu0 0
        %998 = vmatpush.bf16.msra.mxu0 0
        %999 = vmatpush.bf16.msra.mxu0 %v990
        %1000 = vmatmul.bf16.gmra.mxu0 %v987
        %v1001 = vpop.f32.mrf.mxu0
        %v1002 = vadd.f32 0.0, %v1001
        %v1003 = vpop.f32.mrf.mxu0
        %1004 = vdwg.mxu0
        %v1006 = vunpack.c.h.b16 %v840
        %v1007 = vpack.c.b16 %v1006, %v1006
        %v1010 = vunpack.c.h.b16 %v842
        %v1011 = vpack.c.b16 %v1010, %v1010
        %1013 = vmatpush.bf16.xpose.msra.mxu0 0
        %1014 = vmatpush.bf16.xpose.msra.mxu0 0
        %1015 = vmatpush.bf16.xpose.msra.mxu0 0
        %1016 = vmatpush.bf16.xpose.msra.mxu0 0
        %1017 = vmatpush.bf16.xpose.msra.mxu0 0
        %1018 = vmatpush.bf16.xpose.msra.mxu0 0
        %1019 = vmatpush.bf16.xpose.msra.mxu0 0
        %1020 = vmatpush.bf16.xpose.msra.mxu0 %v1011
        %1021 = vmatmul.bf16.gmra.mxu0 %v1007
        %v1022 = vpop.f32.mrf.mxu0
        %v1023 = vadd.f32 0.0, %v1022
        %v1024 = vpop.f32.mrf.mxu0
        %1025 = vdwg.mxu0
        %v1026 = vsel %vm856, -1e+09, %v1023
        %v1027 = vsel %vm871, %v1026, -inf
        %1028 = vmax.xlane.f32.xlu0 %v1027
        %v1029 = vpop.xlane.xlu0 %1028
        %v1030 = vsub.f32 %v1026, %v1029
        %v1031 = vmul.f32 %v1030, 1.442695
        %v1032 = vpow.pop %v1031
        %v1033 = vsel %vm871, %v1032, 0.0
        %1034 = vadd.xlane.f32.xlu0 %v1033
        %v1035 = vpop.xlane.xlu0 %1034
        %v1036 = vrcp.pop %v1035
        %v1037 = vmul.f32 %v1032, %v1036
        %v1038 = vpack.c.bf16 %v1037, %v1037
        %v1040 = vunpack.c.h.b16 %v844
        %v1041 = vpack.c.b16 %v1040, %v1040
        %v1043 = vsel %vm871, %v1038, 0
        %v1046 = vsel %vm887, %v1041, 0
        %1048 = vmatpush.bf16.msra.mxu0 0
        %1049 = vmatpush.bf16.msra.mxu0 0
        %1050 = vmatpush.bf16.msra.mxu0 0
        %1051 = vmatpush.bf16.msra.mxu0 0
        %1052 = vmatpush.bf16.msra.mxu0 0
        %1053 = vmatpush.bf16.msra.mxu0 0
        %1054 = vmatpush.bf16.msra.mxu0 0
        %1055 = vmatpush.bf16.msra.mxu0 %v1046
        %1056 = vmatmul.bf16.gmra.mxu0 %v1043
        %v1057 = vpop.f32.mrf.mxu0
        %v1058 = vadd.f32 0.0, %v1057
        %v1059 = vpop.f32.mrf.mxu0
        %1060 = vdwg.mxu0
        %1061 = vst.msk [vmem:[%s336] sm:$0xff] %vm871, %v882
        %1062 = vst.msk [vmem:[%s336 + $0x8] sm:$0xff] %vm871, %v936
        %1063 = vst.msk [vmem:[%s336 + $0x10] sm:$0xff] %vm871, %v984
        %1064 = vst.msk [vmem:[%s336 + $0x18] sm:$0xff] %vm871, %v1037
        %v1065 = vpack.c.bf16 %v901, %v901
        %v1066 = vpack.c.bf16 %v957, %v957
        %v1067 = vpack.c.bf16 %v1002, %v1002
        %v1068 = vpack.c.bf16 %v1058, %v1058
        %v1069 = vld [vmem:[#allocation2 + $0x64] sm:$0xff]
        %v1070 = vld [vmem:[#allocation2 + $0x6c] sm:$0xff]
        %v1071 = vld [vmem:[#allocation2 + $0xec] sm:$0xff]
        %v1072 = vld [vmem:[#allocation2 + $0xf4] sm:$0xff]
        %v1073 = vld [vmem:[#allocation2 + $0x174] sm:$0xff]
        %v1074 = vld [vmem:[#allocation2 + $0x17c] sm:$0xff]
        %v1075 = vld [vmem:[#allocation2 + $0x1fc] sm:$0xff]
        %v1076 = vld [vmem:[#allocation2 + $0x204] sm:$0xff]
        %v1077 = vld [vmem:[#allocation2 + $0x284] sm:$0xff]
        %v1078 = vld [vmem:[#allocation2 + $0x28c] sm:$0xff]
        %v1079 = vld [vmem:[#allocation2 + $0x30c] sm:$0xff]
        %v1080 = vld [vmem:[#allocation2 + $0x314] sm:$0xff]
        %v1081 = vld [vmem:[#allocation2 + $0x394] sm:$0xff]
        %v1082 = vld [vmem:[#allocation2 + $0x39c] sm:$0xff]
        %v1083 = vld [vmem:[#allocation2 + $0x41c] sm:$0xff]
        %v1084 = vld [vmem:[#allocation2 + $0x424] sm:$0xff]
        %v1085 = vld [vmem:[%s5 + $0x3] ss:$0 sm:$0xff]
        %v1102 = vunpack.c.l.b16 %v1069
        %v1103 = vunpack.c.h.b16 %v1069
        %v1104 = vunpack.c.l.b16 %v1070
        %v1105 = vunpack.c.h.b16 %v1070
        %v1106 = vunpack.c.l.b16 %v1071
        %v1107 = vunpack.c.h.b16 %v1071
        %v1108 = vunpack.c.l.b16 %v1072
        %v1109 = vunpack.c.h.b16 %v1072
        %v1110 = vunpack.c.l.b16 %v1073
        %v1111 = vunpack.c.h.b16 %v1073
        %v1112 = vunpack.c.l.b16 %v1074
        %v1113 = vunpack.c.h.b16 %v1074
        %v1114 = vunpack.c.l.b16 %v1075
        %v1115 = vunpack.c.h.b16 %v1075
        %v1116 = vunpack.c.l.b16 %v1076
        %v1117 = vunpack.c.h.b16 %v1076
        %v1118 = vunpack.c.l.b16 %v1077
        %v1119 = vunpack.c.h.b16 %v1077
        %v1120 = vunpack.c.l.b16 %v1078
        %v1121 = vunpack.c.h.b16 %v1078
        %v1122 = vunpack.c.l.b16 %v1079
        %v1123 = vunpack.c.h.b16 %v1079
        %v1124 = vunpack.c.l.b16 %v1080
        %v1125 = vunpack.c.h.b16 %v1080
        %v1126 = vunpack.c.l.b16 %v1081
        %v1127 = vunpack.c.h.b16 %v1081
        %v1128 = vunpack.c.l.b16 %v1082
        %v1129 = vunpack.c.h.b16 %v1082
        %v1130 = vunpack.c.l.b16 %v1083
        %v1131 = vunpack.c.h.b16 %v1083
        %v1132 = vunpack.c.l.b16 %v1084
        %v1133 = vunpack.c.h.b16 %v1084
        %v1134 = vpack.c.b16 %v1106, %v1102
        %v1135 = vpack.c.b16 %v1107, %v1103
        %v1136 = vpack.c.b16 %v1108, %v1104
        %v1137 = vpack.c.b16 %v1109, %v1105
        %v1138 = vpack.c.b16 %v1114, %v1110
        %v1139 = vpack.c.b16 %v1115, %v1111
        %v1140 = vpack.c.b16 %v1116, %v1112
        %v1141 = vpack.c.b16 %v1117, %v1113
        %v1142 = vpack.c.b16 %v1122, %v1118
        %v1143 = vpack.c.b16 %v1123, %v1119
        %v1144 = vpack.c.b16 %v1124, %v1120
        %v1145 = vpack.c.b16 %v1125, %v1121
        %v1146 = vpack.c.b16 %v1130, %v1126
        %v1147 = vpack.c.b16 %v1131, %v1127
        %v1148 = vpack.c.b16 %v1132, %v1128
        %v1149 = vpack.c.b16 %v1133, %v1129
        %1166 = vmatpush.bf16.xpose.msra.mxu0 0
        %1167 = vmatpush.bf16.xpose.msra.mxu0 0
        %1168 = vmatpush.bf16.xpose.msra.mxu0 0
        %1169 = vmatpush.bf16.xpose.msra.mxu0 0
        %1170 = vmatpush.bf16.xpose.msra.mxu0 %v1146
        %1171 = vmatpush.bf16.xpose.msra.mxu0 %v1142
        %1172 = vmatpush.bf16.xpose.msra.mxu0 %v1138
        %1173 = vmatpush.bf16.xpose.msra.mxu0 %v1134
        %1174 = vmatmul.bf16.gmra.mxu0 %v1065
        %v1175 = vpop.f32.mrf.mxu0
        %v1176 = vadd.f32 %v1085, %v1175
        %v1177 = vpop.f32.mrf.mxu0
        %1178 = vdwg.mxu0
        %1179 = vmatpush.bf16.xpose.msra.mxu0 0
        %1180 = vmatpush.bf16.xpose.msra.mxu0 0
        %1181 = vmatpush.bf16.xpose.msra.mxu0 0
        %1182 = vmatpush.bf16.xpose.msra.mxu0 0
        %1183 = vmatpush.bf16.xpose.msra.mxu0 %v1147
        %1184 = vmatpush.bf16.xpose.msra.mxu0 %v1143
        %1185 = vmatpush.bf16.xpose.msra.mxu0 %v1139
        %1186 = vmatpush.bf16.xpose.msra.mxu0 %v1135
        %1187 = vmatmul.bf16.gmra.mxu0 %v1066
        %v1188 = vpop.f32.mrf.mxu0
        %v1189 = vadd.f32 %v1176, %v1188
        %v1190 = vpop.f32.mrf.mxu0
        %1191 = vdwg.mxu0
        %1192 = vmatpush.bf16.xpose.msra.mxu0 0
        %1193 = vmatpush.bf16.xpose.msra.mxu0 0
        %1194 = vmatpush.bf16.xpose.msra.mxu0 0
        %1195 = vmatpush.bf16.xpose.msra.mxu0 0
        %1196 = vmatpush.bf16.xpose.msra.mxu0 %v1148
        %1197 = vmatpush.bf16.xpose.msra.mxu0 %v1144
        %1198 = vmatpush.bf16.xpose.msra.mxu0 %v1140
        %1199 = vmatpush.bf16.xpose.msra.mxu0 %v1136
        %1200 = vmatmul.bf16.gmra.mxu0 %v1067
        %v1201 = vpop.f32.mrf.mxu0
        %v1202 = vadd.f32 %v1189, %v1201
        %v1203 = vpop.f32.mrf.mxu0
        %1204 = vdwg.mxu0
        %1205 = vmatpush.bf16.xpose.msra.mxu0 0
        %1206 = vmatpush.bf16.xpose.msra.mxu0 0
        %1207 = vmatpush.bf16.xpose.msra.mxu0 0
        %1208 = vmatpush.bf16.xpose.msra.mxu0 0
        %1209 = vmatpush.bf16.xpose.msra.mxu0 %v1149
        %1210 = vmatpush.bf16.xpose.msra.mxu0 %v1145
        %1211 = vmatpush.bf16.xpose.msra.mxu0 %v1141
        %1212 = vmatpush.bf16.xpose.msra.mxu0 %v1137
        %1213 = vmatmul.bf16.gmra.mxu0 %v1068
        %v1214 = vpop.f32.mrf.mxu0
        %v1215 = vadd.f32 %v1202, %v1214
        %v1216 = vpop.f32.mrf.mxu0
        %1217 = vdwg.mxu0
        %v1218 = vadd.f32 %v357, %v1215
        %v1219 = vsel %vm679, %v1218, 0.0
        %1220 = vadd.xlane.f32.xlu0 %v1219
        %v1221 = vpop.xlane.xlu0 %1220
        %v1222 = vrcp.pop 64.0
        %v1223 = vmul.f32 64.0, %v1222
        %v1224 = vsub.f32 1.0, %v1223
        %v1225 = vmul.f32 %v1222, %v1224
        %v1226 = vadd.f32 %v1222, %v1225
        %vm1227 = vweird.f32 %v1222
        %v1228 = vsel %vm1227, %v1222, %v1226
        %v1229 = vmul.f32 %v1221, %v1228
        %v1230 = vsub.f32 %v1218, %v1229
        %v1231 = vmul.f32 %v1230, %v1230
        %v1232 = vsel %vm679, %v1231, 0.0
        %1233 = vadd.xlane.f32.xlu0 %v1232
        %v1234 = vpop.xlane.xlu0 %1233
        %v1235 = vmul.f32 %v1234, %v1228
        %v1236 = vadd.f32 %v1235, 1e-12
        %v1237 = vrsqrt.pop %v1236
        %v1238 = vmul.f32 %v1237, %v1236
        %v1239 = vmul.f32 %v1238, %v1237
        %v1240 = vmul.f32 0.5, %v1239
        %v1241 = vsub.f32 1.5, %v1240
        %v1242 = vmul.f32 %v1237, %v1241
        %vm1243 = vweird.f32 %v1236
        %vm1244 = vweird.f32 %v1237
        %vm1245 = vmor %vm1243, %vm1244
        %v1246 = vsel %vm1245, %v1237, %v1242
        %v1247 = vmul.f32 %v1230, %v1246
        %v1248 = vld [vmem:[%s5 + $0x4] ss:$0 sm:$0xff]
        %v1249 = vmul.f32 %v1247, %v1248
        %v1250 = vld [vmem:[%s5 + $0x5] ss:$0 sm:$0xff]
        %v1251 = vadd.f32 %v1249, %v1250
        %v1252 = vpack.c.bf16 %v1251, %v1251
        %v1253 = vld [vmem:[#allocation2 + $0x30] sm:$0xff]
        %v1254 = vld [vmem:[#allocation2 + $0x38] sm:$0xff]
        %v1255 = vld [vmem:[#allocation2 + $0xb8] sm:$0xff]
        %v1256 = vld [vmem:[#allocation2 + $0xc0] sm:$0xff]
        %v1257 = vld [vmem:[#allocation2 + $0x140] sm:$0xff]
        %v1258 = vld [vmem:[#allocation2 + $0x148] sm:$0xff]
        %v1259 = vld [vmem:[#allocation2 + $0x1c8] sm:$0xff]
        %v1260 = vld [vmem:[#allocation2 + $0x1d0] sm:$0xff]
        %v1261 = vld [vmem:[#allocation2 + $0x250] sm:$0xff]
        %v1262 = vld [vmem:[#allocation2 + $0x258] sm:$0xff]
        %v1263 = vld [vmem:[#allocation2 + $0x2d8] sm:$0xff]
        %v1264 = vld [vmem:[#allocation2 + $0x2e0] sm:$0xff]
        %v1265 = vld [vmem:[#allocation2 + $0x360] sm:$0xff]
        %v1266 = vld [vmem:[#allocation2 + $0x368] sm:$0xff]
        %v1267 = vld [vmem:[#allocation2 + $0x3e8] sm:$0xff]
        %v1268 = vld [vmem:[#allocation2 + $0x3f0] sm:$0xff]
        %s1269 = scalar_lea.vmem %s5, 1
        %v1270 = vld [vmem:[%s1269] ss:$8 sm:$0xf]
        %v1272 = vperm.slane %v1270, 0
        %v1273 = vperm.slane %v1270, 1
        %v1274 = vperm.slane %v1270, 2
        %v1275 = vperm.slane %v1270, 3
        %v1296 = vunpack.c.l.b16 %v1253
        %v1297 = vunpack.c.h.b16 %v1253
        %v1298 = vunpack.c.l.b16 %v1254
        %v1299 = vunpack.c.h.b16 %v1254
        %v1300 = vunpack.c.l.b16 %v1255
        %v1301 = vunpack.c.h.b16 %v1255
        %v1302 = vunpack.c.l.b16 %v1256
        %v1303 = vunpack.c.h.b16 %v1256
        %v1304 = vunpack.c.l.b16 %v1257
        %v1305 = vunpack.c.h.b16 %v1257
        %v1306 = vunpack.c.l.b16 %v1258
        %v1307 = vunpack.c.h.b16 %v1258
        %v1308 = vunpack.c.l.b16 %v1259
        %v1309 = vunpack.c.h.b16 %v1259
        %v1310 = vunpack.c.l.b16 %v1260
        %v1311 = vunpack.c.h.b16 %v1260
        %v1312 = vunpack.c.l.b16 %v1261
        %v1313 = vunpack.c.h.b16 %v1261
        %v1314 = vunpack.c.l.b16 %v1262
        %v1315 = vunpack.c.h.b16 %v1262
        %v1316 = vunpack.c.l.b16 %v1263
        %v1317 = vunpack.c.h.b16 %v1263
        %v1318 = vunpack.c.l.b16 %v1264
        %v1319 = vunpack.c.h.b16 %v1264
        %v1320 = vunpack.c.l.b16 %v1265
        %v1321 = vunpack.c.h.b16 %v1265
        %v1322 = vunpack.c.l.b16 %v1266
        %v1323 = vunpack.c.h.b16 %v1266
        %v1324 = vunpack.c.l.b16 %v1267
        %v1325 = vunpack.c.h.b16 %v1267
        %v1326 = vunpack.c.l.b16 %v1268
        %v1327 = vunpack.c.h.b16 %v1268
        %v1328 = vpack.c.b16 %v1300, %v1296
        %v1329 = vpack.c.b16 %v1301, %v1297
        %v1330 = vpack.c.b16 %v1302, %v1298
        %v1331 = vpack.c.b16 %v1303, %v1299
        %v1332 = vpack.c.b16 %v1308, %v1304
        %v1333 = vpack.c.b16 %v1309, %v1305
        %v1334 = vpack.c.b16 %v1310, %v1306
        %v1335 = vpack.c.b16 %v1311, %v1307
        %v1336 = vpack.c.b16 %v1316, %v1312
        %v1337 = vpack.c.b16 %v1317, %v1313
        %v1338 = vpack.c.b16 %v1318, %v1314
        %v1339 = vpack.c.b16 %v1319, %v1315
        %v1340 = vpack.c.b16 %v1324, %v1320
        %v1341 = vpack.c.b16 %v1325, %v1321
        %v1342 = vpack.c.b16 %v1326, %v1322
        %v1343 = vpack.c.b16 %v1327, %v1323
        %v1361 = vsel %vm679, %v1252, 0
        %1363 = vmatpush.bf16.msra.mxu0 0
        %1364 = vmatpush.bf16.msra.mxu0 0
        %1365 = vmatpush.bf16.msra.mxu0 0
        %1366 = vmatpush.bf16.msra.mxu0 0
        %1367 = vmatpush.bf16.msra.mxu0 %v1340
        %1368 = vmatpush.bf16.msra.mxu0 %v1336
        %1369 = vmatpush.bf16.msra.mxu0 %v1332
        %1370 = vmatpush.bf16.msra.mxu0 %v1328
        %1371 = vmatmul.bf16.gmra.mxu0 %v1361
        %v1372 = vpop.f32.mrf.mxu0
        %v1373 = vadd.f32 %v1272, %v1372
        %v1374 = vpop.f32.mrf.mxu0
        %1375 = vdwg.mxu0
        %1376 = vmatpush.bf16.msra.mxu0 0
        %1377 = vmatpush.bf16.msra.mxu0 0
        %1378 = vmatpush.bf16.msra.mxu0 0
        %1379 = vmatpush.bf16.msra.mxu0 0
        %1380 = vmatpush.bf16.msra.mxu0 %v1341
        %1381 = vmatpush.bf16.msra.mxu0 %v1337
        %1382 = vmatpush.bf16.msra.mxu0 %v1333
        %1383 = vmatpush.bf16.msra.mxu0 %v1329
        %1384 = vmatmul.bf16.gmra.mxu0 %v1361
        %v1385 = vpop.f32.mrf.mxu0
        %v1386 = vadd.f32 %v1273, %v1385
        %v1387 = vpop.f32.mrf.mxu0
        %1388 = vdwg.mxu0
        %1389 = vmatpush.bf16.msra.mxu0 0
        %1390 = vmatpush.bf16.msra.mxu0 0
        %1391 = vmatpush.bf16.msra.mxu0 0
        %1392 = vmatpush.bf16.msra.mxu0 0
        %1393 = vmatpush.bf16.msra.mxu0 %v1342
        %1394 = vmatpush.bf16.msra.mxu0 %v1338
        %1395 = vmatpush.bf16.msra.mxu0 %v1334
        %1396 = vmatpush.bf16.msra.mxu0 %v1330
        %1397 = vmatmul.bf16.gmra.mxu0 %v1361
        %v1398 = vpop.f32.mrf.mxu0
        %v1399 = vadd.f32 %v1274, %v1398
        %v1400 = vpop.f32.mrf.mxu0
        %1401 = vdwg.mxu0
        %1402 = vmatpush.bf16.msra.mxu0 0
        %1403 = vmatpush.bf16.msra.mxu0 0
        %1404 = vmatpush.bf16.msra.mxu0 0
        %1405 = vmatpush.bf16.msra.mxu0 0
        %1406 = vmatpush.bf16.msra.mxu0 %v1343
        %1407 = vmatpush.bf16.msra.mxu0 %v1339
        %1408 = vmatpush.bf16.msra.mxu0 %v1335
        %1409 = vmatpush.bf16.msra.mxu0 %v1331
        %1410 = vmatmul.bf16.gmra.mxu0 %v1361
        %v1411 = vpop.f32.mrf.mxu0
        %v1412 = vadd.f32 %v1275, %v1411
        %v1413 = vpop.f32.mrf.mxu0
        %1414 = vdwg.mxu0
        %v1415 = vpack.c.bf16 %v358, %v358
        %v1416 = vld [vmem:[#allocation2 + $0x40] sm:$0xff]
        %v1417 = vld [vmem:[#allocation2 + $0x48] sm:$0xff]
        %v1418 = vld [vmem:[#allocation2 + $0x50] sm:$0xff]
        %v1419 = vld [vmem:[#allocation2 + $0x58] sm:$0xff]
        %v1420 = vld [vmem:[#allocation2 + $0xc8] sm:$0xff]
        %v1421 = vld [vmem:[#allocation2 + $0xd0] sm:$0xff]
        %v1422 = vld [vmem:[#allocation2 + $0xd8] sm:$0xff]
        %v1423 = vld [vmem:[#allocation2 + $0xe0] sm:$0xff]
        %v1424 = vld [vmem:[#allocation2 + $0x150] sm:$0xff]
        %v1425 = vld [vmem:[#allocation2 + $0x158] sm:$0xff]
        %v1426 = vld [vmem:[#allocation2 + $0x160] sm:$0xff]
        %v1427 = vld [vmem:[#allocation2 + $0x168] sm:$0xff]
        %v1428 = vld [vmem:[#allocation2 + $0x1d8] sm:$0xff]
        %v1429 = vld [vmem:[#allocation2 + $0x1e0] sm:$0xff]
        %v1430 = vld [vmem:[#allocation2 + $0x1e8] sm:$0xff]
        %v1431 = vld [vmem:[#allocation2 + $0x1f0] sm:$0xff]
        %v1432 = vld [vmem:[#allocation2 + $0x260] sm:$0xff]
        %v1433 = vld [vmem:[#allocation2 + $0x268] sm:$0xff]
        %v1434 = vld [vmem:[#allocation2 + $0x270] sm:$0xff]
        %v1435 = vld [vmem:[#allocation2 + $0x278] sm:$0xff]
        %v1436 = vld [vmem:[#allocation2 + $0x2e8] sm:$0xff]
        %v1437 = vld [vmem:[#allocation2 + $0x2f0] sm:$0xff]
        %v1438 = vld [vmem:[#allocation2 + $0x2f8] sm:$0xff]
        %v1439 = vld [vmem:[#allocation2 + $0x300] sm:$0xff]
        %v1440 = vld [vmem:[#allocation2 + $0x370] sm:$0xff]
        %v1441 = vld [vmem:[#allocation2 + $0x378] sm:$0xff]
        %v1442 = vld [vmem:[#allocation2 + $0x380] sm:$0xff]
        %v1443 = vld [vmem:[#allocation2 + $0x388] sm:$0xff]
        %v1444 = vld [vmem:[#allocation2 + $0x3f8] sm:$0xff]
        %v1445 = vld [vmem:[#allocation2 + $0x400] sm:$0xff]
        %v1446 = vld [vmem:[#allocation2 + $0x408] sm:$0xff]
        %v1447 = vld [vmem:[#allocation2 + $0x410] sm:$0xff]
        %s1448 = scalar_lea.vmem %s5, 2
        %v1449 = vld [vmem:[%s1448] ss:$8 sm:$0xf]
        %v1450 = vld [vmem:[%s1448] ss:$8 sm:$0xf0]
        %v1451 = vor.u32 %v1449, %v1450
        %v1453 = vperm.slane %v1451, 0
        %v1454 = vperm.slane %v1451, 1
        %v1455 = vperm.slane %v1451, 2
        %v1456 = vperm.slane %v1451, 3
        %v1457 = vperm.slane %v1451, 4
        %v1458 = vperm.slane %v1451, 5
        %v1459 = vperm.slane %v1451, 6
        %v1460 = vperm.slane %v1451, 7
        %v1501 = vunpack.c.l.b16 %v1416
        %v1502 = vunpack.c.h.b16 %v1416
        %v1503 = vunpack.c.l.b16 %v1417
        %v1504 = vunpack.c.h.b16 %v1417
        %v1505 = vunpack.c.l.b16 %v1418
        %v1506 = vunpack.c.h.b16 %v1418
        %v1507 = vunpack.c.l.b16 %v1419
        %v1508 = vunpack.c.h.b16 %v1419
        %v1509 = vunpack.c.l.b16 %v1420
        %v1510 = vunpack.c.h.b16 %v1420
        %v1511 = vunpack.c.l.b16 %v1421
        %v1512 = vunpack.c.h.b16 %v1421
        %v1513 = vunpack.c.l.b16 %v1422
        %v1514 = vunpack.c.h.b16 %v1422
        %v1515 = vunpack.c.l.b16 %v1423
        %v1516 = vunpack.c.h.b16 %v1423
        %v1517 = vunpack.c.l.b16 %v1424
        %v1518 = vunpack.c.h.b16 %v1424
        %v1519 = vunpack.c.l.b16 %v1425
        %v1520 = vunpack.c.h.b16 %v1425
        %v1521 = vunpack.c.l.b16 %v1426
        %v1522 = vunpack.c.h.b16 %v1426
        %v1523 = vunpack.c.l.b16 %v1427
        %v1524 = vunpack.c.h.b16 %v1427
        %v1525 = vunpack.c.l.b16 %v1428
        %v1526 = vunpack.c.h.b16 %v1428
        %v1527 = vunpack.c.l.b16 %v1429
        %v1528 = vunpack.c.h.b16 %v1429
        %v1529 = vunpack.c.l.b16 %v1430
        %v1530 = vunpack.c.h.b16 %v1430
        %v1531 = vunpack.c.l.b16 %v1431
        %v1532 = vunpack.c.h.b16 %v1431
        %v1533 = vunpack.c.l.b16 %v1432
        %v1534 = vunpack.c.h.b16 %v1432
        %v1535 = vunpack.c.l.b16 %v1433
        %v1536 = vunpack.c.h.b16 %v1433
        %v1537 = vunpack.c.l.b16 %v1434
        %v1538 = vunpack.c.h.b16 %v1434
        %v1539 = vunpack.c.l.b16 %v1435
        %v1540 = vunpack.c.h.b16 %v1435
        %v1541 = vunpack.c.l.b16 %v1436
        %v1542 = vunpack.c.h.b16 %v1436
        %v1543 = vunpack.c.l.b16 %v1437
        %v1544 = vunpack.c.h.b16 %v1437
        %v1545 = vunpack.c.l.b16 %v1438
        %v1546 = vunpack.c.h.b16 %v1438
        %v1547 = vunpack.c.l.b16 %v1439
        %v1548 = vunpack.c.h.b16 %v1439
        %v1549 = vunpack.c.l.b16 %v1440
        %v1550 = vunpack.c.h.b16 %v1440
        %v1551 = vunpack.c.l.b16 %v1441
        %v1552 = vunpack.c.h.b16 %v1441
        %v1553 = vunpack.c.l.b16 %v1442
        %v1554 = vunpack.c.h.b16 %v1442
        %v1555 = vunpack.c.l.b16 %v1443
        %v1556 = vunpack.c.h.b16 %v1443
        %v1557 = vunpack.c.l.b16 %v1444
        %v1558 = vunpack.c.h.b16 %v1444
        %v1559 = vunpack.c.l.b16 %v1445
        %v1560 = vunpack.c.h.b16 %v1445
        %v1561 = vunpack.c.l.b16 %v1446
        %v1562 = vunpack.c.h.b16 %v1446
        %v1563 = vunpack.c.l.b16 %v1447
        %v1564 = vunpack.c.h.b16 %v1447
        %v1565 = vpack.c.b16 %v1509, %v1501
        %v1566 = vpack.c.b16 %v1510, %v1502
        %v1567 = vpack.c.b16 %v1511, %v1503
        %v1568 = vpack.c.b16 %v1512, %v1504
        %v1569 = vpack.c.b16 %v1513, %v1505
        %v1570 = vpack.c.b16 %v1514, %v1506
        %v1571 = vpack.c.b16 %v1515, %v1507
        %v1572 = vpack.c.b16 %v1516, %v1508
        %v1573 = vpack.c.b16 %v1525, %v1517
        %v1574 = vpack.c.b16 %v1526, %v1518
        %v1575 = vpack.c.b16 %v1527, %v1519
        %v1576 = vpack.c.b16 %v1528, %v1520
        %v1577 = vpack.c.b16 %v1529, %v1521
        %v1578 = vpack.c.b16 %v1530, %v1522
        %v1579 = vpack.c.b16 %v1531, %v1523
        %v1580 = vpack.c.b16 %v1532, %v1524
        %v1581 = vpack.c.b16 %v1541, %v1533
        %v1582 = vpack.c.b16 %v1542, %v1534
        %v1583 = vpack.c.b16 %v1543, %v1535
        %v1584 = vpack.c.b16 %v1544, %v1536
        %v1585 = vpack.c.b16 %v1545, %v1537
        %v1586 = vpack.c.b16 %v1546, %v1538
        %v1587 = vpack.c.b16 %v1547, %v1539
        %v1588 = vpack.c.b16 %v1548, %v1540
        %v1589 = vpack.c.b16 %v1557, %v1549
        %v1590 = vpack.c.b16 %v1558, %v1550
        %v1591 = vpack.c.b16 %v1559, %v1551
        %v1592 = vpack.c.b16 %v1560, %v1552
        %v1593 = vpack.c.b16 %v1561, %v1553
        %v1594 = vpack.c.b16 %v1562, %v1554
        %v1595 = vpack.c.b16 %v1563, %v1555
        %v1596 = vpack.c.b16 %v1564, %v1556
        %v1630 = vsel %vm679, %v1415, 0
        %1632 = vmatpush.bf16.msra.mxu0 0
        %1633 = vmatpush.bf16.msra.mxu0 0
        %1634 = vmatpush.bf16.msra.mxu0 0
        %1635 = vmatpush.bf16.msra.mxu0 0
        %1636 = vmatpush.bf16.msra.mxu0 %v1589
        %1637 = vmatpush.bf16.msra.mxu0 %v1581
        %1638 = vmatpush.bf16.msra.mxu0 %v1573
        %1639 = vmatpush.bf16.msra.mxu0 %v1565
        %1640 = vmatmul.bf16.gmra.mxu0 %v1630
        %v1641 = vpop.f32.mrf.mxu0
        %v1642 = vadd.f32 %v1453, %v1641
        %v1643 = vpop.f32.mrf.mxu0
        %1644 = vdwg.mxu0
        %1645 = vmatpush.bf16.msra.mxu0 0
        %1646 = vmatpush.bf16.msra.mxu0 0
        %1647 = vmatpush.bf16.msra.mxu0 0
        %1648 = vmatpush.bf16.msra.mxu0 0
        %1649 = vmatpush.bf16.msra.mxu0 %v1590
        %1650 = vmatpush.bf16.msra.mxu0 %v1582
        %1651 = vmatpush.bf16.msra.mxu0 %v1574
        %1652 = vmatpush.bf16.msra.mxu0 %v1566
        %1653 = vmatmul.bf16.gmra.mxu0 %v1630
        %v1654 = vpop.f32.mrf.mxu0
        %v1655 = vadd.f32 %v1454, %v1654
        %v1656 = vpop.f32.mrf.mxu0
        %1657 = vdwg.mxu0
        %1658 = vmatpush.bf16.msra.mxu0 0
        %1659 = vmatpush.bf16.msra.mxu0 0
        %1660 = vmatpush.bf16.msra.mxu0 0
        %1661 = vmatpush.bf16.msra.mxu0 0
        %1662 = vmatpush.bf16.msra.mxu0 %v1591
        %1663 = vmatpush.bf16.msra.mxu0 %v1583
        %1664 = vmatpush.bf16.msra.mxu0 %v1575
        %1665 = vmatpush.bf16.msra.mxu0 %v1567
        %1666 = vmatmul.bf16.gmra.mxu0 %v1630
        %v1667 = vpop.f32.mrf.mxu0
        %v1668 = vadd.f32 %v1455, %v1667
        %v1669 = vpop.f32.mrf.mxu0
        %1670 = vdwg.mxu0
        %1671 = vmatpush.bf16.msra.mxu0 0
        %1672 = vmatpush.bf16.msra.mxu0 0
        %1673 = vmatpush.bf16.msra.mxu0 0
        %1674 = vmatpush.bf16.msra.mxu0 0
        %1675 = vmatpush.bf16.msra.mxu0 %v1592
        %1676 = vmatpush.bf16.msra.mxu0 %v1584
        %1677 = vmatpush.bf16.msra.mxu0 %v1576
        %1678 = vmatpush.bf16.msra.mxu0 %v1568
        %1679 = vmatmul.bf16.gmra.mxu0 %v1630
        %v1680 = vpop.f32.mrf.mxu0
        %v1681 = vadd.f32 %v1456, %v1680
        %v1682 = vpop.f32.mrf.mxu0
        %1683 = vdwg.mxu0
        %1684 = vmatpush.bf16.msra.mxu0 0
        %1685 = vmatpush.bf16.msra.mxu0 0
        %1686 = vmatpush.bf16.msra.mxu0 0
        %1687 = vmatpush.bf16.msra.mxu0 0
        %1688 = vmatpush.bf16.msra.mxu0 %v1593
        %1689 = vmatpush.bf16.msra.mxu0 %v1585
        %1690 = vmatpush.bf16.msra.mxu0 %v1577
        %1691 = vmatpush.bf16.msra.mxu0 %v1569
        %1692 = vmatmul.bf16.gmra.mxu0 %v1630
        %v1693 = vpop.f32.mrf.mxu0
        %v1694 = vadd.f32 %v1457, %v1693
        %v1695 = vpop.f32.mrf.mxu0
        %1696 = vdwg.mxu0
        %1697 = vmatpush.bf16.msra.mxu0 0
        %1698 = vmatpush.bf16.msra.mxu0 0
        %1699 = vmatpush.bf16.msra.mxu0 0
        %1700 = vmatpush.bf16.msra.mxu0 0
        %1701 = vmatpush.bf16.msra.mxu0 %v1594
        %1702 = vmatpush.bf16.msra.mxu0 %v1586
        %1703 = vmatpush.bf16.msra.mxu0 %v1578
        %1704 = vmatpush.bf16.msra.mxu0 %v1570
        %1705 = vmatmul.bf16.gmra.mxu0 %v1630
        %v1706 = vpop.f32.mrf.mxu0
        %v1707 = vadd.f32 %v1458, %v1706
        %v1708 = vpop.f32.mrf.mxu0
        %1709 = vdwg.mxu0
        %1710 = vmatpush.bf16.msra.mxu0 0
        %1711 = vmatpush.bf16.msra.mxu0 0
        %1712 = vmatpush.bf16.msra.mxu0 0
        %1713 = vmatpush.bf16.msra.mxu0 0
        %1714 = vmatpush.bf16.msra.mxu0 %v1595
        %1715 = vmatpush.bf16.msra.mxu0 %v1587
        %1716 = vmatpush.bf16.msra.mxu0 %v1579
        %1717 = vmatpush.bf16.msra.mxu0 %v1571
        %1718 = vmatmul.bf16.gmra.mxu0 %v1630
        %v1719 = vpop.f32.mrf.mxu0
        %v1720 = vadd.f32 %v1459, %v1719
        %v1721 = vpop.f32.mrf.mxu0
        %1722 = vdwg.mxu0
        %1723 = vmatpush.bf16.msra.mxu0 0
        %1724 = vmatpush.bf16.msra.mxu0 0
        %1725 = vmatpush.bf16.msra.mxu0 0
        %1726 = vmatpush.bf16.msra.mxu0 0
        %1727 = vmatpush.bf16.msra.mxu0 %v1596
        %1728 = vmatpush.bf16.msra.mxu0 %v1588
        %1729 = vmatpush.bf16.msra.mxu0 %v1580
        %1730 = vmatpush.bf16.msra.mxu0 %v1572
        %1731 = vmatmul.bf16.gmra.mxu0 %v1630
        %v1732 = vpop.f32.mrf.mxu0
        %v1733 = vadd.f32 %v1460, %v1732
        %v1734 = vpop.f32.mrf.mxu0
        %1735 = vdwg.mxu0
        %v1736 = vpack.c.bf16 %v1386, %v1373
        %v1737 = vpack.c.bf16 %v1412, %v1399
        %v1738 = vpack.c.bf16 %v1655, %v1642
        %v1739 = vpack.c.bf16 %v1681, %v1668
        %v1740 = vpack.c.bf16 %v1707, %v1694
        %v1741 = vpack.c.bf16 %v1733, %v1720
        %s1742 = scalar_lea.vmem %s3, %s27
        %v1743 = vld [vmem:[%s1742] sm:$0x1]
        %vm1744 = vcmp.ne.s32.totalorder %v1743, 0
        %v1745 = vsel %vm1744, 1, 0
        %v1746 = vperm.slane %v1745, 0
        %vm1747 = vcmp.eq.s32.totalorder %v1746, 1
        %1748 = vmatpush.bf16.xpose.msra.mxu0 0
        %1749 = vmatpush.bf16.xpose.msra.mxu0 0
        %1750 = vmatpush.bf16.xpose.msra.mxu0 0
        %1751 = vmatpush.bf16.xpose.msra.mxu0 0
        %1752 = vmatpush.bf16.xpose.msra.mxu0 0
        %1753 = vmatpush.bf16.xpose.msra.mxu0 0
        %1754 = vmatpush.bf16.xpose.msra.mxu0 0
        %1755 = vmatpush.bf16.xpose.msra.mxu0 %v1738
        %1756 = vmatmul.bf16.gmra.mxu0 %v1736
        %v1757 = vpop.f32.mrf.mxu0
        %v1758 = vadd.f32 0.0, %v1757
        %v1759 = vpop.f32.mrf.mxu0
        %1760 = vdwg.mxu0
        %v1761 = vsel %vm1747, -1e+09, %v1758
        %v1762 = vsel %vm871, %v1761, -inf
        %1763 = vmax.xlane.f32.xlu0 %v1762
        %v1764 = vpop.xlane.xlu0 %1763
        %v1765 = vsub.f32 %v1761, %v1764
        %v1766 = vmul.f32 %v1765, 1.442695
        %v1767 = vpow.pop %v1766
        %v1768 = vsel %vm871, %v1767, 0.0
        %1769 = vadd.xlane.f32.xlu0 %v1768
        %v1770 = vpop.xlane.xlu0 %1769
        %v1771 = vrcp.pop %v1770
        %v1772 = vmul.f32 %v1767, %v1771
        %v1773 = vpack.c.bf16 %v1772, %v1772
        %v1775 = vsel %vm871, %v1773, 0
        %v1778 = vsel %vm887, %v1740, 0
        %1780 = vmatpush.bf16.msra.mxu0 0
        %1781 = vmatpush.bf16.msra.mxu0 0
        %1782 = vmatpush.bf16.msra.mxu0 0
        %1783 = vmatpush.bf16.msra.mxu0 0
        %1784 = vmatpush.bf16.msra.mxu0 0
        %1785 = vmatpush.bf16.msra.mxu0 0
        %1786 = vmatpush.bf16.msra.mxu0 0
        %1787 = vmatpush.bf16.msra.mxu0 %v1778
        %1788 = vmatmul.bf16.gmra.mxu0 %v1775
        %v1789 = vpop.f32.mrf.mxu0
        %v1790 = vadd.f32 0.0, %v1789
        %v1791 = vpop.f32.mrf.mxu0
        %1792 = vdwg.mxu0
        %v1794 = vunpack.c.h.b16 %v1736
        %v1795 = vpack.c.b16 %v1794, %v1794
        %v1798 = vunpack.c.h.b16 %v1738
        %v1799 = vpack.c.b16 %v1798, %v1798
        %1801 = vmatpush.bf16.xpose.msra.mxu0 0
        %1802 = vmatpush.bf16.xpose.msra.mxu0 0
        %1803 = vmatpush.bf16.xpose.msra.mxu0 0
        %1804 = vmatpush.bf16.xpose.msra.mxu0 0
        %1805 = vmatpush.bf16.xpose.msra.mxu0 0
        %1806 = vmatpush.bf16.xpose.msra.mxu0 0
        %1807 = vmatpush.bf16.xpose.msra.mxu0 0
        %1808 = vmatpush.bf16.xpose.msra.mxu0 %v1799
        %1809 = vmatmul.bf16.gmra.mxu0 %v1795
        %v1810 = vpop.f32.mrf.mxu0
        %v1811 = vadd.f32 0.0, %v1810
        %v1812 = vpop.f32.mrf.mxu0
        %1813 = vdwg.mxu0
        %v1814 = vsel %vm1747, -1e+09, %v1811
        %v1815 = vsel %vm871, %v1814, -inf
        %1816 = vmax.xlane.f32.xlu0 %v1815
        %v1817 = vpop.xlane.xlu0 %1816
        %v1818 = vsub.f32 %v1814, %v1817
        %v1819 = vmul.f32 %v1818, 1.442695
        %v1820 = vpow.pop %v1819
        %v1821 = vsel %vm871, %v1820, 0.0
        %1822 = vadd.xlane.f32.xlu0 %v1821
        %v1823 = vpop.xlane.xlu0 %1822
        %v1824 = vrcp.pop %v1823
        %v1825 = vmul.f32 %v1820, %v1824
        %v1826 = vpack.c.bf16 %v1825, %v1825
        %v1828 = vunpack.c.h.b16 %v1740
        %v1829 = vpack.c.b16 %v1828, %v1828
        %v1831 = vsel %vm871, %v1826, 0
        %v1834 = vsel %vm887, %v1829, 0
        %1836 = vmatpush.bf16.msra.mxu0 0
        %1837 = vmatpush.bf16.msra.mxu0 0
        %1838 = vmatpush.bf16.msra.mxu0 0
        %1839 = vmatpush.bf16.msra.mxu0 0
        %1840 = vmatpush.bf16.msra.mxu0 0
        %1841 = vmatpush.bf16.msra.mxu0 0
        %1842 = vmatpush.bf16.msra.mxu0 0
        %1843 = vmatpush.bf16.msra.mxu0 %v1834
        %1844 = vmatmul.bf16.gmra.mxu0 %v1831
        %v1845 = vpop.f32.mrf.mxu0
        %v1846 = vadd.f32 0.0, %v1845
        %v1847 = vpop.f32.mrf.mxu0
        %1848 = vdwg.mxu0
        %1849 = vmatpush.bf16.xpose.msra.mxu0 0
        %1850 = vmatpush.bf16.xpose.msra.mxu0 0
        %1851 = vmatpush.bf16.xpose.msra.mxu0 0
        %1852 = vmatpush.bf16.xpose.msra.mxu0 0
        %1853 = vmatpush.bf16.xpose.msra.mxu0 0
        %1854 = vmatpush.bf16.xpose.msra.mxu0 0
        %1855 = vmatpush.bf16.xpose.msra.mxu0 0
        %1856 = vmatpush.bf16.xpose.msra.mxu0 %v1739
        %1857 = vmatmul.bf16.gmra.mxu0 %v1737
        %v1858 = vpop.f32.mrf.mxu0
        %v1859 = vadd.f32 0.0, %v1858
        %v1860 = vpop.f32.mrf.mxu0
        %1861 = vdwg.mxu0
        %v1862 = vsel %vm1747, -1e+09, %v1859
        %v1863 = vsel %vm871, %v1862, -inf
        %1864 = vmax.xlane.f32.xlu0 %v1863
        %v1865 = vpop.xlane.xlu0 %1864
        %v1866 = vsub.f32 %v1862, %v1865
        %v1867 = vmul.f32 %v1866, 1.442695
        %v1868 = vpow.pop %v1867
        %v1869 = vsel %vm871, %v1868, 0.0
        %1870 = vadd.xlane.f32.xlu0 %v1869
        %v1871 = vpop.xlane.xlu0 %1870
        %v1872 = vrcp.pop %v1871
        %v1873 = vmul.f32 %v1868, %v1872
        %v1874 = vpack.c.bf16 %v1873, %v1873
        %v1876 = vsel %vm871, %v1874, 0
        %v1879 = vsel %vm887, %v1741, 0
        %1881 = vmatpush.bf16.msra.mxu0 0
        %1882 = vmatpush.bf16.msra.mxu0 0
        %1883 = vmatpush.bf16.msra.mxu0 0
        %1884 = vmatpush.bf16.msra.mxu0 0
        %1885 = vmatpush.bf16.msra.mxu0 0
        %1886 = vmatpush.bf16.msra.mxu0 0
        %1887 = vmatpush.bf16.msra.mxu0 0
        %1888 = vmatpush.bf16.msra.mxu0 %v1879
        %1889 = vmatmul.bf16.gmra.mxu0 %v1876
        %v1890 = vpop.f32.mrf.mxu0
        %v1891 = vadd.f32 0.0, %v1890
        %v1892 = vpop.f32.mrf.mxu0
        %1893 = vdwg.mxu0
        %v1895 = vunpack.c.h.b16 %v1737
        %v1896 = vpack.c.b16 %v1895, %v1895
        %v1899 = vunpack.c.h.b16 %v1739
        %v1900 = vpack.c.b16 %v1899, %v1899
        %1902 = vmatpush.bf16.xpose.msra.mxu0 0
        %1903 = vmatpush.bf16.xpose.msra.mxu0 0
        %1904 = vmatpush.bf16.xpose.msra.mxu0 0
        %1905 = vmatpush.bf16.xpose.msra.mxu0 0
        %1906 = vmatpush.bf16.xpose.msra.mxu0 0
        %1907 = vmatpush.bf16.xpose.msra.mxu0 0
        %1908 = vmatpush.bf16.xpose.msra.mxu0 0
        %1909 = vmatpush.bf16.xpose.msra.mxu0 %v1900
        %1910 = vmatmul.bf16.gmra.mxu0 %v1896
        %v1911 = vpop.f32.mrf.mxu0
        %v1912 = vadd.f32 0.0, %v1911
        %v1913 = vpop.f32.mrf.mxu0
        %1914 = vdwg.mxu0
        %v1915 = vsel %vm1747, -1e+09, %v1912
        %v1916 = vsel %vm871, %v1915, -inf
        %1917 = vmax.xlane.f32.xlu0 %v1916
        %v1918 = vpop.xlane.xlu0 %1917
        %v1919 = vsub.f32 %v1915, %v1918
        %v1920 = vmul.f32 %v1919, 1.442695
        %v1921 = vpow.pop %v1920
        %v1922 = vsel %vm871, %v1921, 0.0
        %1923 = vadd.xlane.f32.xlu0 %v1922
        %v1924 = vpop.xlane.xlu0 %1923
        %v1925 = vrcp.pop %v1924
        %v1926 = vmul.f32 %v1921, %v1925
        %v1927 = vpack.c.bf16 %v1926, %v1926
        %v1929 = vunpack.c.h.b16 %v1741
        %v1930 = vpack.c.b16 %v1929, %v1929
        %v1932 = vsel %vm871, %v1927, 0
        %v1935 = vsel %vm887, %v1930, 0
        %1937 = vmatpush.bf16.msra.mxu0 0
        %1938 = vmatpush.bf16.msra.mxu0 0
        %1939 = vmatpush.bf16.msra.mxu0 0
        %1940 = vmatpush.bf16.msra.mxu0 0
        %1941 = vmatpush.bf16.msra.mxu0 0
        %1942 = vmatpush.bf16.msra.mxu0 0
        %1943 = vmatpush.bf16.msra.mxu0 0
        %1944 = vmatpush.bf16.msra.mxu0 %v1935
        %1945 = vmatmul.bf16.gmra.mxu0 %v1932
        %v1946 = vpop.f32.mrf.mxu0
        %v1947 = vadd.f32 0.0, %v1946
        %v1948 = vpop.f32.mrf.mxu0
        %1949 = vdwg.mxu0
        %1950 = vst.msk [vmem:[%s343] sm:$0xff] %vm871, %v1772
        %1951 = vst.msk [vmem:[%s343 + $0x8] sm:$0xff] %vm871, %v1825
        %1952 = vst.msk [vmem:[%s343 + $0x10] sm:$0xff] %vm871, %v1873
        %1953 = vst.msk [vmem:[%s343 + $0x18] sm:$0xff] %vm871, %v1926
        %v1954 = vpack.c.bf16 %v1790, %v1790
        %v1955 = vpack.c.bf16 %v1846, %v1846
        %v1956 = vpack.c.bf16 %v1891, %v1891
        %v1957 = vpack.c.bf16 %v1947, %v1947
        %v1958 = vld [vmem:[#allocation2 + $0x74] sm:$0xff]
        %v1959 = vld [vmem:[#allocation2 + $0x7c] sm:$0xff]
        %v1960 = vld [vmem:[#allocation2 + $0xfc] sm:$0xff]
        %v1961 = vld [vmem:[#allocation2 + $0x104] sm:$0xff]
        %v1962 = vld [vmem:[#allocation2 + $0x184] sm:$0xff]
        %v1963 = vld [vmem:[#allocation2 + $0x18c] sm:$0xff]
        %v1964 = vld [vmem:[#allocation2 + $0x20c] sm:$0xff]
        %v1965 = vld [vmem:[#allocation2 + $0x214] sm:$0xff]
        %v1966 = vld [vmem:[#allocation2 + $0x294] sm:$0xff]
        %v1967 = vld [vmem:[#allocation2 + $0x29c] sm:$0xff]
        %v1968 = vld [vmem:[#allocation2 + $0x31c] sm:$0xff]
        %v1969 = vld [vmem:[#allocation2 + $0x324] sm:$0xff]
        %v1970 = vld [vmem:[#allocation2 + $0x3a4] sm:$0xff]
        %v1971 = vld [vmem:[#allocation2 + $0x3ac] sm:$0xff]
        %v1972 = vld [vmem:[#allocation2 + $0x42c] sm:$0xff]
        %v1973 = vld [vmem:[#allocation2 + $0x434] sm:$0xff]
        %v1974 = vld [vmem:[%s5 + $0x6] ss:$0 sm:$0xff]
        %v1991 = vunpack.c.l.b16 %v1958
        %v1992 = vunpack.c.h.b16 %v1958
        %v1993 = vunpack.c.l.b16 %v1959
        %v1994 = vunpack.c.h.b16 %v1959
        %v1995 = vunpack.c.l.b16 %v1960
        %v1996 = vunpack.c.h.b16 %v1960
        %v1997 = vunpack.c.l.b16 %v1961
        %v1998 = vunpack.c.h.b16 %v1961
        %v1999 = vunpack.c.l.b16 %v1962
        %v2000 = vunpack.c.h.b16 %v1962
        %v2001 = vunpack.c.l.b16 %v1963
        %v2002 = vunpack.c.h.b16 %v1963
        %v2003 = vunpack.c.l.b16 %v1964
        %v2004 = vunpack.c.h.b16 %v1964
        %v2005 = vunpack.c.l.b16 %v1965
        %v2006 = vunpack.c.h.b16 %v1965
        %v2007 = vunpack.c.l.b16 %v1966
        %v2008 = vunpack.c.h.b16 %v1966
        %v2009 = vunpack.c.l.b16 %v1967
        %v2010 = vunpack.c.h.b16 %v1967
        %v2011 = vunpack.c.l.b16 %v1968
        %v2012 = vunpack.c.h.b16 %v1968
        %v2013 = vunpack.c.l.b16 %v1969
        %v2014 = vunpack.c.h.b16 %v1969
        %v2015 = vunpack.c.l.b16 %v1970
        %v2016 = vunpack.c.h.b16 %v1970
        %v2017 = vunpack.c.l.b16 %v1971
        %v2018 = vunpack.c.h.b16 %v1971
        %v2019 = vunpack.c.l.b16 %v1972
        %v2020 = vunpack.c.h.b16 %v1972
        %v2021 = vunpack.c.l.b16 %v1973
        %v2022 = vunpack.c.h.b16 %v1973
        %v2023 = vpack.c.b16 %v1995, %v1991
        %v2024 = vpack.c.b16 %v1996, %v1992
        %v2025 = vpack.c.b16 %v1997, %v1993
        %v2026 = vpack.c.b16 %v1998, %v1994
        %v2027 = vpack.c.b16 %v2003, %v1999
        %v2028 = vpack.c.b16 %v2004, %v2000
        %v2029 = vpack.c.b16 %v2005, %v2001
        %v2030 = vpack.c.b16 %v2006, %v2002
        %v2031 = vpack.c.b16 %v2011, %v2007
        %v2032 = vpack.c.b16 %v2012, %v2008
        %v2033 = vpack.c.b16 %v2013, %v2009
        %v2034 = vpack.c.b16 %v2014, %v2010
        %v2035 = vpack.c.b16 %v2019, %v2015
        %v2036 = vpack.c.b16 %v2020, %v2016
        %v2037 = vpack.c.b16 %v2021, %v2017
        %v2038 = vpack.c.b16 %v2022, %v2018
        %2055 = vmatpush.bf16.xpose.msra.mxu0 0
        %2056 = vmatpush.bf16.xpose.msra.mxu0 0
        %2057 = vmatpush.bf16.xpose.msra.mxu0 0
        %2058 = vmatpush.bf16.xpose.msra.mxu0 0
        %2059 = vmatpush.bf16.xpose.msra.mxu0 %v2035
        %2060 = vmatpush.bf16.xpose.msra.mxu0 %v2031
        %2061 = vmatpush.bf16.xpose.msra.mxu0 %v2027
        %2062 = vmatpush.bf16.xpose.msra.mxu0 %v2023
        %2063 = vmatmul.bf16.gmra.mxu0 %v1954
        %v2064 = vpop.f32.mrf.mxu0
        %v2065 = vadd.f32 %v1974, %v2064
        %v2066 = vpop.f32.mrf.mxu0
        %2067 = vdwg.mxu0
        %2068 = vmatpush.bf16.xpose.msra.mxu0 0
        %2069 = vmatpush.bf16.xpose.msra.mxu0 0
        %2070 = vmatpush.bf16.xpose.msra.mxu0 0
        %2071 = vmatpush.bf16.xpose.msra.mxu0 0
        %2072 = vmatpush.bf16.xpose.msra.mxu0 %v2036
        %2073 = vmatpush.bf16.xpose.msra.mxu0 %v2032
        %2074 = vmatpush.bf16.xpose.msra.mxu0 %v2028
        %2075 = vmatpush.bf16.xpose.msra.mxu0 %v2024
        %2076 = vmatmul.bf16.gmra.mxu0 %v1955
        %v2077 = vpop.f32.mrf.mxu0
        %v2078 = vadd.f32 %v2065, %v2077
        %v2079 = vpop.f32.mrf.mxu0
        %2080 = vdwg.mxu0
        %2081 = vmatpush.bf16.xpose.msra.mxu0 0
        %2082 = vmatpush.bf16.xpose.msra.mxu0 0
        %2083 = vmatpush.bf16.xpose.msra.mxu0 0
        %2084 = vmatpush.bf16.xpose.msra.mxu0 0
        %2085 = vmatpush.bf16.xpose.msra.mxu0 %v2037
        %2086 = vmatpush.bf16.xpose.msra.mxu0 %v2033
        %2087 = vmatpush.bf16.xpose.msra.mxu0 %v2029
        %2088 = vmatpush.bf16.xpose.msra.mxu0 %v2025
        %2089 = vmatmul.bf16.gmra.mxu0 %v1956
        %v2090 = vpop.f32.mrf.mxu0
        %v2091 = vadd.f32 %v2078, %v2090
        %v2092 = vpop.f32.mrf.mxu0
        %2093 = vdwg.mxu0
        %2094 = vmatpush.bf16.xpose.msra.mxu0 0
        %2095 = vmatpush.bf16.xpose.msra.mxu0 0
        %2096 = vmatpush.bf16.xpose.msra.mxu0 0
        %2097 = vmatpush.bf16.xpose.msra.mxu0 0
        %2098 = vmatpush.bf16.xpose.msra.mxu0 %v2038
        %2099 = vmatpush.bf16.xpose.msra.mxu0 %v2034
        %2100 = vmatpush.bf16.xpose.msra.mxu0 %v2030
        %2101 = vmatpush.bf16.xpose.msra.mxu0 %v2026
        %2102 = vmatmul.bf16.gmra.mxu0 %v1957
        %v2103 = vpop.f32.mrf.mxu0
        %v2104 = vadd.f32 %v2091, %v2103
        %v2105 = vpop.f32.mrf.mxu0
        %2106 = vdwg.mxu0
        %v2107 = vadd.f32 %v1251, %v2104
        %v2108 = vsel %vm679, %v2107, 0.0
        %2109 = vadd.xlane.f32.xlu0 %v2108
        %v2110 = vpop.xlane.xlu0 %2109
        %v2111 = vmul.f32 %v2110, %v1228
        %v2112 = vsub.f32 %v2107, %v2111
        %v2113 = vmul.f32 %v2112, %v2112
        %v2114 = vsel %vm679, %v2113, 0.0
        %2115 = vadd.xlane.f32.xlu0 %v2114
        %v2116 = vpop.xlane.xlu0 %2115
        %v2117 = vmul.f32 %v2116, %v1228
        %v2118 = vadd.f32 %v2117, 1e-12
        %v2119 = vrsqrt.pop %v2118
        %v2120 = vmul.f32 %v2119, %v2118
        %v2121 = vmul.f32 %v2120, %v2119
        %v2122 = vmul.f32 0.5, %v2121
        %v2123 = vsub.f32 1.5, %v2122
        %v2124 = vmul.f32 %v2119, %v2123
        %vm2125 = vweird.f32 %v2118
        %vm2126 = vweird.f32 %v2119
        %vm2127 = vmor %vm2125, %vm2126
        %v2128 = vsel %vm2127, %v2119, %v2124
        %v2129 = vmul.f32 %v2112, %v2128
        %v2130 = vld [vmem:[%s5 + $0x7] ss:$0 sm:$0xff]
        %v2131 = vmul.f32 %v2129, %v2130
        %v2132 = vld [vmem:[%s5 + $0x60] ss:$0 sm:$0xff]
        %v2133 = vadd.f32 %v2131, %v2132
        %v2134 = vpack.c.bf16 %v2133, %v2133
        %v2135 = vld [vmem:[#allocation2 + $0x60] sm:$0xf]
        %v2136 = vld [vmem:[#allocation2 + $0xe8] sm:$0xf]
        %v2137 = vld [vmem:[#allocation2 + $0x170] sm:$0xf]
        %v2138 = vld [vmem:[#allocation2 + $0x1f8] sm:$0xf]
        %v2139 = vld [vmem:[#allocation2 + $0x280] sm:$0xf]
        %v2140 = vld [vmem:[#allocation2 + $0x308] sm:$0xf]
        %v2141 = vld [vmem:[#allocation2 + $0x390] sm:$0xf]
        %v2142 = vld [vmem:[#allocation2 + $0x418] sm:$0xf]
        %v2143 = vld [vmem:[%s5 + $0x61] ss:$0 sm:$0xff]
        %v2152 = vunpack.c.l.b16 %v2135
        %v2153 = vunpack.c.l.b16 %v2136
        %v2154 = vunpack.c.l.b16 %v2137
        %v2155 = vunpack.c.l.b16 %v2138
        %v2156 = vunpack.c.l.b16 %v2139
        %v2157 = vunpack.c.l.b16 %v2140
        %v2158 = vunpack.c.l.b16 %v2141
        %v2159 = vunpack.c.l.b16 %v2142
        %v2160 = vpack.c.b16 %v2153, %v2152
        %v2161 = vpack.c.b16 %v2155, %v2154
        %v2162 = vpack.c.b16 %v2157, %v2156
        %v2163 = vpack.c.b16 %v2159, %v2158
        %v2169 = vsel %vm679, %v2134, 0
        %2171 = vmatpush.bf16.msra.mxu0 0
        %2172 = vmatpush.bf16.msra.mxu0 0
        %2173 = vmatpush.bf16.msra.mxu0 0
        %2174 = vmatpush.bf16.msra.mxu0 0
        %2175 = vmatpush.bf16.msra.mxu0 %v2163
        %2176 = vmatpush.bf16.msra.mxu0 %v2162
        %2177 = vmatpush.bf16.msra.mxu0 %v2161
        %2178 = vmatpush.bf16.msra.mxu0 %v2160
        %2179 = vmatmul.bf16.gmra.mxu0 %v2169
        %v2180 = vpop.f32.mrf.mxu0
        %v2181 = vadd.f32 %v2143, %v2180
        %v2182 = vpop.f32.mrf.mxu0
        %2183 = vdwg.mxu0
        %v2184 = vmul.f32 %v2181, 0.5
        %v2185 = vmul.f32 %v2181, 0.044715
        %v2186 = vmul.f32 %v2185, %v2181
        %v2187 = vmul.f32 %v2186, %v2181
        %v2188 = vadd.f32 %v2181, %v2187
        %v2189 = vmul.f32 %v2188, 0.7978846
        %v2190 = vtanh.pop %v2189
        %v2191 = vadd.f32 %v2190, 1.0
        %v2192 = vmul.f32 %v2184, %v2191
        %v2193 = vpack.c.bf16 %v2192, %v2192
        %v2194 = vld [vmem:[#allocation2 + $0x84] sm:$0xf]
        %v2195 = vld [vmem:[#allocation2 + $0x10c] sm:$0xf]
        %v2196 = vld [vmem:[#allocation2 + $0x194] sm:$0xf]
        %v2197 = vld [vmem:[#allocation2 + $0x21c] sm:$0xf]
        %v2198 = vld [vmem:[#allocation2 + $0x2a4] sm:$0xf]
        %v2199 = vld [vmem:[#allocation2 + $0x32c] sm:$0xf]
        %v2200 = vld [vmem:[#allocation2 + $0x3b4] sm:$0xf]
        %v2201 = vld [vmem:[#allocation2 + $0x43c] sm:$0xf]
        %v2202 = vld [vmem:[%s5 + $0x62] ss:$0 sm:$0xff]
        %v2211 = vunpack.c.l.b16 %v2194
        %v2212 = vunpack.c.l.b16 %v2195
        %v2213 = vunpack.c.l.b16 %v2196
        %v2214 = vunpack.c.l.b16 %v2197
        %v2215 = vunpack.c.l.b16 %v2198
        %v2216 = vunpack.c.l.b16 %v2199
        %v2217 = vunpack.c.l.b16 %v2200
        %v2218 = vunpack.c.l.b16 %v2201
        %v2219 = vpack.c.b16 %v2212, %v2211
        %v2220 = vpack.c.b16 %v2214, %v2213
        %v2221 = vpack.c.b16 %v2216, %v2215
        %v2222 = vpack.c.b16 %v2218, %v2217
        %2227 = vmatpush.bf16.xpose.msra.mxu0 0
        %2228 = vmatpush.bf16.xpose.msra.mxu0 0
        %2229 = vmatpush.bf16.xpose.msra.mxu0 0
        %2230 = vmatpush.bf16.xpose.msra.mxu0 0
        %2231 = vmatpush.bf16.xpose.msra.mxu0 %v2222
        %2232 = vmatpush.bf16.xpose.msra.mxu0 %v2221
        %2233 = vmatpush.bf16.xpose.msra.mxu0 %v2220
        %2234 = vmatpush.bf16.xpose.msra.mxu0 %v2219
        %2235 = vmatmul.bf16.gmra.mxu0 %v2193
        %v2236 = vpop.f32.mrf.mxu0
        %v2237 = vadd.f32 %v2202, %v2236
        %v2238 = vpop.f32.mrf.mxu0
        %2239 = vdwg.mxu0
        %v2240 = vadd.f32 %v2133, %v2237
        %v2241 = vsel %vm679, %v2240, 0.0
        %2242 = vadd.xlane.f32.xlu0 %v2241
        %v2243 = vpop.xlane.xlu0 %2242
        %v2244 = vmul.f32 %v2243, %v1228
        %v2245 = vsub.f32 %v2240, %v2244
        %v2246 = vmul.f32 %v2245, %v2245
        %v2247 = vsel %vm679, %v2246, 0.0
        %2248 = vadd.xlane.f32.xlu0 %v2247
        %v2249 = vpop.xlane.xlu0 %2248
        %v2250 = vmul.f32 %v2249, %v1228
        %v2251 = vadd.f32 %v2250, 1e-12
        %v2252 = vrsqrt.pop %v2251
        %v2253 = vmul.f32 %v2252, %v2251
        %v2254 = vmul.f32 %v2253, %v2252
        %v2255 = vmul.f32 0.5, %v2254
        %v2256 = vsub.f32 1.5, %v2255
        %v2257 = vmul.f32 %v2252, %v2256
        %vm2258 = vweird.f32 %v2251
        %vm2259 = vweird.f32 %v2252
        %vm2260 = vmor %vm2258, %vm2259
        %v2261 = vsel %vm2260, %v2252, %v2257
        %v2262 = vmul.f32 %v2245, %v2261
        %v2263 = vld [vmem:[%s5 + $0x63] ss:$0 sm:$0xff]
        %v2264 = vmul.f32 %v2262, %v2263
        %v2265 = vld [vmem:[%s5 + $0x64] ss:$0 sm:$0xff]
        %v2266 = vadd.f32 %v2264, %v2265
        %2267 = vst.msk [vmem:[%s355] sm:$0xff] %vm679, %v2266
        %p2268 = scmp.lt.s32.totalorder %s27, 1
        %s2269 = scalar_select %p2268, %s27, 1
        %s2270 = smul.addr %s2269, 8
        %s2271 = scalar_lea.vmem %s6, %s2270
        %s2272 = sand.u32 %s197, 1
        %s2273 = scalar_lea.sflag [#allocation4], %s2272
        %s2274 = sand.u32 %s197, 1
        %s2275 = smul.addr %s2274, 32
        %s2276 = scalar_lea.vmem [#allocation5], %s2275
        %s2277 = sand.u32 %s223, 1
        %s2278 = scalar_lea.sflag [#allocation7], %s2277
        %s2279 = sand.u32 %s223, 1
        %s2280 = smul.addr %s2279, 32
        %s2281 = scalar_lea.vmem [#allocation6], %s2280
        // Predicated region
        $region49: #{decoder_forward_pallas.2} parent=43 // pred_check
          %p2282 = pneg %p181
        $region50: #{decoder_forward_pallas.2} parent=43 // pred_check_branch
          %2284 = sbr.rel (%p2282) target = $region52
        $region51: #{decoder_forward_pallas.2} parent=43 // pred_region
          _
        $region52: #{decoder_forward_pallas.2} parent=43 // pred_fallthru
          _
        // Predicated region
        $region53: #{decoder_forward_pallas.2} parent=43 // pred_check
          %p2285 = pneg %p207
        $region54: #{decoder_forward_pallas.2} parent=43 // pred_check_branch
          %2287 = sbr.rel (%p2285) target = $region56
        $region55: #{decoder_forward_pallas.2} parent=43 // pred_region
          %2289 = vsyncadd %s2273, 0
          %s2290 = smul.addr %s27, 4
          %s2291 = smul.addr %s2290, 8
          %s2292 = scalar_lea.hbm %s7, %s2291
          %s2293 = sshll.u32 %s2276, 4
          %s2294 = int_to_ptr.vmem [resolvable:$true] %s2293
          %s2295 = sshll.u32 %s2292, 4
          %s2296 = int_to_ptr.hbm [resolvable:$true] %s2295
          %2301 = dma.vmem_to_hbm [thread:$0]  %s2294, 512, %s2296, %s2273, 128, 128, 8
        $region56: #{decoder_forward_pallas.2} parent=43 // pred_fallthru
          _
        // Predicated region
        $region57: #{decoder_forward_pallas.2} parent=43 // pred_check
          %p2302 = pneg %p233
        $region58: #{decoder_forward_pallas.2} parent=43 // pred_check_branch
          %2304 = sbr.rel (%p2302) target = $region60
        $region59: #{decoder_forward_pallas.2} parent=43 // pred_region
          %2306 = vsyncadd %s2278, 0
          %s2307 = smul.addr %s27, 4
          %s2308 = smul.addr %s2307, 8
          %s2309 = scalar_lea.hbm %s8, %s2308
          %s2310 = sshll.u32 %s2281, 4
          %s2311 = int_to_ptr.vmem [resolvable:$true] %s2310
          %s2312 = sshll.u32 %s2309, 4
          %s2313 = int_to_ptr.hbm [resolvable:$true] %s2312
          %2318 = dma.vmem_to_hbm [thread:$0]  %s2311, 512, %s2313, %s2278, 128, 128, 8
        $region60: #{decoder_forward_pallas.2} parent=43 // pred_fallthru
          _
      $region44: #{decoder_forward_pallas.2} parent=5 // pred_fallthru
        _
      %p2319 = scmp.le.s32.totalorder 2, %s22
      // Predicated region
      $region61: #{decoder_forward_pallas.2} parent=5 // pred_check
        %p2320 = pneg %p2319
      $region62: #{decoder_forward_pallas.2} parent=5 // pred_check_branch
        %2322 = sbr.rel (%p2320) target = $region64
      $region63: #{decoder_forward_pallas.2} parent=5 // pred_region
        %s2323 = ssub.s32 %s22, 2
        // Predicated region
        $region65: #{decoder_forward_pallas.2} parent=63 // pred_check
          %p2324 = pneg %p187
        $region66: #{decoder_forward_pallas.2} parent=63 // pred_check_branch
          %2326 = sbr.rel (%p2324) target = $region68
        $region67: #{decoder_forward_pallas.2} parent=63 // pred_region
          %p2327 = scmp.lt.s32.totalorder %s28, 1
          %s2328 = scalar_select %p2327, %s28, 1
          %s2329 = smul.addr %s2328, 8
          %s2330 = scalar_lea.vmem %s6, %s2329
        $region68: #{decoder_forward_pallas.2} parent=63 // pred_fallthru
          _
        // Predicated region
        $region69: #{decoder_forward_pallas.2} parent=63 // pred_check
          %p2331 = pneg %p213
        $region70: #{decoder_forward_pallas.2} parent=63 // pred_check_branch
          %2333 = sbr.rel (%p2331) target = $region72
        $region71: #{decoder_forward_pallas.2} parent=63 // pred_region
          %s2334 = sand.u32 %s198, 1
          %s2335 = scalar_lea.sflag [#allocation4], %s2334
          %s2336 = sand.u32 %s198, 1
          %s2337 = smul.addr %s2336, 32
          %s2338 = scalar_lea.vmem [#allocation5], %s2337
          %2340 = dma.done %s2335, 512
        $region72: #{decoder_forward_pallas.2} parent=63 // pred_fallthru
          _
        // Predicated region
        $region73: #{decoder_forward_pallas.2} parent=63 // pred_check
          %p2341 = pneg %p239
        $region74: #{decoder_forward_pallas.2} parent=63 // pred_check_branch
          %2343 = sbr.rel (%p2341) target = $region76
        $region75: #{decoder_forward_pallas.2} parent=63 // pred_region
          %s2344 = sand.u32 %s224, 1
          %s2345 = scalar_lea.sflag [#allocation7], %s2344
          %s2346 = sand.u32 %s224, 1
          %s2347 = smul.addr %s2346, 32
          %s2348 = scalar_lea.vmem [#allocation6], %s2347
          %2350 = dma.done %s2345, 512
        $region76: #{decoder_forward_pallas.2} parent=63 // pred_fallthru
          _
      $region64: #{decoder_forward_pallas.2} parent=5 // pred_fallthru
        _
    $region6: #{decoder_forward_pallas.2} parent=1 // loop_footer
      %s26 = sadd.s32 1, %s22
    $region7: #{decoder_forward_pallas.2} parent=1 // loop_footer_branch
      %21 = sbr.rel target = $region3
    $region8: #{decoder_forward_pallas.2} parent=1 // loop_exit
      _
    %2351 = vsyncpa [#allocation3], 1
    %s2352 = scalar_lea.sflag [#allocation3], 1
    %2353 = vsyncpa %s2352, 1
    %2354 = vsyncpa [#allocation4], 1
    %s2355 = scalar_lea.sflag [#allocation4], 1
    %2356 = vsyncpa %s2355, 1
    %2357 = vsyncpa [#allocation7], 1
    %s2358 = scalar_lea.sflag [#allocation7], 1
    %2359 = vsyncpa %s2358, 1

</llo_original>
